<compile_context>
chip_gen: v5e
topology: v5e:2x2
jax: 0.10.0
libtpu: 0.0.40
codegen_flags: <defaults>
</compile_context>

<pallas_src>
import functools
import math

import jax
import jax.numpy as jnp
from jax import lax
from jax.experimental import pallas as pl
from jax.experimental.pallas import tpu as pltpu


# ------------------------------ MXU helpers ------------------------------

def _mxu_dot(a, b):
    """Matmul with bf16 operands, f32 accumulation (fast MXU path on v5e/v6e/v7x)."""
    return jnp.dot(a.astype(jnp.bfloat16), b.astype(jnp.bfloat16),
                   preferred_element_type=jnp.float32)


def _mxu_dot_t(a, b):
    """Contract last dims: a:(M,D), b:(N,D) -> (M,N), no explicit transpose."""
    return lax.dot_general(a.astype(jnp.bfloat16), b.astype(jnp.bfloat16),
                           (((1,), (1,)), ((), ())),
                           preferred_element_type=jnp.float32)


def _causal_dilated_conv(x, w, b, dilation, shift_mats):
    """Causal dilated conv, channels-last. x:(L,Cin), w:(K,Cin,Cout), b:(1,Cout)."""
    L = x.shape[0]
    K = w.shape[0]
    acc = _mxu_dot(x, w[K - 1])                        # last tap: no shift
    for k in range(K - 1):
        s = (K - 1 - k) * dilation                     # causal left shift for this tap
        if s >= L:
            continue                                   # tap entirely in the zero padding
        xs = jnp.dot(shift_mats[s], x.astype(jnp.bfloat16),
                     preferred_element_type=jnp.float32)   # rows t<s are exactly zero
        acc = acc + _mxu_dot(xs, w[k])
    return acc + b


# --------------------------- Single fused forward kernel ---------------------------

def _temporal_net_kernel(*refs, level_has_ds, dilations, catch, scale):
    it = iter(refs)
    mod_refs = [next(it), next(it), next(it)]          # brake / steer / throttle (1,L,Cin)
    levels = []
    for has_ds in level_has_ds:
        lvl = {'w1': next(it), 'b1': next(it), 'w2': next(it), 'b2': next(it)}
        if has_ds:
            lvl['wd'] = next(it)
            lvl['bd'] = next(it)
        levels.append(lvl)
    attn_w_ref = next(it)                              # (3, 4, D, D): q,k,v,out proj per block
    attn_b_ref = next(it)                              # (3, 4, 1, D)
    mw1_ref = next(it)                                 # (catch, D, H)
    mb1_ref = next(it)                                 # (1, H)
    mw2_ref = next(it)                                 # (H, out_ch)
    mb2_ref = next(it)                                 # (1, out_ch)
    o_ref = next(it)                                   # (1, 1, out_ch)

    L = mod_refs[0].shape[1]

    # 0/1 shift matrices (hoisted: built once, reused across modalities & conv layers).
    shift_mats = {}
    for lvl, d in zip(levels, dilations):
        K = lvl['w1'].shape[0]
        for k in range(K - 1):
            s = (K - 1 - k) * d
            if 0 < s < L and s not in shift_mats:
                r = lax.broadcasted_iota(jnp.int32, (L, L), 0)
                c = lax.broadcasted_iota(jnp.int32, (L, L), 1)
                shift_mats[s] = (r - c == s).astype(jnp.bfloat16)

    # ---- shared-weight TCN, fully unrolled, intermediates never leave VMEM ----
    def run_tcn(x):
        cur = x
        for lvl, d in zip(levels, dilations):
            h = jnp.maximum(
                _causal_dilated_conv(cur, lvl['w1'][...], lvl['b1'][...], d, shift_mats), 0.0)
            h = jnp.maximum(
                _causal_dilated_conv(h, lvl['w2'][...], lvl['b2'][...], d, shift_mats), 0.0)
            if 'wd' in lvl:
                res = _mxu_dot(cur, lvl['wd'][...]) + lvl['bd'][...]
            else:
                res = cur
            cur = jnp.maximum(h + res, 0.0)
        return cur[-catch:, :]                         # last `catch` steps -> (T, D)

    feats = [run_tcn(r[0]) for r in mod_refs]          # [brake, steer, throttle] features

    # ---- 3 single-head cross-attention blocks (rotating Q/K/V modalities), summed ----
    T, D = feats[0].shape
    q_sel, k_sel, v_sel = (0, 1, 2), (1, 2, 0), (2, 0, 1)
    fused = jnp.zeros((T, D), jnp.float32)
    for j in range(3):
        q = _mxu_dot(feats[q_sel[j]], attn_w_ref[j, 0]) + attn_b_ref[j, 0]
        k = _mxu_dot(feats[k_sel[j]], attn_w_ref[j, 1]) + attn_b_ref[j, 1]
        v = _mxu_dot(feats[v_sel[j]], attn_w_ref[j, 2]) + attn_b_ref[j, 2]
        s = _mxu_dot_t(q, k) * scale                   # (T, T)
        s = s - jnp.max(s, axis=-1, keepdims=True)
        p = jnp.exp(s)
        p = p / jnp.sum(p, axis=-1, keepdims=True)
        ctx = _mxu_dot(p, v)                           # (T, D)
        fused = fused + _mxu_dot(ctx, attn_w_ref[j, 3]) + attn_b_ref[j, 3]

    # ---- 2-layer MLP; flatten(T,D)@W1 expressed as sum_t fused[t] @ W1[t] (no reshape) ----
    h = mb1_ref[...]                                   # (1, H)
    for t in range(T):
        h = h + _mxu_dot(fused[t:t + 1, :], mw1_ref[t])
    h = jnp.maximum(h, 0.0)
    out = _mxu_dot(h, mw2_ref[...]) + mb2_ref[...]     # (1, out_ch)
    o_ref[0] = out
    # TODO(synk): weight_norm / dropout of the original TemporalBlock are identity at inference.


# --------------------------------- Forward pass ---------------------------------

def split_tensor(x, window, stride):
    """x: (B, T) -> (B, n_windows, window) with overlapping windows."""
    B, T = x.shape
    n = (T - window) // stride + 1
    idx = stride * jnp.arange(n)[:, None] + jnp.arange(window)[None, :]
    return x[:, idx]
    # TODO(synk): split_tensor source not provided; reconstructed as overlapping windows.


def temporal_net_forward(params, brake, steer, throttle, catch):
    # split_tensor output (B, n, 30) is already channels-last for the TCN
    # (window-size = channels, n windows = time) -- exactly what the PyTorch
    # permute(0,2,1) feeds to Conv1d, so no transposes are needed.
    bw = split_tensor(brake, 30, 15)
    sw = split_tensor(steer, 30, 15)
    tw = split_tensor(throttle, 30, 15)
    B, L, C_in = bw.shape

    tcn = params['tcn']
    level_has_ds = tuple('wd' in blk for blk in tcn)
    dilations = tuple(2 ** i for i in range(len(tcn)))
    D = tcn[-1]['w1'].shape[-1]
    mlp = params['mlp']
    H = mlp['w1'].shape[-1]
    out_ch = mlp['w2'].shape[-1]
    mw1 = mlp['w1'].reshape(catch, D, H)               # row-major flatten of (T, D) preserved

    args = [bw, sw, tw]
    for blk in tcn:
        args += [blk['w1'], blk['b1'], blk['w2'], blk['b2']]
        if 'wd' in blk:
            args += [blk['wd'], blk['bd']]
    args += [params['attn_w'], params['attn_b'], mw1, mlp['b1'], mlp['w2'], mlp['b2']]

    def _full_spec(a):
        nd = a.ndim
        return pl.BlockSpec(a.shape, lambda b, _nd=nd: (0,) * _nd)

    mod_spec = pl.BlockSpec((1, L, C_in), lambda b: (b, 0, 0))
    in_specs = [mod_spec, mod_spec, mod_spec] + [_full_spec(a) for a in args[3:]]

    kernel = functools.partial(
        _temporal_net_kernel,
        level_has_ds=level_has_ds, dilations=dilations,
        catch=catch, scale=1.0 / math.sqrt(D))

    out = pl.pallas_call(
        kernel,
        out_shape=jax.ShapeDtypeStruct((B, 1, out_ch), jnp.float32),
        grid=(B,),
        in_specs=in_specs,
        out_specs=pl.BlockSpec((1, 1, out_ch), lambda b: (b, 0, 0)),
        compiler_params=pltpu.CompilerParams(dimension_semantics=("parallel",)),
    )(*args)
    return out.reshape(B, out_ch)


# ------------------------------ Pure-JAX reference ------------------------------

def reference_forward(params, brake, steer, throttle, catch):
    def bdot(a, b):
        return jnp.dot(a.astype(jnp.bfloat16), b.astype(jnp.bfloat16),
                       preferred_element_type=jnp.float32)

    def conv(x, w, b, d):
        L = x.shape[0]
        K = w.shape[0]
        pad = (K - 1) * d
        xp = jnp.pad(x, ((pad, 0), (0, 0)))
        acc = bdot(xp[0:L, :], w[0])
        for k in range(1, K):
            acc = acc + bdot(xp[k * d:k * d + L, :], w[k])
        return acc + b

    def tcn(x):
        cur = x
        for i, blk in enumerate(params['tcn']):
            d = 2 ** i
            h = jnp.maximum(conv(cur, blk['w1'], blk['b1'], d), 0.0)
            h = jnp.maximum(conv(h, blk['w2'], blk['b2'], d), 0.0)
            res = bdot(cur, blk['wd']) + blk['bd'] if 'wd' in blk else cur
            cur = jnp.maximum(h + res, 0.0)
        return cur[-catch:, :]

    def attn(feats):
        D = feats[0].shape[-1]
        scale = 1.0 / math.sqrt(D)
        w, b = params['attn_w'], params['attn_b']
        qs, ks, vs = (0, 1, 2), (1, 2, 0), (2, 0, 1)
        out = jnp.zeros_like(feats[0])
        for j in range(3):
            q = bdot(feats[qs[j]], w[j, 0]) + b[j, 0]
            k = bdot(feats[ks[j]], w[j, 1]) + b[j, 1]
            v = bdot(feats[vs[j]], w[j, 2]) + b[j, 2]
            s = bdot(q, k.T) * scale
            s = s - jnp.max(s, axis=-1, keepdims=True)
            p = jnp.exp(s)
            p = p / jnp.sum(p, axis=-1, keepdims=True)
            out = out + bdot(bdot(p, v), w[j, 3]) + b[j, 3]
        return out

    bw = split_tensor(brake, 30, 15)
    sw = split_tensor(steer, 30, 15)
    tw = split_tensor(throttle, 30, 15)
    outs = []
    for i in range(bw.shape[0]):
        feats = [tcn(bw[i]), tcn(sw[i]), tcn(tw[i])]
        fused = attn(feats).reshape(1, -1)
        h = jnp.maximum(bdot(fused, params['mlp']['w1']) + params['mlp']['b1'], 0.0)
        outs.append(bdot(h, params['mlp']['w2']) + params['mlp']['b2'])
    return jnp.concatenate(outs, axis=0)


# ------------------------------ Parameter init ------------------------------

def init_params(key, in_ch, hid_ch, out_ch, catch, kernel_size=2):
    keys = iter(jax.random.split(key, 64))

    def nrm(shape, scale=0.1):
        return scale * jax.random.normal(next(keys), shape, jnp.float32)

    tcn = []
    c_in = in_ch
    for c_out in hid_ch:
        blk = {
            'w1': nrm((kernel_size, c_in, c_out)),     # (K, C_in, C_out), tap-major
            'b1': nrm((1, c_out), 0.01),
            'w2': nrm((kernel_size, c_out, c_out)),
            'b2': nrm((1, c_out), 0.01),
        }
        if c_in != c_out:
            blk['wd'] = nrm((c_in, c_out))             # 1x1 downsample
            blk['bd'] = nrm((1, c_out), 0.01)
        tcn.append(blk)
        c_in = c_out

    D = hid_ch[-1]
    attn_w = nrm((3, 4, D, D))                         # [block, (q,k,v,out), in, out]
    attn_b = nrm((3, 4, 1, D), 0.01)

    mlp_in = D * catch
    hidden = max(mlp_in // 2, out_ch)
    mlp = {
        'w1': nrm((mlp_in, hidden)), 'b1': nrm((1, hidden), 0.01),
        'w2': nrm((hidden, out_ch)), 'b2': nrm((1, out_ch), 0.01),
    }
    # TODO(synk): Simple_MLP / MultiModalModel internals not provided; standard reconstruction.
    return {'tcn': tcn, 'attn_w': attn_w, 'attn_b': attn_b, 'mlp': mlp}


# ---------------------------------- main ----------------------------------

if __name__ == "__main__":
    in_ch = 30            # window size from split_tensor(x, 30, 15)
    hid_ch = [16, 32]
    out_ch = 8
    catch = 4
    B, T_raw = 2, 150     # -> 9 windows of 30 (stride 15); catch=4 <= 9

    key = jax.random.PRNGKey(0)
    kp, kb, ks, kt = jax.random.split(key, 4)
    params = init_params(kp, in_ch, hid_ch, out_ch, catch)

    brake = jax.random.normal(kb, (B, T_raw), jnp.float32)
    steer = jax.random.normal(ks, (B, T_raw), jnp.float32)
    throttle = jax.random.normal(kt, (B, T_raw), jnp.float32)

    fwd = jax.jit(temporal_net_forward, static_argnums=(4,))
    out = fwd(params, brake, steer, throttle, catch)
    out = jax.block_until_ready(out)

    assert out.shape == (B, out_ch), out.shape
    assert bool(jnp.all(jnp.isfinite(out)))

    ref = reference_forward(params, brake, steer, throttle, catch)
    assert bool(jnp.allclose(out, ref, atol=2e-2, rtol=2e-2)), (out, ref)

    print("KERNEL_OK")
</pallas_src>

<mosaic_0001>
module attributes {stable_mosaic.version = 11 : i64} {
  func.func @_temporal_net_kernel(%arg0: i32, %arg1: memref<1x9x30xf32, #tpu.memory_space<vmem>>, %arg2: memref<1x9x30xf32, #tpu.memory_space<vmem>>, %arg3: memref<1x9x30xf32, #tpu.memory_space<vmem>>, %arg4: memref<2x30x16xf32, #tpu.memory_space<vmem>>, %arg5: memref<1x16xf32, #tpu.memory_space<vmem>>, %arg6: memref<2x16x16xf32, #tpu.memory_space<vmem>>, %arg7: memref<1x16xf32, #tpu.memory_space<vmem>>, %arg8: memref<30x16xf32, #tpu.memory_space<vmem>>, %arg9: memref<1x16xf32, #tpu.memory_space<vmem>>, %arg10: memref<2x16x32xf32, #tpu.memory_space<vmem>>, %arg11: memref<1x32xf32, #tpu.memory_space<vmem>>, %arg12: memref<2x32x32xf32, #tpu.memory_space<vmem>>, %arg13: memref<1x32xf32, #tpu.memory_space<vmem>>, %arg14: memref<16x32xf32, #tpu.memory_space<vmem>>, %arg15: memref<1x32xf32, #tpu.memory_space<vmem>>, %arg16: memref<3x4x32x32xf32, #tpu.memory_space<vmem>>, %arg17: memref<3x4x1x32xf32, #tpu.memory_space<vmem>>, %arg18: memref<4x32x64xf32, #tpu.memory_space<vmem>>, %arg19: memref<1x64xf32, #tpu.memory_space<vmem>>, %arg20: memref<64x8xf32, #tpu.memory_space<vmem>>, %arg21: memref<1x8xf32, #tpu.memory_space<vmem>>, %arg22: memref<1x1x8xf32, #tpu.memory_space<vmem>>) attributes {dimension_semantics = [#tpu.dimension_semantics<parallel>], iteration_bounds = array<i64: 2>, scalar_prefetch = 0 : i64, scratch_operands = 0 : i64, tpu.core_type = #tpu.core_type<tc>, window_params = [{transform_indices = @transform_0, window_bounds = array<i64: 1, 9, 30>}, {transform_indices = @transform_1, window_bounds = array<i64: 1, 9, 30>}, {transform_indices = @transform_2, window_bounds = array<i64: 1, 9, 30>}, {pipeline_mode = #tpu.pipeline_mode<synchronous>, transform_indices = @transform_3, window_bounds = array<i64: 2, 30, 16>}, {pipeline_mode = #tpu.pipeline_mode<synchronous>, transform_indices = @transform_4, window_bounds = array<i64: 1, 16>}, {pipeline_mode = #tpu.pipeline_mode<synchronous>, transform_indices = @transform_5, window_bounds = array<i64: 2, 16, 16>}, {pipeline_mode = #tpu.pipeline_mode<synchronous>, transform_indices = @transform_6, window_bounds = array<i64: 1, 16>}, {pipeline_mode = #tpu.pipeline_mode<synchronous>, transform_indices = @transform_7, window_bounds = array<i64: 30, 16>}, {pipeline_mode = #tpu.pipeline_mode<synchronous>, transform_indices = @transform_8, window_bounds = array<i64: 1, 16>}, {pipeline_mode = #tpu.pipeline_mode<synchronous>, transform_indices = @transform_9, window_bounds = array<i64: 2, 16, 32>}, {pipeline_mode = #tpu.pipeline_mode<synchronous>, transform_indices = @transform_10, window_bounds = array<i64: 1, 32>}, {pipeline_mode = #tpu.pipeline_mode<synchronous>, transform_indices = @transform_11, window_bounds = array<i64: 2, 32, 32>}, {pipeline_mode = #tpu.pipeline_mode<synchronous>, transform_indices = @transform_12, window_bounds = array<i64: 1, 32>}, {pipeline_mode = #tpu.pipeline_mode<synchronous>, transform_indices = @transform_13, window_bounds = array<i64: 16, 32>}, {pipeline_mode = #tpu.pipeline_mode<synchronous>, transform_indices = @transform_14, window_bounds = array<i64: 1, 32>}, {pipeline_mode = #tpu.pipeline_mode<synchronous>, transform_indices = @transform_15, window_bounds = array<i64: 3, 4, 32, 32>}, {pipeline_mode = #tpu.pipeline_mode<synchronous>, transform_indices = @transform_16, window_bounds = array<i64: 3, 4, 1, 32>}, {pipeline_mode = #tpu.pipeline_mode<synchronous>, transform_indices = @transform_17, window_bounds = array<i64: 4, 32, 64>}, {pipeline_mode = #tpu.pipeline_mode<synchronous>, transform_indices = @transform_18, window_bounds = array<i64: 1, 64>}, {pipeline_mode = #tpu.pipeline_mode<synchronous>, transform_indices = @transform_19, window_bounds = array<i64: 64, 8>}, {pipeline_mode = #tpu.pipeline_mode<synchronous>, transform_indices = @transform_20, window_bounds = array<i64: 1, 8>}, {transform_indices = @transform_21, window_bounds = array<i64: 1, 1, 8>}]} {
    %0 = tpu.iota {dimensions = array<i32: 0>} : vector<9x9xi32>
    %1 = tpu.iota {dimensions = array<i32: 1>} : vector<9x9xi32>
    %2 = arith.subi %0, %1 : vector<9x9xi32>
    %c1_i32 = arith.constant 1 : i32
    %3 = vector.broadcast %c1_i32 : i32 to vector<9x9xi32>
    %4 = arith.cmpi eq, %2, %3 : vector<9x9xi32>
    %5 = arith.extui %4 : vector<9x9xi1> to vector<9x9xi32>
    %6 = arith.sitofp %5 : vector<9x9xi32> to vector<9x9xf32>
    %7 = arith.truncf %6 : vector<9x9xf32> to vector<9x9xbf16>
    %8 = tpu.iota {dimensions = array<i32: 0>} : vector<9x9xi32>
    %9 = tpu.iota {dimensions = array<i32: 1>} : vector<9x9xi32>
    %10 = arith.subi %8, %9 : vector<9x9xi32>
    %c2_i32 = arith.constant 2 : i32
    %11 = vector.broadcast %c2_i32 : i32 to vector<9x9xi32>
    %12 = arith.cmpi eq, %10, %11 : vector<9x9xi32>
    %13 = arith.extui %12 : vector<9x9xi1> to vector<9x9xi32>
    %14 = arith.sitofp %13 : vector<9x9xi32> to vector<9x9xf32>
    %15 = arith.truncf %14 : vector<9x9xf32> to vector<9x9xbf16>
    %c0 = arith.constant 0 : index
    %c0_0 = arith.constant 0 : index
    %c0_1 = arith.constant 0 : index
    %16 = vector.load %arg1[%c0, %c0_0, %c0_1] : memref<1x9x30xf32, #tpu.memory_space<vmem>>, vector<1x9x30xf32>
    %17 = vector.shape_cast %16 : vector<1x9x30xf32> to vector<9x30xf32>
    %c0_2 = arith.constant 0 : index
    %c0_3 = arith.constant 0 : index
    %c0_4 = arith.constant 0 : index
    %18 = vector.load %arg4[%c0_2, %c0_3, %c0_4] : memref<2x30x16xf32, #tpu.memory_space<vmem>>, vector<2x30x16xf32>
    %c0_5 = arith.constant 0 : index
    %c0_6 = arith.constant 0 : index
    %19 = vector.load %arg5[%c0_5, %c0_6] : memref<1x16xf32, #tpu.memory_space<vmem>>, vector<1x16xf32>
    %20 = vector.extract_strided_slice %18 {offsets = [1, 0, 0], sizes = [1, 30, 16], strides = [1, 1, 1]} : vector<2x30x16xf32> to vector<1x30x16xf32>
    %21 = vector.shape_cast %20 : vector<1x30x16xf32> to vector<30x16xf32>
    %22 = arith.truncf %17 : vector<9x30xf32> to vector<9x30xbf16>
    %23 = arith.truncf %21 : vector<30x16xf32> to vector<30x16xbf16>
    %cst = arith.constant dense<0.000000e+00> : vector<9x16xf32>
    %24 = tpu.matmul %22, %23, %cst {dimension_numbers = #tpu.dot_dimension_numbers<[1], [0], [0], [1], [0, 0, 1, 1], [], []>} : vector<9x30xbf16>, vector<30x16xbf16>, vector<9x16xf32> -> vector<9x16xf32>
    %25 = arith.truncf %17 : vector<9x30xf32> to vector<9x30xbf16>
    %cst_7 = arith.constant dense<0.000000e+00> : vector<9x30xf32>
    %26 = tpu.matmul %7, %25, %cst_7 {dimension_numbers = #tpu.dot_dimension_numbers<[1], [0], [0], [1], [0, 0, 1, 1], [], []>} : vector<9x9xbf16>, vector<9x30xbf16>, vector<9x30xf32> -> vector<9x30xf32>
    %27 = vector.extract_strided_slice %18 {offsets = [0, 0, 0], sizes = [1, 30, 16], strides = [1, 1, 1]} : vector<2x30x16xf32> to vector<1x30x16xf32>
    %28 = vector.shape_cast %27 : vector<1x30x16xf32> to vector<30x16xf32>
    %29 = arith.truncf %26 : vector<9x30xf32> to vector<9x30xbf16>
    %30 = arith.truncf %28 : vector<30x16xf32> to vector<30x16xbf16>
    %cst_8 = arith.constant dense<0.000000e+00> : vector<9x16xf32>
    %31 = tpu.matmul %29, %30, %cst_8 {dimension_numbers = #tpu.dot_dimension_numbers<[1], [0], [0], [1], [0, 0, 1, 1], [], []>} : vector<9x30xbf16>, vector<30x16xbf16>, vector<9x16xf32> -> vector<9x16xf32>
    %32 = arith.addf %24, %31 : vector<9x16xf32>
    %33 = vector.broadcast %19 : vector<1x16xf32> to vector<9x16xf32>
    %34 = arith.addf %32, %33 : vector<9x16xf32>
    %cst_9 = arith.constant 0.000000e+00 : f32
    %35 = vector.broadcast %cst_9 : f32 to vector<9x16xf32>
    %36 = arith.maximumf %34, %35 : vector<9x16xf32>
    %c0_10 = arith.constant 0 : index
    %c0_11 = arith.constant 0 : index
    %c0_12 = arith.constant 0 : index
    %37 = vector.load %arg6[%c0_10, %c0_11, %c0_12] : memref<2x16x16xf32, #tpu.memory_space<vmem>>, vector<2x16x16xf32>
    %c0_13 = arith.constant 0 : index
    %c0_14 = arith.constant 0 : index
    %38 = vector.load %arg7[%c0_13, %c0_14] : memref<1x16xf32, #tpu.memory_space<vmem>>, vector<1x16xf32>
    %39 = vector.extract_strided_slice %37 {offsets = [1, 0, 0], sizes = [1, 16, 16], strides = [1, 1, 1]} : vector<2x16x16xf32> to vector<1x16x16xf32>
    %40 = vector.shape_cast %39 : vector<1x16x16xf32> to vector<16x16xf32>
    %41 = arith.truncf %36 : vector<9x16xf32> to vector<9x16xbf16>
    %42 = arith.truncf %40 : vector<16x16xf32> to vector<16x16xbf16>
    %cst_15 = arith.constant dense<0.000000e+00> : vector<9x16xf32>
    %43 = tpu.matmul %41, %42, %cst_15 {dimension_numbers = #tpu.dot_dimension_numbers<[1], [0], [0], [1], [0, 0, 1, 1], [], []>} : vector<9x16xbf16>, vector<16x16xbf16>, vector<9x16xf32> -> vector<9x16xf32>
    %44 = arith.truncf %36 : vector<9x16xf32> to vector<9x16xbf16>
    %cst_16 = arith.constant dense<0.000000e+00> : vector<9x16xf32>
    %45 = tpu.matmul %7, %44, %cst_16 {dimension_numbers = #tpu.dot_dimension_numbers<[1], [0], [0], [1], [0, 0, 1, 1], [], []>} : vector<9x9xbf16>, vector<9x16xbf16>, vector<9x16xf32> -> vector<9x16xf32>
    %46 = vector.extract_strided_slice %37 {offsets = [0, 0, 0], sizes = [1, 16, 16], strides = [1, 1, 1]} : vector<2x16x16xf32> to vector<1x16x16xf32>
    %47 = vector.shape_cast %46 : vector<1x16x16xf32> to vector<16x16xf32>
    %48 = arith.truncf %45 : vector<9x16xf32> to vector<9x16xbf16>
    %49 = arith.truncf %47 : vector<16x16xf32> to vector<16x16xbf16>
    %cst_17 = arith.constant dense<0.000000e+00> : vector<9x16xf32>
    %50 = tpu.matmul %48, %49, %cst_17 {dimension_numbers = #tpu.dot_dimension_numbers<[1], [0], [0], [1], [0, 0, 1, 1], [], []>} : vector<9x16xbf16>, vector<16x16xbf16>, vector<9x16xf32> -> vector<9x16xf32>
    %51 = arith.addf %43, %50 : vector<9x16xf32>
    %52 = vector.broadcast %38 : vector<1x16xf32> to vector<9x16xf32>
    %53 = arith.addf %51, %52 : vector<9x16xf32>
    %cst_18 = arith.constant 0.000000e+00 : f32
    %54 = vector.broadcast %cst_18 : f32 to vector<9x16xf32>
    %55 = arith.maximumf %53, %54 : vector<9x16xf32>
    %c0_19 = arith.constant 0 : index
    %c0_20 = arith.constant 0 : index
    %56 = vector.load %arg8[%c0_19, %c0_20] : memref<30x16xf32, #tpu.memory_space<vmem>>, vector<30x16xf32>
    %57 = arith.truncf %17 : vector<9x30xf32> to vector<9x30xbf16>
    %58 = arith.truncf %56 : vector<30x16xf32> to vector<30x16xbf16>
    %cst_21 = arith.constant dense<0.000000e+00> : vector<9x16xf32>
    %59 = tpu.matmul %57, %58, %cst_21 {dimension_numbers = #tpu.dot_dimension_numbers<[1], [0], [0], [1], [0, 0, 1, 1], [], []>} : vector<9x30xbf16>, vector<30x16xbf16>, vector<9x16xf32> -> vector<9x16xf32>
    %c0_22 = arith.constant 0 : index
    %c0_23 = arith.constant 0 : index
    %60 = vector.load %arg9[%c0_22, %c0_23] : memref<1x16xf32, #tpu.memory_space<vmem>>, vector<1x16xf32>
    %61 = vector.broadcast %60 : vector<1x16xf32> to vector<9x16xf32>
    %62 = arith.addf %59, %61 : vector<9x16xf32>
    %63 = arith.addf %55, %62 : vector<9x16xf32>
    %cst_24 = arith.constant 0.000000e+00 : f32
    %64 = vector.broadcast %cst_24 : f32 to vector<9x16xf32>
    %65 = arith.maximumf %63, %64 : vector<9x16xf32>
    %c0_25 = arith.constant 0 : index
    %c0_26 = arith.constant 0 : index
    %c0_27 = arith.constant 0 : index
    %66 = vector.load %arg10[%c0_25, %c0_26, %c0_27] : memref<2x16x32xf32, #tpu.memory_space<vmem>>, vector<2x16x32xf32>
    %c0_28 = arith.constant 0 : index
    %c0_29 = arith.constant 0 : index
    %67 = vector.load %arg11[%c0_28, %c0_29] : memref<1x32xf32, #tpu.memory_space<vmem>>, vector<1x32xf32>
    %68 = vector.extract_strided_slice %66 {offsets = [1, 0, 0], sizes = [1, 16, 32], strides = [1, 1, 1]} : vector<2x16x32xf32> to vector<1x16x32xf32>
    %69 = vector.shape_cast %68 : vector<1x16x32xf32> to vector<16x32xf32>
    %70 = arith.truncf %65 : vector<9x16xf32> to vector<9x16xbf16>
    %71 = arith.truncf %69 : vector<16x32xf32> to vector<16x32xbf16>
    %cst_30 = arith.constant dense<0.000000e+00> : vector<9x32xf32>
    %72 = tpu.matmul %70, %71, %cst_30 {dimension_numbers = #tpu.dot_dimension_numbers<[1], [0], [0], [1], [0, 0, 1, 1], [], []>} : vector<9x16xbf16>, vector<16x32xbf16>, vector<9x32xf32> -> vector<9x32xf32>
    %73 = arith.truncf %65 : vector<9x16xf32> to vector<9x16xbf16>
    %cst_31 = arith.constant dense<0.000000e+00> : vector<9x16xf32>
    %74 = tpu.matmul %15, %73, %cst_31 {dimension_numbers = #tpu.dot_dimension_numbers<[1], [0], [0], [1], [0, 0, 1, 1], [], []>} : vector<9x9xbf16>, vector<9x16xbf16>, vector<9x16xf32> -> vector<9x16xf32>
    %75 = vector.extract_strided_slice %66 {offsets = [0, 0, 0], sizes = [1, 16, 32], strides = [1, 1, 1]} : vector<2x16x32xf32> to vector<1x16x32xf32>
    %76 = vector.shape_cast %75 : vector<1x16x32xf32> to vector<16x32xf32>
    %77 = arith.truncf %74 : vector<9x16xf32> to vector<9x16xbf16>
    %78 = arith.truncf %76 : vector<16x32xf32> to vector<16x32xbf16>
    %cst_32 = arith.constant dense<0.000000e+00> : vector<9x32xf32>
    %79 = tpu.matmul %77, %78, %cst_32 {dimension_numbers = #tpu.dot_dimension_numbers<[1], [0], [0], [1], [0, 0, 1, 1], [], []>} : vector<9x16xbf16>, vector<16x32xbf16>, vector<9x32xf32> -> vector<9x32xf32>
    %80 = arith.addf %72, %79 : vector<9x32xf32>
    %81 = vector.broadcast %67 : vector<1x32xf32> to vector<9x32xf32>
    %82 = arith.addf %80, %81 : vector<9x32xf32>
    %cst_33 = arith.constant 0.000000e+00 : f32
    %83 = vector.broadcast %cst_33 : f32 to vector<9x32xf32>
    %84 = arith.maximumf %82, %83 : vector<9x32xf32>
    %c0_34 = arith.constant 0 : index
    %c0_35 = arith.constant 0 : index
    %c0_36 = arith.constant 0 : index
    %85 = vector.load %arg12[%c0_34, %c0_35, %c0_36] : memref<2x32x32xf32, #tpu.memory_space<vmem>>, vector<2x32x32xf32>
    %c0_37 = arith.constant 0 : index
    %c0_38 = arith.constant 0 : index
    %86 = vector.load %arg13[%c0_37, %c0_38] : memref<1x32xf32, #tpu.memory_space<vmem>>, vector<1x32xf32>
    %87 = vector.extract_strided_slice %85 {offsets = [1, 0, 0], sizes = [1, 32, 32], strides = [1, 1, 1]} : vector<2x32x32xf32> to vector<1x32x32xf32>
    %88 = vector.shape_cast %87 : vector<1x32x32xf32> to vector<32x32xf32>
    %89 = arith.truncf %84 : vector<9x32xf32> to vector<9x32xbf16>
    %90 = arith.truncf %88 : vector<32x32xf32> to vector<32x32xbf16>
    %cst_39 = arith.constant dense<0.000000e+00> : vector<9x32xf32>
    %91 = tpu.matmul %89, %90, %cst_39 {dimension_numbers = #tpu.dot_dimension_numbers<[1], [0], [0], [1], [0, 0, 1, 1], [], []>} : vector<9x32xbf16>, vector<32x32xbf16>, vector<9x32xf32> -> vector<9x32xf32>
    %92 = arith.truncf %84 : vector<9x32xf32> to vector<9x32xbf16>
    %cst_40 = arith.constant dense<0.000000e+00> : vector<9x32xf32>
    %93 = tpu.matmul %15, %92, %cst_40 {dimension_numbers = #tpu.dot_dimension_numbers<[1], [0], [0], [1], [0, 0, 1, 1], [], []>} : vector<9x9xbf16>, vector<9x32xbf16>, vector<9x32xf32> -> vector<9x32xf32>
    %94 = vector.extract_strided_slice %85 {offsets = [0, 0, 0], sizes = [1, 32, 32], strides = [1, 1, 1]} : vector<2x32x32xf32> to vector<1x32x32xf32>
    %95 = vector.shape_cast %94 : vector<1x32x32xf32> to vector<32x32xf32>
    %96 = arith.truncf %93 : vector<9x32xf32> to vector<9x32xbf16>
    %97 = arith.truncf %95 : vector<32x32xf32> to vector<32x32xbf16>
    %cst_41 = arith.constant dense<0.000000e+00> : vector<9x32xf32>
    %98 = tpu.matmul %96, %97, %cst_41 {dimension_numbers = #tpu.dot_dimension_numbers<[1], [0], [0], [1], [0, 0, 1, 1], [], []>} : vector<9x32xbf16>, vector<32x32xbf16>, vector<9x32xf32> -> vector<9x32xf32>
    %99 = arith.addf %91, %98 : vector<9x32xf32>
    %100 = vector.broadcast %86 : vector<1x32xf32> to vector<9x32xf32>
    %101 = arith.addf %99, %100 : vector<9x32xf32>
    %cst_42 = arith.constant 0.000000e+00 : f32
    %102 = vector.broadcast %cst_42 : f32 to vector<9x32xf32>
    %103 = arith.maximumf %101, %102 : vector<9x32xf32>
    %c0_43 = arith.constant 0 : index
    %c0_44 = arith.constant 0 : index
    %104 = vector.load %arg14[%c0_43, %c0_44] : memref<16x32xf32, #tpu.memory_space<vmem>>, vector<16x32xf32>
    %105 = arith.truncf %65 : vector<9x16xf32> to vector<9x16xbf16>
    %106 = arith.truncf %104 : vector<16x32xf32> to vector<16x32xbf16>
    %cst_45 = arith.constant dense<0.000000e+00> : vector<9x32xf32>
    %107 = tpu.matmul %105, %106, %cst_45 {dimension_numbers = #tpu.dot_dimension_numbers<[1], [0], [0], [1], [0, 0, 1, 1], [], []>} : vector<9x16xbf16>, vector<16x32xbf16>, vector<9x32xf32> -> vector<9x32xf32>
    %c0_46 = arith.constant 0 : index
    %c0_47 = arith.constant 0 : index
    %108 = vector.load %arg15[%c0_46, %c0_47] : memref<1x32xf32, #tpu.memory_space<vmem>>, vector<1x32xf32>
    %109 = vector.broadcast %108 : vector<1x32xf32> to vector<9x32xf32>
    %110 = arith.addf %107, %109 : vector<9x32xf32>
    %111 = arith.addf %103, %110 : vector<9x32xf32>
    %cst_48 = arith.constant 0.000000e+00 : f32
    %112 = vector.broadcast %cst_48 : f32 to vector<9x32xf32>
    %113 = arith.maximumf %111, %112 : vector<9x32xf32>
    %114 = vector.extract_strided_slice %113 {offsets = [5, 0], sizes = [4, 32], strides = [1, 1]} : vector<9x32xf32> to vector<4x32xf32>
    %c0_49 = arith.constant 0 : index
    %c0_50 = arith.constant 0 : index
    %c0_51 = arith.constant 0 : index
    %115 = vector.load %arg2[%c0_49, %c0_50, %c0_51] : memref<1x9x30xf32, #tpu.memory_space<vmem>>, vector<1x9x30xf32>
    %116 = vector.shape_cast %115 : vector<1x9x30xf32> to vector<9x30xf32>
    %c0_52 = arith.constant 0 : index
    %c0_53 = arith.constant 0 : index
    %c0_54 = arith.constant 0 : index
    %117 = vector.load %arg4[%c0_52, %c0_53, %c0_54] : memref<2x30x16xf32, #tpu.memory_space<vmem>>, vector<2x30x16xf32>
    %c0_55 = arith.constant 0 : index
    %c0_56 = arith.constant 0 : index
    %118 = vector.load %arg5[%c0_55, %c0_56] : memref<1x16xf32, #tpu.memory_space<vmem>>, vector<1x16xf32>
    %119 = vector.extract_strided_slice %117 {offsets = [1, 0, 0], sizes = [1, 30, 16], strides = [1, 1, 1]} : vector<2x30x16xf32> to vector<1x30x16xf32>
    %120 = vector.shape_cast %119 : vector<1x30x16xf32> to vector<30x16xf32>
    %121 = arith.truncf %116 : vector<9x30xf32> to vector<9x30xbf16>
    %122 = arith.truncf %120 : vector<30x16xf32> to vector<30x16xbf16>
    %cst_57 = arith.constant dense<0.000000e+00> : vector<9x16xf32>
    %123 = tpu.matmul %121, %122, %cst_57 {dimension_numbers = #tpu.dot_dimension_numbers<[1], [0], [0], [1], [0, 0, 1, 1], [], []>} : vector<9x30xbf16>, vector<30x16xbf16>, vector<9x16xf32> -> vector<9x16xf32>
    %124 = arith.truncf %116 : vector<9x30xf32> to vector<9x30xbf16>
    %cst_58 = arith.constant dense<0.000000e+00> : vector<9x30xf32>
    %125 = tpu.matmul %7, %124, %cst_58 {dimension_numbers = #tpu.dot_dimension_numbers<[1], [0], [0], [1], [0, 0, 1, 1], [], []>} : vector<9x9xbf16>, vector<9x30xbf16>, vector<9x30xf32> -> vector<9x30xf32>
    %126 = vector.extract_strided_slice %117 {offsets = [0, 0, 0], sizes = [1, 30, 16], strides = [1, 1, 1]} : vector<2x30x16xf32> to vector<1x30x16xf32>
    %127 = vector.shape_cast %126 : vector<1x30x16xf32> to vector<30x16xf32>
    %128 = arith.truncf %125 : vector<9x30xf32> to vector<9x30xbf16>
    %129 = arith.truncf %127 : vector<30x16xf32> to vector<30x16xbf16>
    %cst_59 = arith.constant dense<0.000000e+00> : vector<9x16xf32>
    %130 = tpu.matmul %128, %129, %cst_59 {dimension_numbers = #tpu.dot_dimension_numbers<[1], [0], [0], [1], [0, 0, 1, 1], [], []>} : vector<9x30xbf16>, vector<30x16xbf16>, vector<9x16xf32> -> vector<9x16xf32>
    %131 = arith.addf %123, %130 : vector<9x16xf32>
    %132 = vector.broadcast %118 : vector<1x16xf32> to vector<9x16xf32>
    %133 = arith.addf %131, %132 : vector<9x16xf32>
    %cst_60 = arith.constant 0.000000e+00 : f32
    %134 = vector.broadcast %cst_60 : f32 to vector<9x16xf32>
    %135 = arith.maximumf %133, %134 : vector<9x16xf32>
    %c0_61 = arith.constant 0 : index
    %c0_62 = arith.constant 0 : index
    %c0_63 = arith.constant 0 : index
    %136 = vector.load %arg6[%c0_61, %c0_62, %c0_63] : memref<2x16x16xf32, #tpu.memory_space<vmem>>, vector<2x16x16xf32>
    %c0_64 = arith.constant 0 : index
    %c0_65 = arith.constant 0 : index
    %137 = vector.load %arg7[%c0_64, %c0_65] : memref<1x16xf32, #tpu.memory_space<vmem>>, vector<1x16xf32>
    %138 = vector.extract_strided_slice %136 {offsets = [1, 0, 0], sizes = [1, 16, 16], strides = [1, 1, 1]} : vector<2x16x16xf32> to vector<1x16x16xf32>
    %139 = vector.shape_cast %138 : vector<1x16x16xf32> to vector<16x16xf32>
    %140 = arith.truncf %135 : vector<9x16xf32> to vector<9x16xbf16>
    %141 = arith.truncf %139 : vector<16x16xf32> to vector<16x16xbf16>
    %cst_66 = arith.constant dense<0.000000e+00> : vector<9x16xf32>
    %142 = tpu.matmul %140, %141, %cst_66 {dimension_numbers = #tpu.dot_dimension_numbers<[1], [0], [0], [1], [0, 0, 1, 1], [], []>} : vector<9x16xbf16>, vector<16x16xbf16>, vector<9x16xf32> -> vector<9x16xf32>
    %143 = arith.truncf %135 : vector<9x16xf32> to vector<9x16xbf16>
    %cst_67 = arith.constant dense<0.000000e+00> : vector<9x16xf32>
    %144 = tpu.matmul %7, %143, %cst_67 {dimension_numbers = #tpu.dot_dimension_numbers<[1], [0], [0], [1], [0, 0, 1, 1], [], []>} : vector<9x9xbf16>, vector<9x16xbf16>, vector<9x16xf32> -> vector<9x16xf32>
    %145 = vector.extract_strided_slice %136 {offsets = [0, 0, 0], sizes = [1, 16, 16], strides = [1, 1, 1]} : vector<2x16x16xf32> to vector<1x16x16xf32>
    %146 = vector.shape_cast %145 : vector<1x16x16xf32> to vector<16x16xf32>
    %147 = arith.truncf %144 : vector<9x16xf32> to vector<9x16xbf16>
    %148 = arith.truncf %146 : vector<16x16xf32> to vector<16x16xbf16>
    %cst_68 = arith.constant dense<0.000000e+00> : vector<9x16xf32>
    %149 = tpu.matmul %147, %148, %cst_68 {dimension_numbers = #tpu.dot_dimension_numbers<[1], [0], [0], [1], [0, 0, 1, 1], [], []>} : vector<9x16xbf16>, vector<16x16xbf16>, vector<9x16xf32> -> vector<9x16xf32>
    %150 = arith.addf %142, %149 : vector<9x16xf32>
    %151 = vector.broadcast %137 : vector<1x16xf32> to vector<9x16xf32>
    %152 = arith.addf %150, %151 : vector<9x16xf32>
    %cst_69 = arith.constant 0.000000e+00 : f32
    %153 = vector.broadcast %cst_69 : f32 to vector<9x16xf32>
    %154 = arith.maximumf %152, %153 : vector<9x16xf32>
    %c0_70 = arith.constant 0 : index
    %c0_71 = arith.constant 0 : index
    %155 = vector.load %arg8[%c0_70, %c0_71] : memref<30x16xf32, #tpu.memory_space<vmem>>, vector<30x16xf32>
    %156 = arith.truncf %116 : vector<9x30xf32> to vector<9x30xbf16>
    %157 = arith.truncf %155 : vector<30x16xf32> to vector<30x16xbf16>
    %cst_72 = arith.constant dense<0.000000e+00> : vector<9x16xf32>
    %158 = tpu.matmul %156, %157, %cst_72 {dimension_numbers = #tpu.dot_dimension_numbers<[1], [0], [0], [1], [0, 0, 1, 1], [], []>} : vector<9x30xbf16>, vector<30x16xbf16>, vector<9x16xf32> -> vector<9x16xf32>
    %c0_73 = arith.constant 0 : index
    %c0_74 = arith.constant 0 : index
    %159 = vector.load %arg9[%c0_73, %c0_74] : memref<1x16xf32, #tpu.memory_space<vmem>>, vector<1x16xf32>
    %160 = vector.broadcast %159 : vector<1x16xf32> to vector<9x16xf32>
    %161 = arith.addf %158, %160 : vector<9x16xf32>
    %162 = arith.addf %154, %161 : vector<9x16xf32>
    %cst_75 = arith.constant 0.000000e+00 : f32
    %163 = vector.broadcast %cst_75 : f32 to vector<9x16xf32>
    %164 = arith.maximumf %162, %163 : vector<9x16xf32>
    %c0_76 = arith.constant 0 : index
    %c0_77 = arith.constant 0 : index
    %c0_78 = arith.constant 0 : index
    %165 = vector.load %arg10[%c0_76, %c0_77, %c0_78] : memref<2x16x32xf32, #tpu.memory_space<vmem>>, vector<2x16x32xf32>
    %c0_79 = arith.constant 0 : index
    %c0_80 = arith.constant 0 : index
    %166 = vector.load %arg11[%c0_79, %c0_80] : memref<1x32xf32, #tpu.memory_space<vmem>>, vector<1x32xf32>
    %167 = vector.extract_strided_slice %165 {offsets = [1, 0, 0], sizes = [1, 16, 32], strides = [1, 1, 1]} : vector<2x16x32xf32> to vector<1x16x32xf32>
    %168 = vector.shape_cast %167 : vector<1x16x32xf32> to vector<16x32xf32>
    %169 = arith.truncf %164 : vector<9x16xf32> to vector<9x16xbf16>
    %170 = arith.truncf %168 : vector<16x32xf32> to vector<16x32xbf16>
    %cst_81 = arith.constant dense<0.000000e+00> : vector<9x32xf32>
    %171 = tpu.matmul %169, %170, %cst_81 {dimension_numbers = #tpu.dot_dimension_numbers<[1], [0], [0], [1], [0, 0, 1, 1], [], []>} : vector<9x16xbf16>, vector<16x32xbf16>, vector<9x32xf32> -> vector<9x32xf32>
    %172 = arith.truncf %164 : vector<9x16xf32> to vector<9x16xbf16>
    %cst_82 = arith.constant dense<0.000000e+00> : vector<9x16xf32>
    %173 = tpu.matmul %15, %172, %cst_82 {dimension_numbers = #tpu.dot_dimension_numbers<[1], [0], [0], [1], [0, 0, 1, 1], [], []>} : vector<9x9xbf16>, vector<9x16xbf16>, vector<9x16xf32> -> vector<9x16xf32>
    %174 = vector.extract_strided_slice %165 {offsets = [0, 0, 0], sizes = [1, 16, 32], strides = [1, 1, 1]} : vector<2x16x32xf32> to vector<1x16x32xf32>
    %175 = vector.shape_cast %174 : vector<1x16x32xf32> to vector<16x32xf32>
    %176 = arith.truncf %173 : vector<9x16xf32> to vector<9x16xbf16>
    %177 = arith.truncf %175 : vector<16x32xf32> to vector<16x32xbf16>
    %cst_83 = arith.constant dense<0.000000e+00> : vector<9x32xf32>
    %178 = tpu.matmul %176, %177, %cst_83 {dimension_numbers = #tpu.dot_dimension_numbers<[1], [0], [0], [1], [0, 0, 1, 1], [], []>} : vector<9x16xbf16>, vector<16x32xbf16>, vector<9x32xf32> -> vector<9x32xf32>
    %179 = arith.addf %171, %178 : vector<9x32xf32>
    %180 = vector.broadcast %166 : vector<1x32xf32> to vector<9x32xf32>
    %181 = arith.addf %179, %180 : vector<9x32xf32>
    %cst_84 = arith.constant 0.000000e+00 : f32
    %182 = vector.broadcast %cst_84 : f32 to vector<9x32xf32>
    %183 = arith.maximumf %181, %182 : vector<9x32xf32>
    %c0_85 = arith.constant 0 : index
    %c0_86 = arith.constant 0 : index
    %c0_87 = arith.constant 0 : index
    %184 = vector.load %arg12[%c0_85, %c0_86, %c0_87] : memref<2x32x32xf32, #tpu.memory_space<vmem>>, vector<2x32x32xf32>
    %c0_88 = arith.constant 0 : index
    %c0_89 = arith.constant 0 : index
    %185 = vector.load %arg13[%c0_88, %c0_89] : memref<1x32xf32, #tpu.memory_space<vmem>>, vector<1x32xf32>
    %186 = vector.extract_strided_slice %184 {offsets = [1, 0, 0], sizes = [1, 32, 32], strides = [1, 1, 1]} : vector<2x32x32xf32> to vector<1x32x32xf32>
    %187 = vector.shape_cast %186 : vector<1x32x32xf32> to vector<32x32xf32>
    %188 = arith.truncf %183 : vector<9x32xf32> to vector<9x32xbf16>
    %189 = arith.truncf %187 : vector<32x32xf32> to vector<32x32xbf16>
    %cst_90 = arith.constant dense<0.000000e+00> : vector<9x32xf32>
    %190 = tpu.matmul %188, %189, %cst_90 {dimension_numbers = #tpu.dot_dimension_numbers<[1], [0], [0], [1], [0, 0, 1, 1], [], []>} : vector<9x32xbf16>, vector<32x32xbf16>, vector<9x32xf32> -> vector<9x32xf32>
    %191 = arith.truncf %183 : vector<9x32xf32> to vector<9x32xbf16>
    %cst_91 = arith.constant dense<0.000000e+00> : vector<9x32xf32>
    %192 = tpu.matmul %15, %191, %cst_91 {dimension_numbers = #tpu.dot_dimension_numbers<[1], [0], [0], [1], [0, 0, 1, 1], [], []>} : vector<9x9xbf16>, vector<9x32xbf16>, vector<9x32xf32> -> vector<9x32xf32>
    %193 = vector.extract_strided_slice %184 {offsets = [0, 0, 0], sizes = [1, 32, 32], strides = [1, 1, 1]} : vector<2x32x32xf32> to vector<1x32x32xf32>
    %194 = vector.shape_cast %193 : vector<1x32x32xf32> to vector<32x32xf32>
    %195 = arith.truncf %192 : vector<9x32xf32> to vector<9x32xbf16>
    %196 = arith.truncf %194 : vector<32x32xf32> to vector<32x32xbf16>
    %cst_92 = arith.constant dense<0.000000e+00> : vector<9x32xf32>
    %197 = tpu.matmul %195, %196, %cst_92 {dimension_numbers = #tpu.dot_dimension_numbers<[1], [0], [0], [1], [0, 0, 1, 1], [], []>} : vector<9x32xbf16>, vector<32x32xbf16>, vector<9x32xf32> -> vector<9x32xf32>
    %198 = arith.addf %190, %197 : vector<9x32xf32>
    %199 = vector.broadcast %185 : vector<1x32xf32> to vector<9x32xf32>
    %200 = arith.addf %198, %199 : vector<9x32xf32>
    %cst_93 = arith.constant 0.000000e+00 : f32
    %201 = vector.broadcast %cst_93 : f32 to vector<9x32xf32>
    %202 = arith.maximumf %200, %201 : vector<9x32xf32>
    %c0_94 = arith.constant 0 : index
    %c0_95 = arith.constant 0 : index
    %203 = vector.load %arg14[%c0_94, %c0_95] : memref<16x32xf32, #tpu.memory_space<vmem>>, vector<16x32xf32>
    %204 = arith.truncf %164 : vector<9x16xf32> to vector<9x16xbf16>
    %205 = arith.truncf %203 : vector<16x32xf32> to vector<16x32xbf16>
    %cst_96 = arith.constant dense<0.000000e+00> : vector<9x32xf32>
    %206 = tpu.matmul %204, %205, %cst_96 {dimension_numbers = #tpu.dot_dimension_numbers<[1], [0], [0], [1], [0, 0, 1, 1], [], []>} : vector<9x16xbf16>, vector<16x32xbf16>, vector<9x32xf32> -> vector<9x32xf32>
    %c0_97 = arith.constant 0 : index
    %c0_98 = arith.constant 0 : index
    %207 = vector.load %arg15[%c0_97, %c0_98] : memref<1x32xf32, #tpu.memory_space<vmem>>, vector<1x32xf32>
    %208 = vector.broadcast %207 : vector<1x32xf32> to vector<9x32xf32>
    %209 = arith.addf %206, %208 : vector<9x32xf32>
    %210 = arith.addf %202, %209 : vector<9x32xf32>
    %cst_99 = arith.constant 0.000000e+00 : f32
    %211 = vector.broadcast %cst_99 : f32 to vector<9x32xf32>
    %212 = arith.maximumf %210, %211 : vector<9x32xf32>
    %213 = vector.extract_strided_slice %212 {offsets = [5, 0], sizes = [4, 32], strides = [1, 1]} : vector<9x32xf32> to vector<4x32xf32>
    %c0_100 = arith.constant 0 : index
    %c0_101 = arith.constant 0 : index
    %c0_102 = arith.constant 0 : index
    %214 = vector.load %arg3[%c0_100, %c0_101, %c0_102] : memref<1x9x30xf32, #tpu.memory_space<vmem>>, vector<1x9x30xf32>
    %215 = vector.shape_cast %214 : vector<1x9x30xf32> to vector<9x30xf32>
    %c0_103 = arith.constant 0 : index
    %c0_104 = arith.constant 0 : index
    %c0_105 = arith.constant 0 : index
    %216 = vector.load %arg4[%c0_103, %c0_104, %c0_105] : memref<2x30x16xf32, #tpu.memory_space<vmem>>, vector<2x30x16xf32>
    %c0_106 = arith.constant 0 : index
    %c0_107 = arith.constant 0 : index
    %217 = vector.load %arg5[%c0_106, %c0_107] : memref<1x16xf32, #tpu.memory_space<vmem>>, vector<1x16xf32>
    %218 = vector.extract_strided_slice %216 {offsets = [1, 0, 0], sizes = [1, 30, 16], strides = [1, 1, 1]} : vector<2x30x16xf32> to vector<1x30x16xf32>
    %219 = vector.shape_cast %218 : vector<1x30x16xf32> to vector<30x16xf32>
    %220 = arith.truncf %215 : vector<9x30xf32> to vector<9x30xbf16>
    %221 = arith.truncf %219 : vector<30x16xf32> to vector<30x16xbf16>
    %cst_108 = arith.constant dense<0.000000e+00> : vector<9x16xf32>
    %222 = tpu.matmul %220, %221, %cst_108 {dimension_numbers = #tpu.dot_dimension_numbers<[1], [0], [0], [1], [0, 0, 1, 1], [], []>} : vector<9x30xbf16>, vector<30x16xbf16>, vector<9x16xf32> -> vector<9x16xf32>
    %223 = arith.truncf %215 : vector<9x30xf32> to vector<9x30xbf16>
    %cst_109 = arith.constant dense<0.000000e+00> : vector<9x30xf32>
    %224 = tpu.matmul %7, %223, %cst_109 {dimension_numbers = #tpu.dot_dimension_numbers<[1], [0], [0], [1], [0, 0, 1, 1], [], []>} : vector<9x9xbf16>, vector<9x30xbf16>, vector<9x30xf32> -> vector<9x30xf32>
    %225 = vector.extract_strided_slice %216 {offsets = [0, 0, 0], sizes = [1, 30, 16], strides = [1, 1, 1]} : vector<2x30x16xf32> to vector<1x30x16xf32>
    %226 = vector.shape_cast %225 : vector<1x30x16xf32> to vector<30x16xf32>
    %227 = arith.truncf %224 : vector<9x30xf32> to vector<9x30xbf16>
    %228 = arith.truncf %226 : vector<30x16xf32> to vector<30x16xbf16>
    %cst_110 = arith.constant dense<0.000000e+00> : vector<9x16xf32>
    %229 = tpu.matmul %227, %228, %cst_110 {dimension_numbers = #tpu.dot_dimension_numbers<[1], [0], [0], [1], [0, 0, 1, 1], [], []>} : vector<9x30xbf16>, vector<30x16xbf16>, vector<9x16xf32> -> vector<9x16xf32>
    %230 = arith.addf %222, %229 : vector<9x16xf32>
    %231 = vector.broadcast %217 : vector<1x16xf32> to vector<9x16xf32>
    %232 = arith.addf %230, %231 : vector<9x16xf32>
    %cst_111 = arith.constant 0.000000e+00 : f32
    %233 = vector.broadcast %cst_111 : f32 to vector<9x16xf32>
    %234 = arith.maximumf %232, %233 : vector<9x16xf32>
    %c0_112 = arith.constant 0 : index
    %c0_113 = arith.constant 0 : index
    %c0_114 = arith.constant 0 : index
    %235 = vector.load %arg6[%c0_112, %c0_113, %c0_114] : memref<2x16x16xf32, #tpu.memory_space<vmem>>, vector<2x16x16xf32>
    %c0_115 = arith.constant 0 : index
    %c0_116 = arith.constant 0 : index
    %236 = vector.load %arg7[%c0_115, %c0_116] : memref<1x16xf32, #tpu.memory_space<vmem>>, vector<1x16xf32>
    %237 = vector.extract_strided_slice %235 {offsets = [1, 0, 0], sizes = [1, 16, 16], strides = [1, 1, 1]} : vector<2x16x16xf32> to vector<1x16x16xf32>
    %238 = vector.shape_cast %237 : vector<1x16x16xf32> to vector<16x16xf32>
    %239 = arith.truncf %234 : vector<9x16xf32> to vector<9x16xbf16>
    %240 = arith.truncf %238 : vector<16x16xf32> to vector<16x16xbf16>
    %cst_117 = arith.constant dense<0.000000e+00> : vector<9x16xf32>
    %241 = tpu.matmul %239, %240, %cst_117 {dimension_numbers = #tpu.dot_dimension_numbers<[1], [0], [0], [1], [0, 0, 1, 1], [], []>} : vector<9x16xbf16>, vector<16x16xbf16>, vector<9x16xf32> -> vector<9x16xf32>
    %242 = arith.truncf %234 : vector<9x16xf32> to vector<9x16xbf16>
    %cst_118 = arith.constant dense<0.000000e+00> : vector<9x16xf32>
    %243 = tpu.matmul %7, %242, %cst_118 {dimension_numbers = #tpu.dot_dimension_numbers<[1], [0], [0], [1], [0, 0, 1, 1], [], []>} : vector<9x9xbf16>, vector<9x16xbf16>, vector<9x16xf32> -> vector<9x16xf32>
    %244 = vector.extract_strided_slice %235 {offsets = [0, 0, 0], sizes = [1, 16, 16], strides = [1, 1, 1]} : vector<2x16x16xf32> to vector<1x16x16xf32>
    %245 = vector.shape_cast %244 : vector<1x16x16xf32> to vector<16x16xf32>
    %246 = arith.truncf %243 : vector<9x16xf32> to vector<9x16xbf16>
    %247 = arith.truncf %245 : vector<16x16xf32> to vector<16x16xbf16>
    %cst_119 = arith.constant dense<0.000000e+00> : vector<9x16xf32>
    %248 = tpu.matmul %246, %247, %cst_119 {dimension_numbers = #tpu.dot_dimension_numbers<[1], [0], [0], [1], [0, 0, 1, 1], [], []>} : vector<9x16xbf16>, vector<16x16xbf16>, vector<9x16xf32> -> vector<9x16xf32>
    %249 = arith.addf %241, %248 : vector<9x16xf32>
    %250 = vector.broadcast %236 : vector<1x16xf32> to vector<9x16xf32>
    %251 = arith.addf %249, %250 : vector<9x16xf32>
    %cst_120 = arith.constant 0.000000e+00 : f32
    %252 = vector.broadcast %cst_120 : f32 to vector<9x16xf32>
    %253 = arith.maximumf %251, %252 : vector<9x16xf32>
    %c0_121 = arith.constant 0 : index
    %c0_122 = arith.constant 0 : index
    %254 = vector.load %arg8[%c0_121, %c0_122] : memref<30x16xf32, #tpu.memory_space<vmem>>, vector<30x16xf32>
    %255 = arith.truncf %215 : vector<9x30xf32> to vector<9x30xbf16>
    %256 = arith.truncf %254 : vector<30x16xf32> to vector<30x16xbf16>
    %cst_123 = arith.constant dense<0.000000e+00> : vector<9x16xf32>
    %257 = tpu.matmul %255, %256, %cst_123 {dimension_numbers = #tpu.dot_dimension_numbers<[1], [0], [0], [1], [0, 0, 1, 1], [], []>} : vector<9x30xbf16>, vector<30x16xbf16>, vector<9x16xf32> -> vector<9x16xf32>
    %c0_124 = arith.constant 0 : index
    %c0_125 = arith.constant 0 : index
    %258 = vector.load %arg9[%c0_124, %c0_125] : memref<1x16xf32, #tpu.memory_space<vmem>>, vector<1x16xf32>
    %259 = vector.broadcast %258 : vector<1x16xf32> to vector<9x16xf32>
    %260 = arith.addf %257, %259 : vector<9x16xf32>
    %261 = arith.addf %253, %260 : vector<9x16xf32>
    %cst_126 = arith.constant 0.000000e+00 : f32
    %262 = vector.broadcast %cst_126 : f32 to vector<9x16xf32>
    %263 = arith.maximumf %261, %262 : vector<9x16xf32>
    %c0_127 = arith.constant 0 : index
    %c0_128 = arith.constant 0 : index
    %c0_129 = arith.constant 0 : index
    %264 = vector.load %arg10[%c0_127, %c0_128, %c0_129] : memref<2x16x32xf32, #tpu.memory_space<vmem>>, vector<2x16x32xf32>
    %c0_130 = arith.constant 0 : index
    %c0_131 = arith.constant 0 : index
    %265 = vector.load %arg11[%c0_130, %c0_131] : memref<1x32xf32, #tpu.memory_space<vmem>>, vector<1x32xf32>
    %266 = vector.extract_strided_slice %264 {offsets = [1, 0, 0], sizes = [1, 16, 32], strides = [1, 1, 1]} : vector<2x16x32xf32> to vector<1x16x32xf32>
    %267 = vector.shape_cast %266 : vector<1x16x32xf32> to vector<16x32xf32>
    %268 = arith.truncf %263 : vector<9x16xf32> to vector<9x16xbf16>
    %269 = arith.truncf %267 : vector<16x32xf32> to vector<16x32xbf16>
    %cst_132 = arith.constant dense<0.000000e+00> : vector<9x32xf32>
    %270 = tpu.matmul %268, %269, %cst_132 {dimension_numbers = #tpu.dot_dimension_numbers<[1], [0], [0], [1], [0, 0, 1, 1], [], []>} : vector<9x16xbf16>, vector<16x32xbf16>, vector<9x32xf32> -> vector<9x32xf32>
    %271 = arith.truncf %263 : vector<9x16xf32> to vector<9x16xbf16>
    %cst_133 = arith.constant dense<0.000000e+00> : vector<9x16xf32>
    %272 = tpu.matmul %15, %271, %cst_133 {dimension_numbers = #tpu.dot_dimension_numbers<[1], [0], [0], [1], [0, 0, 1, 1], [], []>} : vector<9x9xbf16>, vector<9x16xbf16>, vector<9x16xf32> -> vector<9x16xf32>
    %273 = vector.extract_strided_slice %264 {offsets = [0, 0, 0], sizes = [1, 16, 32], strides = [1, 1, 1]} : vector<2x16x32xf32> to vector<1x16x32xf32>
    %274 = vector.shape_cast %273 : vector<1x16x32xf32> to vector<16x32xf32>
    %275 = arith.truncf %272 : vector<9x16xf32> to vector<9x16xbf16>
    %276 = arith.truncf %274 : vector<16x32xf32> to vector<16x32xbf16>
    %cst_134 = arith.constant dense<0.000000e+00> : vector<9x32xf32>
    %277 = tpu.matmul %275, %276, %cst_134 {dimension_numbers = #tpu.dot_dimension_numbers<[1], [0], [0], [1], [0, 0, 1, 1], [], []>} : vector<9x16xbf16>, vector<16x32xbf16>, vector<9x32xf32> -> vector<9x32xf32>
    %278 = arith.addf %270, %277 : vector<9x32xf32>
    %279 = vector.broadcast %265 : vector<1x32xf32> to vector<9x32xf32>
    %280 = arith.addf %278, %279 : vector<9x32xf32>
    %cst_135 = arith.constant 0.000000e+00 : f32
    %281 = vector.broadcast %cst_135 : f32 to vector<9x32xf32>
    %282 = arith.maximumf %280, %281 : vector<9x32xf32>
    %c0_136 = arith.constant 0 : index
    %c0_137 = arith.constant 0 : index
    %c0_138 = arith.constant 0 : index
    %283 = vector.load %arg12[%c0_136, %c0_137, %c0_138] : memref<2x32x32xf32, #tpu.memory_space<vmem>>, vector<2x32x32xf32>
    %c0_139 = arith.constant 0 : index
    %c0_140 = arith.constant 0 : index
    %284 = vector.load %arg13[%c0_139, %c0_140] : memref<1x32xf32, #tpu.memory_space<vmem>>, vector<1x32xf32>
    %285 = vector.extract_strided_slice %283 {offsets = [1, 0, 0], sizes = [1, 32, 32], strides = [1, 1, 1]} : vector<2x32x32xf32> to vector<1x32x32xf32>
    %286 = vector.shape_cast %285 : vector<1x32x32xf32> to vector<32x32xf32>
    %287 = arith.truncf %282 : vector<9x32xf32> to vector<9x32xbf16>
    %288 = arith.truncf %286 : vector<32x32xf32> to vector<32x32xbf16>
    %cst_141 = arith.constant dense<0.000000e+00> : vector<9x32xf32>
    %289 = tpu.matmul %287, %288, %cst_141 {dimension_numbers = #tpu.dot_dimension_numbers<[1], [0], [0], [1], [0, 0, 1, 1], [], []>} : vector<9x32xbf16>, vector<32x32xbf16>, vector<9x32xf32> -> vector<9x32xf32>
    %290 = arith.truncf %282 : vector<9x32xf32> to vector<9x32xbf16>
    %cst_142 = arith.constant dense<0.000000e+00> : vector<9x32xf32>
    %291 = tpu.matmul %15, %290, %cst_142 {dimension_numbers = #tpu.dot_dimension_numbers<[1], [0], [0], [1], [0, 0, 1, 1], [], []>} : vector<9x9xbf16>, vector<9x32xbf16>, vector<9x32xf32> -> vector<9x32xf32>
    %292 = vector.extract_strided_slice %283 {offsets = [0, 0, 0], sizes = [1, 32, 32], strides = [1, 1, 1]} : vector<2x32x32xf32> to vector<1x32x32xf32>
    %293 = vector.shape_cast %292 : vector<1x32x32xf32> to vector<32x32xf32>
    %294 = arith.truncf %291 : vector<9x32xf32> to vector<9x32xbf16>
    %295 = arith.truncf %293 : vector<32x32xf32> to vector<32x32xbf16>
    %cst_143 = arith.constant dense<0.000000e+00> : vector<9x32xf32>
    %296 = tpu.matmul %294, %295, %cst_143 {dimension_numbers = #tpu.dot_dimension_numbers<[1], [0], [0], [1], [0, 0, 1, 1], [], []>} : vector<9x32xbf16>, vector<32x32xbf16>, vector<9x32xf32> -> vector<9x32xf32>
    %297 = arith.addf %289, %296 : vector<9x32xf32>
    %298 = vector.broadcast %284 : vector<1x32xf32> to vector<9x32xf32>
    %299 = arith.addf %297, %298 : vector<9x32xf32>
    %cst_144 = arith.constant 0.000000e+00 : f32
    %300 = vector.broadcast %cst_144 : f32 to vector<9x32xf32>
    %301 = arith.maximumf %299, %300 : vector<9x32xf32>
    %c0_145 = arith.constant 0 : index
    %c0_146 = arith.constant 0 : index
    %302 = vector.load %arg14[%c0_145, %c0_146] : memref<16x32xf32, #tpu.memory_space<vmem>>, vector<16x32xf32>
    %303 = arith.truncf %263 : vector<9x16xf32> to vector<9x16xbf16>
    %304 = arith.truncf %302 : vector<16x32xf32> to vector<16x32xbf16>
    %cst_147 = arith.constant dense<0.000000e+00> : vector<9x32xf32>
    %305 = tpu.matmul %303, %304, %cst_147 {dimension_numbers = #tpu.dot_dimension_numbers<[1], [0], [0], [1], [0, 0, 1, 1], [], []>} : vector<9x16xbf16>, vector<16x32xbf16>, vector<9x32xf32> -> vector<9x32xf32>
    %c0_148 = arith.constant 0 : index
    %c0_149 = arith.constant 0 : index
    %306 = vector.load %arg15[%c0_148, %c0_149] : memref<1x32xf32, #tpu.memory_space<vmem>>, vector<1x32xf32>
    %307 = vector.broadcast %306 : vector<1x32xf32> to vector<9x32xf32>
    %308 = arith.addf %305, %307 : vector<9x32xf32>
    %309 = arith.addf %301, %308 : vector<9x32xf32>
    %cst_150 = arith.constant 0.000000e+00 : f32
    %310 = vector.broadcast %cst_150 : f32 to vector<9x32xf32>
    %311 = arith.maximumf %309, %310 : vector<9x32xf32>
    %312 = vector.extract_strided_slice %311 {offsets = [5, 0], sizes = [4, 32], strides = [1, 1]} : vector<9x32xf32> to vector<4x32xf32>
    %cst_151 = arith.constant 0.000000e+00 : f32
    %313 = vector.broadcast %cst_151 : f32 to vector<4x32xf32>
    %c0_152 = arith.constant 0 : index
    %c0_153 = arith.constant 0 : index
    %c0_154 = arith.constant 0 : index
    %c0_155 = arith.constant 0 : index
    %314 = vector.load %arg16[%c0_152, %c0_153, %c0_154, %c0_155] : memref<3x4x32x32xf32, #tpu.memory_space<vmem>>, vector<1x1x32x32xf32>
    %315 = vector.shape_cast %314 : vector<1x1x32x32xf32> to vector<32x32xf32>
    %316 = arith.truncf %114 : vector<4x32xf32> to vector<4x32xbf16>
    %317 = arith.truncf %315 : vector<32x32xf32> to vector<32x32xbf16>
    %cst_156 = arith.constant dense<0.000000e+00> : vector<4x32xf32>
    %318 = tpu.matmul %316, %317, %cst_156 {dimension_numbers = #tpu.dot_dimension_numbers<[1], [0], [0], [1], [0, 0, 1, 1], [], []>} : vector<4x32xbf16>, vector<32x32xbf16>, vector<4x32xf32> -> vector<4x32xf32>
    %c0_157 = arith.constant 0 : index
    %c0_158 = arith.constant 0 : index
    %c0_159 = arith.constant 0 : index
    %c0_160 = arith.constant 0 : index
    %319 = vector.load %arg17[%c0_157, %c0_158, %c0_159, %c0_160] : memref<3x4x1x32xf32, #tpu.memory_space<vmem>>, vector<1x1x1x32xf32>
    %320 = vector.shape_cast %319 : vector<1x1x1x32xf32> to vector<1x32xf32>
    %321 = vector.broadcast %320 : vector<1x32xf32> to vector<4x32xf32>
    %322 = arith.addf %318, %321 : vector<4x32xf32>
    %c0_161 = arith.constant 0 : index
    %c1 = arith.constant 1 : index
    %c0_162 = arith.constant 0 : index
    %c0_163 = arith.constant 0 : index
    %323 = vector.load %arg16[%c0_161, %c1, %c0_162, %c0_163] : memref<3x4x32x32xf32, #tpu.memory_space<vmem>>, vector<1x1x32x32xf32>
    %324 = vector.shape_cast %323 : vector<1x1x32x32xf32> to vector<32x32xf32>
    %325 = arith.truncf %213 : vector<4x32xf32> to vector<4x32xbf16>
    %326 = arith.truncf %324 : vector<32x32xf32> to vector<32x32xbf16>
    %cst_164 = arith.constant dense<0.000000e+00> : vector<4x32xf32>
    %327 = tpu.matmul %325, %326, %cst_164 {dimension_numbers = #tpu.dot_dimension_numbers<[1], [0], [0], [1], [0, 0, 1, 1], [], []>} : vector<4x32xbf16>, vector<32x32xbf16>, vector<4x32xf32> -> vector<4x32xf32>
    %c0_165 = arith.constant 0 : index
    %c1_166 = arith.constant 1 : index
    %c0_167 = arith.constant 0 : index
    %c0_168 = arith.constant 0 : index
    %328 = vector.load %arg17[%c0_165, %c1_166, %c0_167, %c0_168] : memref<3x4x1x32xf32, #tpu.memory_space<vmem>>, vector<1x1x1x32xf32>
    %329 = vector.shape_cast %328 : vector<1x1x1x32xf32> to vector<1x32xf32>
    %330 = vector.broadcast %329 : vector<1x32xf32> to vector<4x32xf32>
    %331 = arith.addf %327, %330 : vector<4x32xf32>
    %c0_169 = arith.constant 0 : index
    %c2 = arith.constant 2 : index
    %c0_170 = arith.constant 0 : index
    %c0_171 = arith.constant 0 : index
    %332 = vector.load %arg16[%c0_169, %c2, %c0_170, %c0_171] : memref<3x4x32x32xf32, #tpu.memory_space<vmem>>, vector<1x1x32x32xf32>
    %333 = vector.shape_cast %332 : vector<1x1x32x32xf32> to vector<32x32xf32>
    %334 = arith.truncf %312 : vector<4x32xf32> to vector<4x32xbf16>
    %335 = arith.truncf %333 : vector<32x32xf32> to vector<32x32xbf16>
    %cst_172 = arith.constant dense<0.000000e+00> : vector<4x32xf32>
    %336 = tpu.matmul %334, %335, %cst_172 {dimension_numbers = #tpu.dot_dimension_numbers<[1], [0], [0], [1], [0, 0, 1, 1], [], []>} : vector<4x32xbf16>, vector<32x32xbf16>, vector<4x32xf32> -> vector<4x32xf32>
    %c0_173 = arith.constant 0 : index
    %c2_174 = arith.constant 2 : index
    %c0_175 = arith.constant 0 : index
    %c0_176 = arith.constant 0 : index
    %337 = vector.load %arg17[%c0_173, %c2_174, %c0_175, %c0_176] : memref<3x4x1x32xf32, #tpu.memory_space<vmem>>, vector<1x1x1x32xf32>
    %338 = vector.shape_cast %337 : vector<1x1x1x32xf32> to vector<1x32xf32>
    %339 = vector.broadcast %338 : vector<1x32xf32> to vector<4x32xf32>
    %340 = arith.addf %336, %339 : vector<4x32xf32>
    %341 = arith.truncf %322 : vector<4x32xf32> to vector<4x32xbf16>
    %342 = arith.truncf %331 : vector<4x32xf32> to vector<4x32xbf16>
    %cst_177 = arith.constant dense<0.000000e+00> : vector<4x4xf32>
    %343 = tpu.matmul %341, %342, %cst_177 {dimension_numbers = #tpu.dot_dimension_numbers<[1], [1], [0], [0], [0, 0, 1, 0], [], []>} : vector<4x32xbf16>, vector<4x32xbf16>, vector<4x4xf32> -> vector<4x4xf32>
    %cst_178 = arith.constant 0.176776692 : f32
    %344 = vector.broadcast %cst_178 : f32 to vector<4x4xf32>
    %345 = arith.mulf %343, %344 : vector<4x4xf32>
    %cst_179 = arith.constant dense<0xFF800000> : vector<4xf32>
    %346 = vector.multi_reduction <maximumf>, %345, %cst_179 [1] : vector<4x4xf32> to vector<4xf32>
    %347 = vector.shape_cast %346 : vector<4xf32> to vector<4x1xf32>
    %348 = vector.broadcast %347 : vector<4x1xf32> to vector<4x4xf32>
    %349 = arith.subf %345, %348 : vector<4x4xf32>
    %350 = math.exp %349 : vector<4x4xf32>
    %cst_180 = arith.constant dense<0.000000e+00> : vector<4xf32>
    %351 = vector.multi_reduction <add>, %350, %cst_180 [1] : vector<4x4xf32> to vector<4xf32>
    %352 = vector.shape_cast %351 : vector<4xf32> to vector<4x1xf32>
    %353 = vector.broadcast %352 : vector<4x1xf32> to vector<4x4xf32>
    %354 = arith.divf %350, %353 : vector<4x4xf32>
    %355 = arith.truncf %354 : vector<4x4xf32> to vector<4x4xbf16>
    %356 = arith.truncf %340 : vector<4x32xf32> to vector<4x32xbf16>
    %cst_181 = arith.constant dense<0.000000e+00> : vector<4x32xf32>
    %357 = tpu.matmul %355, %356, %cst_181 {dimension_numbers = #tpu.dot_dimension_numbers<[1], [0], [0], [1], [0, 0, 1, 1], [], []>} : vector<4x4xbf16>, vector<4x32xbf16>, vector<4x32xf32> -> vector<4x32xf32>
    %c0_182 = arith.constant 0 : index
    %c3 = arith.constant 3 : index
    %c0_183 = arith.constant 0 : index
    %c0_184 = arith.constant 0 : index
    %358 = vector.load %arg16[%c0_182, %c3, %c0_183, %c0_184] : memref<3x4x32x32xf32, #tpu.memory_space<vmem>>, vector<1x1x32x32xf32>
    %359 = vector.shape_cast %358 : vector<1x1x32x32xf32> to vector<32x32xf32>
    %360 = arith.truncf %357 : vector<4x32xf32> to vector<4x32xbf16>
    %361 = arith.truncf %359 : vector<32x32xf32> to vector<32x32xbf16>
    %cst_185 = arith.constant dense<0.000000e+00> : vector<4x32xf32>
    %362 = tpu.matmul %360, %361, %cst_185 {dimension_numbers = #tpu.dot_dimension_numbers<[1], [0], [0], [1], [0, 0, 1, 1], [], []>} : vector<4x32xbf16>, vector<32x32xbf16>, vector<4x32xf32> -> vector<4x32xf32>
    %363 = arith.addf %313, %362 : vector<4x32xf32>
    %c0_186 = arith.constant 0 : index
    %c3_187 = arith.constant 3 : index
    %c0_188 = arith.constant 0 : index
    %c0_189 = arith.constant 0 : index
    %364 = vector.load %arg17[%c0_186, %c3_187, %c0_188, %c0_189] : memref<3x4x1x32xf32, #tpu.memory_space<vmem>>, vector<1x1x1x32xf32>
    %365 = vector.shape_cast %364 : vector<1x1x1x32xf32> to vector<1x32xf32>
    %366 = vector.broadcast %365 : vector<1x32xf32> to vector<4x32xf32>
    %367 = arith.addf %363, %366 : vector<4x32xf32>
    %c1_190 = arith.constant 1 : index
    %c0_191 = arith.constant 0 : index
    %c0_192 = arith.constant 0 : index
    %c0_193 = arith.constant 0 : index
    %368 = vector.load %arg16[%c1_190, %c0_191, %c0_192, %c0_193] : memref<3x4x32x32xf32, #tpu.memory_space<vmem>>, vector<1x1x32x32xf32>
    %369 = vector.shape_cast %368 : vector<1x1x32x32xf32> to vector<32x32xf32>
    %370 = arith.truncf %213 : vector<4x32xf32> to vector<4x32xbf16>
    %371 = arith.truncf %369 : vector<32x32xf32> to vector<32x32xbf16>
    %cst_194 = arith.constant dense<0.000000e+00> : vector<4x32xf32>
    %372 = tpu.matmul %370, %371, %cst_194 {dimension_numbers = #tpu.dot_dimension_numbers<[1], [0], [0], [1], [0, 0, 1, 1], [], []>} : vector<4x32xbf16>, vector<32x32xbf16>, vector<4x32xf32> -> vector<4x32xf32>
    %c1_195 = arith.constant 1 : index
    %c0_196 = arith.constant 0 : index
    %c0_197 = arith.constant 0 : index
    %c0_198 = arith.constant 0 : index
    %373 = vector.load %arg17[%c1_195, %c0_196, %c0_197, %c0_198] : memref<3x4x1x32xf32, #tpu.memory_space<vmem>>, vector<1x1x1x32xf32>
    %374 = vector.shape_cast %373 : vector<1x1x1x32xf32> to vector<1x32xf32>
    %375 = vector.broadcast %374 : vector<1x32xf32> to vector<4x32xf32>
    %376 = arith.addf %372, %375 : vector<4x32xf32>
    %c1_199 = arith.constant 1 : index
    %c1_200 = arith.constant 1 : index
    %c0_201 = arith.constant 0 : index
    %c0_202 = arith.constant 0 : index
    %377 = vector.load %arg16[%c1_199, %c1_200, %c0_201, %c0_202] : memref<3x4x32x32xf32, #tpu.memory_space<vmem>>, vector<1x1x32x32xf32>
    %378 = vector.shape_cast %377 : vector<1x1x32x32xf32> to vector<32x32xf32>
    %379 = arith.truncf %312 : vector<4x32xf32> to vector<4x32xbf16>
    %380 = arith.truncf %378 : vector<32x32xf32> to vector<32x32xbf16>
    %cst_203 = arith.constant dense<0.000000e+00> : vector<4x32xf32>
    %381 = tpu.matmul %379, %380, %cst_203 {dimension_numbers = #tpu.dot_dimension_numbers<[1], [0], [0], [1], [0, 0, 1, 1], [], []>} : vector<4x32xbf16>, vector<32x32xbf16>, vector<4x32xf32> -> vector<4x32xf32>
    %c1_204 = arith.constant 1 : index
    %c1_205 = arith.constant 1 : index
    %c0_206 = arith.constant 0 : index
    %c0_207 = arith.constant 0 : index
    %382 = vector.load %arg17[%c1_204, %c1_205, %c0_206, %c0_207] : memref<3x4x1x32xf32, #tpu.memory_space<vmem>>, vector<1x1x1x32xf32>
    %383 = vector.shape_cast %382 : vector<1x1x1x32xf32> to vector<1x32xf32>
    %384 = vector.broadcast %383 : vector<1x32xf32> to vector<4x32xf32>
    %385 = arith.addf %381, %384 : vector<4x32xf32>
    %c1_208 = arith.constant 1 : index
    %c2_209 = arith.constant 2 : index
    %c0_210 = arith.constant 0 : index
    %c0_211 = arith.constant 0 : index
    %386 = vector.load %arg16[%c1_208, %c2_209, %c0_210, %c0_211] : memref<3x4x32x32xf32, #tpu.memory_space<vmem>>, vector<1x1x32x32xf32>
    %387 = vector.shape_cast %386 : vector<1x1x32x32xf32> to vector<32x32xf32>
    %388 = arith.truncf %114 : vector<4x32xf32> to vector<4x32xbf16>
    %389 = arith.truncf %387 : vector<32x32xf32> to vector<32x32xbf16>
    %cst_212 = arith.constant dense<0.000000e+00> : vector<4x32xf32>
    %390 = tpu.matmul %388, %389, %cst_212 {dimension_numbers = #tpu.dot_dimension_numbers<[1], [0], [0], [1], [0, 0, 1, 1], [], []>} : vector<4x32xbf16>, vector<32x32xbf16>, vector<4x32xf32> -> vector<4x32xf32>
    %c1_213 = arith.constant 1 : index
    %c2_214 = arith.constant 2 : index
    %c0_215 = arith.constant 0 : index
    %c0_216 = arith.constant 0 : index
    %391 = vector.load %arg17[%c1_213, %c2_214, %c0_215, %c0_216] : memref<3x4x1x32xf32, #tpu.memory_space<vmem>>, vector<1x1x1x32xf32>
    %392 = vector.shape_cast %391 : vector<1x1x1x32xf32> to vector<1x32xf32>
    %393 = vector.broadcast %392 : vector<1x32xf32> to vector<4x32xf32>
    %394 = arith.addf %390, %393 : vector<4x32xf32>
    %395 = arith.truncf %376 : vector<4x32xf32> to vector<4x32xbf16>
    %396 = arith.truncf %385 : vector<4x32xf32> to vector<4x32xbf16>
    %cst_217 = arith.constant dense<0.000000e+00> : vector<4x4xf32>
    %397 = tpu.matmul %395, %396, %cst_217 {dimension_numbers = #tpu.dot_dimension_numbers<[1], [1], [0], [0], [0, 0, 1, 0], [], []>} : vector<4x32xbf16>, vector<4x32xbf16>, vector<4x4xf32> -> vector<4x4xf32>
    %cst_218 = arith.constant 0.176776692 : f32
    %398 = vector.broadcast %cst_218 : f32 to vector<4x4xf32>
    %399 = arith.mulf %397, %398 : vector<4x4xf32>
    %cst_219 = arith.constant dense<0xFF800000> : vector<4xf32>
    %400 = vector.multi_reduction <maximumf>, %399, %cst_219 [1] : vector<4x4xf32> to vector<4xf32>
    %401 = vector.shape_cast %400 : vector<4xf32> to vector<4x1xf32>
    %402 = vector.broadcast %401 : vector<4x1xf32> to vector<4x4xf32>
    %403 = arith.subf %399, %402 : vector<4x4xf32>
    %404 = math.exp %403 : vector<4x4xf32>
    %cst_220 = arith.constant dense<0.000000e+00> : vector<4xf32>
    %405 = vector.multi_reduction <add>, %404, %cst_220 [1] : vector<4x4xf32> to vector<4xf32>
    %406 = vector.shape_cast %405 : vector<4xf32> to vector<4x1xf32>
    %407 = vector.broadcast %406 : vector<4x1xf32> to vector<4x4xf32>
    %408 = arith.divf %404, %407 : vector<4x4xf32>
    %409 = arith.truncf %408 : vector<4x4xf32> to vector<4x4xbf16>
    %410 = arith.truncf %394 : vector<4x32xf32> to vector<4x32xbf16>
    %cst_221 = arith.constant dense<0.000000e+00> : vector<4x32xf32>
    %411 = tpu.matmul %409, %410, %cst_221 {dimension_numbers = #tpu.dot_dimension_numbers<[1], [0], [0], [1], [0, 0, 1, 1], [], []>} : vector<4x4xbf16>, vector<4x32xbf16>, vector<4x32xf32> -> vector<4x32xf32>
    %c1_222 = arith.constant 1 : index
    %c3_223 = arith.constant 3 : index
    %c0_224 = arith.constant 0 : index
    %c0_225 = arith.constant 0 : index
    %412 = vector.load %arg16[%c1_222, %c3_223, %c0_224, %c0_225] : memref<3x4x32x32xf32, #tpu.memory_space<vmem>>, vector<1x1x32x32xf32>
    %413 = vector.shape_cast %412 : vector<1x1x32x32xf32> to vector<32x32xf32>
    %414 = arith.truncf %411 : vector<4x32xf32> to vector<4x32xbf16>
    %415 = arith.truncf %413 : vector<32x32xf32> to vector<32x32xbf16>
    %cst_226 = arith.constant dense<0.000000e+00> : vector<4x32xf32>
    %416 = tpu.matmul %414, %415, %cst_226 {dimension_numbers = #tpu.dot_dimension_numbers<[1], [0], [0], [1], [0, 0, 1, 1], [], []>} : vector<4x32xbf16>, vector<32x32xbf16>, vector<4x32xf32> -> vector<4x32xf32>
    %417 = arith.addf %367, %416 : vector<4x32xf32>
    %c1_227 = arith.constant 1 : index
    %c3_228 = arith.constant 3 : index
    %c0_229 = arith.constant 0 : index
    %c0_230 = arith.constant 0 : index
    %418 = vector.load %arg17[%c1_227, %c3_228, %c0_229, %c0_230] : memref<3x4x1x32xf32, #tpu.memory_space<vmem>>, vector<1x1x1x32xf32>
    %419 = vector.shape_cast %418 : vector<1x1x1x32xf32> to vector<1x32xf32>
    %420 = vector.broadcast %419 : vector<1x32xf32> to vector<4x32xf32>
    %421 = arith.addf %417, %420 : vector<4x32xf32>
    %c2_231 = arith.constant 2 : index
    %c0_232 = arith.constant 0 : index
    %c0_233 = arith.constant 0 : index
    %c0_234 = arith.constant 0 : index
    %422 = vector.load %arg16[%c2_231, %c0_232, %c0_233, %c0_234] : memref<3x4x32x32xf32, #tpu.memory_space<vmem>>, vector<1x1x32x32xf32>
    %423 = vector.shape_cast %422 : vector<1x1x32x32xf32> to vector<32x32xf32>
    %424 = arith.truncf %312 : vector<4x32xf32> to vector<4x32xbf16>
    %425 = arith.truncf %423 : vector<32x32xf32> to vector<32x32xbf16>
    %cst_235 = arith.constant dense<0.000000e+00> : vector<4x32xf32>
    %426 = tpu.matmul %424, %425, %cst_235 {dimension_numbers = #tpu.dot_dimension_numbers<[1], [0], [0], [1], [0, 0, 1, 1], [], []>} : vector<4x32xbf16>, vector<32x32xbf16>, vector<4x32xf32> -> vector<4x32xf32>
    %c2_236 = arith.constant 2 : index
    %c0_237 = arith.constant 0 : index
    %c0_238 = arith.constant 0 : index
    %c0_239 = arith.constant 0 : index
    %427 = vector.load %arg17[%c2_236, %c0_237, %c0_238, %c0_239] : memref<3x4x1x32xf32, #tpu.memory_space<vmem>>, vector<1x1x1x32xf32>
    %428 = vector.shape_cast %427 : vector<1x1x1x32xf32> to vector<1x32xf32>
    %429 = vector.broadcast %428 : vector<1x32xf32> to vector<4x32xf32>
    %430 = arith.addf %426, %429 : vector<4x32xf32>
    %c2_240 = arith.constant 2 : index
    %c1_241 = arith.constant 1 : index
    %c0_242 = arith.constant 0 : index
    %c0_243 = arith.constant 0 : index
    %431 = vector.load %arg16[%c2_240, %c1_241, %c0_242, %c0_243] : memref<3x4x32x32xf32, #tpu.memory_space<vmem>>, vector<1x1x32x32xf32>
    %432 = vector.shape_cast %431 : vector<1x1x32x32xf32> to vector<32x32xf32>
    %433 = arith.truncf %114 : vector<4x32xf32> to vector<4x32xbf16>
    %434 = arith.truncf %432 : vector<32x32xf32> to vector<32x32xbf16>
    %cst_244 = arith.constant dense<0.000000e+00> : vector<4x32xf32>
    %435 = tpu.matmul %433, %434, %cst_244 {dimension_numbers = #tpu.dot_dimension_numbers<[1], [0], [0], [1], [0, 0, 1, 1], [], []>} : vector<4x32xbf16>, vector<32x32xbf16>, vector<4x32xf32> -> vector<4x32xf32>
    %c2_245 = arith.constant 2 : index
    %c1_246 = arith.constant 1 : index
    %c0_247 = arith.constant 0 : index
    %c0_248 = arith.constant 0 : index
    %436 = vector.load %arg17[%c2_245, %c1_246, %c0_247, %c0_248] : memref<3x4x1x32xf32, #tpu.memory_space<vmem>>, vector<1x1x1x32xf32>
    %437 = vector.shape_cast %436 : vector<1x1x1x32xf32> to vector<1x32xf32>
    %438 = vector.broadcast %437 : vector<1x32xf32> to vector<4x32xf32>
    %439 = arith.addf %435, %438 : vector<4x32xf32>
    %c2_249 = arith.constant 2 : index
    %c2_250 = arith.constant 2 : index
    %c0_251 = arith.constant 0 : index
    %c0_252 = arith.constant 0 : index
    %440 = vector.load %arg16[%c2_249, %c2_250, %c0_251, %c0_252] : memref<3x4x32x32xf32, #tpu.memory_space<vmem>>, vector<1x1x32x32xf32>
    %441 = vector.shape_cast %440 : vector<1x1x32x32xf32> to vector<32x32xf32>
    %442 = arith.truncf %213 : vector<4x32xf32> to vector<4x32xbf16>
    %443 = arith.truncf %441 : vector<32x32xf32> to vector<32x32xbf16>
    %cst_253 = arith.constant dense<0.000000e+00> : vector<4x32xf32>
    %444 = tpu.matmul %442, %443, %cst_253 {dimension_numbers = #tpu.dot_dimension_numbers<[1], [0], [0], [1], [0, 0, 1, 1], [], []>} : vector<4x32xbf16>, vector<32x32xbf16>, vector<4x32xf32> -> vector<4x32xf32>
    %c2_254 = arith.constant 2 : index
    %c2_255 = arith.constant 2 : index
    %c0_256 = arith.constant 0 : index
    %c0_257 = arith.constant 0 : index
    %445 = vector.load %arg17[%c2_254, %c2_255, %c0_256, %c0_257] : memref<3x4x1x32xf32, #tpu.memory_space<vmem>>, vector<1x1x1x32xf32>
    %446 = vector.shape_cast %445 : vector<1x1x1x32xf32> to vector<1x32xf32>
    %447 = vector.broadcast %446 : vector<1x32xf32> to vector<4x32xf32>
    %448 = arith.addf %444, %447 : vector<4x32xf32>
    %449 = arith.truncf %430 : vector<4x32xf32> to vector<4x32xbf16>
    %450 = arith.truncf %439 : vector<4x32xf32> to vector<4x32xbf16>
    %cst_258 = arith.constant dense<0.000000e+00> : vector<4x4xf32>
    %451 = tpu.matmul %449, %450, %cst_258 {dimension_numbers = #tpu.dot_dimension_numbers<[1], [1], [0], [0], [0, 0, 1, 0], [], []>} : vector<4x32xbf16>, vector<4x32xbf16>, vector<4x4xf32> -> vector<4x4xf32>
    %cst_259 = arith.constant 0.176776692 : f32
    %452 = vector.broadcast %cst_259 : f32 to vector<4x4xf32>
    %453 = arith.mulf %451, %452 : vector<4x4xf32>
    %cst_260 = arith.constant dense<0xFF800000> : vector<4xf32>
    %454 = vector.multi_reduction <maximumf>, %453, %cst_260 [1] : vector<4x4xf32> to vector<4xf32>
    %455 = vector.shape_cast %454 : vector<4xf32> to vector<4x1xf32>
    %456 = vector.broadcast %455 : vector<4x1xf32> to vector<4x4xf32>
    %457 = arith.subf %453, %456 : vector<4x4xf32>
    %458 = math.exp %457 : vector<4x4xf32>
    %cst_261 = arith.constant dense<0.000000e+00> : vector<4xf32>
    %459 = vector.multi_reduction <add>, %458, %cst_261 [1] : vector<4x4xf32> to vector<4xf32>
    %460 = vector.shape_cast %459 : vector<4xf32> to vector<4x1xf32>
    %461 = vector.broadcast %460 : vector<4x1xf32> to vector<4x4xf32>
    %462 = arith.divf %458, %461 : vector<4x4xf32>
    %463 = arith.truncf %462 : vector<4x4xf32> to vector<4x4xbf16>
    %464 = arith.truncf %448 : vector<4x32xf32> to vector<4x32xbf16>
    %cst_262 = arith.constant dense<0.000000e+00> : vector<4x32xf32>
    %465 = tpu.matmul %463, %464, %cst_262 {dimension_numbers = #tpu.dot_dimension_numbers<[1], [0], [0], [1], [0, 0, 1, 1], [], []>} : vector<4x4xbf16>, vector<4x32xbf16>, vector<4x32xf32> -> vector<4x32xf32>
    %c2_263 = arith.constant 2 : index
    %c3_264 = arith.constant 3 : index
    %c0_265 = arith.constant 0 : index
    %c0_266 = arith.constant 0 : index
    %466 = vector.load %arg16[%c2_263, %c3_264, %c0_265, %c0_266] : memref<3x4x32x32xf32, #tpu.memory_space<vmem>>, vector<1x1x32x32xf32>
    %467 = vector.shape_cast %466 : vector<1x1x32x32xf32> to vector<32x32xf32>
    %468 = arith.truncf %465 : vector<4x32xf32> to vector<4x32xbf16>
    %469 = arith.truncf %467 : vector<32x32xf32> to vector<32x32xbf16>
    %cst_267 = arith.constant dense<0.000000e+00> : vector<4x32xf32>
    %470 = tpu.matmul %468, %469, %cst_267 {dimension_numbers = #tpu.dot_dimension_numbers<[1], [0], [0], [1], [0, 0, 1, 1], [], []>} : vector<4x32xbf16>, vector<32x32xbf16>, vector<4x32xf32> -> vector<4x32xf32>
    %471 = arith.addf %421, %470 : vector<4x32xf32>
    %c2_268 = arith.constant 2 : index
    %c3_269 = arith.constant 3 : index
    %c0_270 = arith.constant 0 : index
    %c0_271 = arith.constant 0 : index
    %472 = vector.load %arg17[%c2_268, %c3_269, %c0_270, %c0_271] : memref<3x4x1x32xf32, #tpu.memory_space<vmem>>, vector<1x1x1x32xf32>
    %473 = vector.shape_cast %472 : vector<1x1x1x32xf32> to vector<1x32xf32>
    %474 = vector.broadcast %473 : vector<1x32xf32> to vector<4x32xf32>
    %475 = arith.addf %471, %474 : vector<4x32xf32>
    %c0_272 = arith.constant 0 : index
    %c0_273 = arith.constant 0 : index
    %476 = vector.load %arg19[%c0_272, %c0_273] : memref<1x64xf32, #tpu.memory_space<vmem>>, vector<1x64xf32>
    %477 = vector.extract_strided_slice %475 {offsets = [0, 0], sizes = [1, 32], strides = [1, 1]} : vector<4x32xf32> to vector<1x32xf32>
    %c0_274 = arith.constant 0 : index
    %c0_275 = arith.constant 0 : index
    %c0_276 = arith.constant 0 : index
    %478 = vector.load %arg18[%c0_274, %c0_275, %c0_276] : memref<4x32x64xf32, #tpu.memory_space<vmem>>, vector<1x32x64xf32>
    %479 = vector.shape_cast %478 : vector<1x32x64xf32> to vector<32x64xf32>
    %480 = arith.truncf %477 : vector<1x32xf32> to vector<1x32xbf16>
    %481 = arith.truncf %479 : vector<32x64xf32> to vector<32x64xbf16>
    %cst_277 = arith.constant dense<0.000000e+00> : vector<1x64xf32>
    %482 = tpu.matmul %480, %481, %cst_277 {dimension_numbers = #tpu.dot_dimension_numbers<[1], [0], [0], [1], [0, 0, 1, 1], [], []>} : vector<1x32xbf16>, vector<32x64xbf16>, vector<1x64xf32> -> vector<1x64xf32>
    %483 = arith.addf %476, %482 : vector<1x64xf32>
    %484 = vector.extract_strided_slice %475 {offsets = [1, 0], sizes = [1, 32], strides = [1, 1]} : vector<4x32xf32> to vector<1x32xf32>
    %c1_278 = arith.constant 1 : index
    %c0_279 = arith.constant 0 : index
    %c0_280 = arith.constant 0 : index
    %485 = vector.load %arg18[%c1_278, %c0_279, %c0_280] : memref<4x32x64xf32, #tpu.memory_space<vmem>>, vector<1x32x64xf32>
    %486 = vector.shape_cast %485 : vector<1x32x64xf32> to vector<32x64xf32>
    %487 = arith.truncf %484 : vector<1x32xf32> to vector<1x32xbf16>
    %488 = arith.truncf %486 : vector<32x64xf32> to vector<32x64xbf16>
    %cst_281 = arith.constant dense<0.000000e+00> : vector<1x64xf32>
    %489 = tpu.matmul %487, %488, %cst_281 {dimension_numbers = #tpu.dot_dimension_numbers<[1], [0], [0], [1], [0, 0, 1, 1], [], []>} : vector<1x32xbf16>, vector<32x64xbf16>, vector<1x64xf32> -> vector<1x64xf32>
    %490 = arith.addf %483, %489 : vector<1x64xf32>
    %491 = vector.extract_strided_slice %475 {offsets = [2, 0], sizes = [1, 32], strides = [1, 1]} : vector<4x32xf32> to vector<1x32xf32>
    %c2_282 = arith.constant 2 : index
    %c0_283 = arith.constant 0 : index
    %c0_284 = arith.constant 0 : index
    %492 = vector.load %arg18[%c2_282, %c0_283, %c0_284] : memref<4x32x64xf32, #tpu.memory_space<vmem>>, vector<1x32x64xf32>
    %493 = vector.shape_cast %492 : vector<1x32x64xf32> to vector<32x64xf32>
    %494 = arith.truncf %491 : vector<1x32xf32> to vector<1x32xbf16>
    %495 = arith.truncf %493 : vector<32x64xf32> to vector<32x64xbf16>
    %cst_285 = arith.constant dense<0.000000e+00> : vector<1x64xf32>
    %496 = tpu.matmul %494, %495, %cst_285 {dimension_numbers = #tpu.dot_dimension_numbers<[1], [0], [0], [1], [0, 0, 1, 1], [], []>} : vector<1x32xbf16>, vector<32x64xbf16>, vector<1x64xf32> -> vector<1x64xf32>
    %497 = arith.addf %490, %496 : vector<1x64xf32>
    %498 = vector.extract_strided_slice %475 {offsets = [3, 0], sizes = [1, 32], strides = [1, 1]} : vector<4x32xf32> to vector<1x32xf32>
    %c3_286 = arith.constant 3 : index
    %c0_287 = arith.constant 0 : index
    %c0_288 = arith.constant 0 : index
    %499 = vector.load %arg18[%c3_286, %c0_287, %c0_288] : memref<4x32x64xf32, #tpu.memory_space<vmem>>, vector<1x32x64xf32>
    %500 = vector.shape_cast %499 : vector<1x32x64xf32> to vector<32x64xf32>
    %501 = arith.truncf %498 : vector<1x32xf32> to vector<1x32xbf16>
    %502 = arith.truncf %500 : vector<32x64xf32> to vector<32x64xbf16>
    %cst_289 = arith.constant dense<0.000000e+00> : vector<1x64xf32>
    %503 = tpu.matmul %501, %502, %cst_289 {dimension_numbers = #tpu.dot_dimension_numbers<[1], [0], [0], [1], [0, 0, 1, 1], [], []>} : vector<1x32xbf16>, vector<32x64xbf16>, vector<1x64xf32> -> vector<1x64xf32>
    %504 = arith.addf %497, %503 : vector<1x64xf32>
    %cst_290 = arith.constant 0.000000e+00 : f32
    %505 = vector.broadcast %cst_290 : f32 to vector<1x64xf32>
    %506 = arith.maximumf %504, %505 : vector<1x64xf32>
    %c0_291 = arith.constant 0 : index
    %c0_292 = arith.constant 0 : index
    %507 = vector.load %arg20[%c0_291, %c0_292] : memref<64x8xf32, #tpu.memory_space<vmem>>, vector<64x8xf32>
    %508 = arith.truncf %506 : vector<1x64xf32> to vector<1x64xbf16>
    %509 = arith.truncf %507 : vector<64x8xf32> to vector<64x8xbf16>
    %cst_293 = arith.constant dense<0.000000e+00> : vector<1x8xf32>
    %510 = tpu.matmul %508, %509, %cst_293 {dimension_numbers = #tpu.dot_dimension_numbers<[1], [0], [0], [1], [0, 0, 1, 1], [], []>} : vector<1x64xbf16>, vector<64x8xbf16>, vector<1x8xf32> -> vector<1x8xf32>
    %c0_294 = arith.constant 0 : index
    %c0_295 = arith.constant 0 : index
    %511 = vector.load %arg21[%c0_294, %c0_295] : memref<1x8xf32, #tpu.memory_space<vmem>>, vector<1x8xf32>
    %512 = arith.addf %510, %511 : vector<1x8xf32>
    %c0_296 = arith.constant 0 : index
    %c0_297 = arith.constant 0 : index
    %c0_298 = arith.constant 0 : index
    %513 = vector.load %arg22[%c0_296, %c0_297, %c0_298] : memref<1x1x8xf32, #tpu.memory_space<vmem>>, vector<1x1x8xf32>
    %514 = vector.shape_cast %513 : vector<1x1x8xf32> to vector<1x8xf32>
    %515 = vector.shape_cast %512 : vector<1x8xf32> to vector<1x1x8xf32>
    tpu.vector_store %arg22[%c0_296, %c0_297, %c0_298], %515 {strides = array<i32>} : memref<1x1x8xf32, #tpu.memory_space<vmem>>, vector<1x1x8xf32>,
    return
  }
  func.func @transform_0(%arg0: i32) -> (i32, i32, i32) {
    %c0_i32 = arith.constant 0 : i32
    %c0_i32_0 = arith.constant 0 : i32
    %c0_i32_1 = arith.constant 0 : i32
    return %arg0, %c0_i32, %c0_i32_0 : i32, i32, i32
  }
  func.func @transform_1(%arg0: i32) -> (i32, i32, i32) {
    %c0_i32 = arith.constant 0 : i32
    %c0_i32_0 = arith.constant 0 : i32
    %c0_i32_1 = arith.constant 0 : i32
    return %arg0, %c0_i32, %c0_i32_0 : i32, i32, i32
  }
  func.func @transform_2(%arg0: i32) -> (i32, i32, i32) {
    %c0_i32 = arith.constant 0 : i32
    %c0_i32_0 = arith.constant 0 : i32
    %c0_i32_1 = arith.constant 0 : i32
    return %arg0, %c0_i32, %c0_i32_0 : i32, i32, i32
  }
  func.func @transform_3(%arg0: i32) -> (i32, i32, i32) {
    %c0_i32 = arith.constant 0 : i32
    %c0_i32_0 = arith.constant 0 : i32
    %c0_i32_1 = arith.constant 0 : i32
    %c0_i32_2 = arith.constant 0 : i32
    return %c0_i32, %c0_i32_0, %c0_i32_1 : i32, i32, i32
  }
  func.func @transform_4(%arg0: i32) -> (i32, i32) {
    %c0_i32 = arith.constant 0 : i32
    %c0_i32_0 = arith.constant 0 : i32
    %c0_i32_1 = arith.constant 0 : i32
    return %c0_i32, %c0_i32_0 : i32, i32
  }
  func.func @transform_5(%arg0: i32) -> (i32, i32, i32) {
    %c0_i32 = arith.constant 0 : i32
    %c0_i32_0 = arith.constant 0 : i32
    %c0_i32_1 = arith.constant 0 : i32
    %c0_i32_2 = arith.constant 0 : i32
    return %c0_i32, %c0_i32_0, %c0_i32_1 : i32, i32, i32
  }
  func.func @transform_6(%arg0: i32) -> (i32, i32) {
    %c0_i32 = arith.constant 0 : i32
    %c0_i32_0 = arith.constant 0 : i32
    %c0_i32_1 = arith.constant 0 : i32
    return %c0_i32, %c0_i32_0 : i32, i32
  }
  func.func @transform_7(%arg0: i32) -> (i32, i32) {
    %c0_i32 = arith.constant 0 : i32
    %c0_i32_0 = arith.constant 0 : i32
    %c0_i32_1 = arith.constant 0 : i32
    return %c0_i32, %c0_i32_0 : i32, i32
  }
  func.func @transform_8(%arg0: i32) -> (i32, i32) {
    %c0_i32 = arith.constant 0 : i32
    %c0_i32_0 = arith.constant 0 : i32
    %c0_i32_1 = arith.constant 0 : i32
    return %c0_i32, %c0_i32_0 : i32, i32
  }
  func.func @transform_9(%arg0: i32) -> (i32, i32, i32) {
    %c0_i32 = arith.constant 0 : i32
    %c0_i32_0 = arith.constant 0 : i32
    %c0_i32_1 = arith.constant 0 : i32
    %c0_i32_2 = arith.constant 0 : i32
    return %c0_i32, %c0_i32_0, %c0_i32_1 : i32, i32, i32
  }
  func.func @transform_10(%arg0: i32) -> (i32, i32) {
    %c0_i32 = arith.constant 0 : i32
    %c0_i32_0 = arith.constant 0 : i32
    %c0_i32_1 = arith.constant 0 : i32
    return %c0_i32, %c0_i32_0 : i32, i32
  }
  func.func @transform_11(%arg0: i32) -> (i32, i32, i32) {
    %c0_i32 = arith.constant 0 : i32
    %c0_i32_0 = arith.constant 0 : i32
    %c0_i32_1 = arith.constant 0 : i32
    %c0_i32_2 = arith.constant 0 : i32
    return %c0_i32, %c0_i32_0, %c0_i32_1 : i32, i32, i32
  }
  func.func @transform_12(%arg0: i32) -> (i32, i32) {
    %c0_i32 = arith.constant 0 : i32
    %c0_i32_0 = arith.constant 0 : i32
    %c0_i32_1 = arith.constant 0 : i32
    return %c0_i32, %c0_i32_0 : i32, i32
  }
  func.func @transform_13(%arg0: i32) -> (i32, i32) {
    %c0_i32 = arith.constant 0 : i32
    %c0_i32_0 = arith.constant 0 : i32
    %c0_i32_1 = arith.constant 0 : i32
    return %c0_i32, %c0_i32_0 : i32, i32
  }
  func.func @transform_14(%arg0: i32) -> (i32, i32) {
    %c0_i32 = arith.constant 0 : i32
    %c0_i32_0 = arith.constant 0 : i32
    %c0_i32_1 = arith.constant 0 : i32
    return %c0_i32, %c0_i32_0 : i32, i32
  }
  func.func @transform_15(%arg0: i32) -> (i32, i32, i32, i32) {
    %c0_i32 = arith.constant 0 : i32
    %c0_i32_0 = arith.constant 0 : i32
    %c0_i32_1 = arith.constant 0 : i32
    %c0_i32_2 = arith.constant 0 : i32
    %c0_i32_3 = arith.constant 0 : i32
    return %c0_i32, %c0_i32_0, %c0_i32_1, %c0_i32_2 : i32, i32, i32, i32
  }
  func.func @transform_16(%arg0: i32) -> (i32, i32, i32, i32) {
    %c0_i32 = arith.constant 0 : i32
    %c0_i32_0 = arith.constant 0 : i32
    %c0_i32_1 = arith.constant 0 : i32
    %c0_i32_2 = arith.constant 0 : i32
    %c0_i32_3 = arith.constant 0 : i32
    return %c0_i32, %c0_i32_0, %c0_i32_1, %c0_i32_2 : i32, i32, i32, i32
  }
  func.func @transform_17(%arg0: i32) -> (i32, i32, i32) {
    %c0_i32 = arith.constant 0 : i32
    %c0_i32_0 = arith.constant 0 : i32
    %c0_i32_1 = arith.constant 0 : i32
    %c0_i32_2 = arith.constant 0 : i32
    return %c0_i32, %c0_i32_0, %c0_i32_1 : i32, i32, i32
  }
  func.func @transform_18(%arg0: i32) -> (i32, i32) {
    %c0_i32 = arith.constant 0 : i32
    %c0_i32_0 = arith.constant 0 : i32
    %c0_i32_1 = arith.constant 0 : i32
    return %c0_i32, %c0_i32_0 : i32, i32
  }
  func.func @transform_19(%arg0: i32) -> (i32, i32) {
    %c0_i32 = arith.constant 0 : i32
    %c0_i32_0 = arith.constant 0 : i32
    %c0_i32_1 = arith.constant 0 : i32
    return %c0_i32, %c0_i32_0 : i32, i32
  }
  func.func @transform_20(%arg0: i32) -> (i32, i32) {
    %c0_i32 = arith.constant 0 : i32
    %c0_i32_0 = arith.constant 0 : i32
    %c0_i32_1 = arith.constant 0 : i32
    return %c0_i32, %c0_i32_0 : i32, i32
  }
  func.func @transform_21(%arg0: i32) -> (i32, i32, i32) {
    %c0_i32 = arith.constant 0 : i32
    %c0_i32_0 = arith.constant 0 : i32
    %c0_i32_1 = arith.constant 0 : i32
    return %arg0, %c0_i32, %c0_i32_0 : i32, i32, i32
  }
}

</mosaic_0001>

<llo_original>
// kernel: temporal_net_forward.1
$region0: #{temporal_net_forward.1}
  #allocation0 [shape = 'u32[]', space=smem, size = 0x4, offset = 0x4, fixed_abs, tag = 'smem constant byte address 0x4 - core index']
  #allocation1 [shape = 'u32[72,128]{1,0:T(1,128)}', space=vmem, size = 0x9000, scoped, tag = 'internal scratch']
  %s0 = inlined_call_operand.vmem [shape: f32[2,9,30], index: 0, kind: input, shape index: {}]
  %s1 = inlined_call_operand.vmem [shape: f32[2,9,30], index: 1, kind: input, shape index: {}]
  %s2 = inlined_call_operand.vmem [shape: f32[2,9,30], index: 2, kind: input, shape index: {}]
  %s3 = inlined_call_operand.vmem [shape: f32[2,30,16], index: 3, kind: input, shape index: {}]
  %s4 = inlined_call_operand.vmem [shape: f32[1,16], index: 4, kind: input, shape index: {}]
  %s5 = inlined_call_operand.vmem [shape: f32[2,16,16], index: 5, kind: input, shape index: {}]
  %s6 = inlined_call_operand.vmem [shape: f32[1,16], index: 6, kind: input, shape index: {}]
  %s7 = inlined_call_operand.vmem [shape: f32[30,16], index: 7, kind: input, shape index: {}]
  %s8 = inlined_call_operand.vmem [shape: f32[1,16], index: 8, kind: input, shape index: {}]
  %s9 = inlined_call_operand.vmem [shape: f32[2,16,32], index: 9, kind: input, shape index: {}]
  %s10 = inlined_call_operand.vmem [shape: f32[1,32], index: 10, kind: input, shape index: {}]
  %s11 = inlined_call_operand.vmem [shape: f32[2,32,32], index: 11, kind: input, shape index: {}]
  %s12 = inlined_call_operand.vmem [shape: f32[1,32], index: 12, kind: input, shape index: {}]
  %s13 = inlined_call_operand.vmem [shape: f32[16,32], index: 13, kind: input, shape index: {}]
  %s14 = inlined_call_operand.vmem [shape: f32[1,32], index: 14, kind: input, shape index: {}]
  %s15 = inlined_call_operand.vmem [shape: f32[3,4,32,32], index: 15, kind: input, shape index: {}]
  %s16 = inlined_call_operand.vmem [shape: f32[3,4,1,32], index: 16, kind: input, shape index: {}]
  %s17 = inlined_call_operand.vmem [shape: f32[4,32,64], index: 17, kind: input, shape index: {}]
  %s18 = inlined_call_operand.vmem [shape: f32[1,64], index: 18, kind: input, shape index: {}]
  %s19 = inlined_call_operand.vmem [shape: f32[64,8], index: 19, kind: input, shape index: {}]
  %s20 = inlined_call_operand.vmem [shape: f32[1,8], index: 20, kind: input, shape index: {}]
  %s21 = inlined_call_operand.hbm [shape: f32[2,1,8], index: 21, kind: output, shape index: {}]
  %s22 = sld [smem:[#allocation0]]
  $region117: #{temporal_net_forward.1} parent=0
    _
  %s24 = ssub.s32 1, %s22
  %s25 = scalar_select 0, %s24, %s22
  $region1: #{temporal_net_forward.1} parent=0
    #allocation2 [shape = 'u8[1024]{0}', space=vmem, size = 0x400, scoped, tag = 'output window, operand 0']
    #allocation3 [shape = 's32[2]{0}', space=sflag, size = 0x8, scoped, tag = 'scoped memory for temporal_net_forward.1']
    %26 = vsyncpa [#allocation3], 0
    %s27 = scalar_lea.sflag [#allocation3], 1
    %28 = vsyncpa %s27, 0
    loop: start=0, step=1, limit=4
    $region2: #{temporal_net_forward.1} parent=1 // loop_pre_header
      _
    $region3: #{temporal_net_forward.1} parent=1 // loop_header
      %s30 = sphi 0, %s34
      %p31 = scmp.ge.s32.totalorder %s30, 4
      %s40 = sphi 0, %s42
      %s43 = sphi 0, %s40
      %s44 = sphi 0, %s43
      %s60 = sphi 0, %s44
      %s66 = sphi 0, %s68
      %s69 = sphi 0, %s66
      %s70 = sphi 0, %s69
      %s86 = sphi 0, %s70
      %s92 = sphi 0, %s94
      %s95 = sphi 0, %s92
      %s96 = sphi 0, %s95
      %s112 = sphi 0, %s96
      %s116 = sphi 0, %s116
      %s118 = sphi 0, %s116
      %s119 = sphi 0, %s118
      %s133 = sphi 0, %s119
      %s137 = sphi 0, %s137
      %s139 = sphi 0, %s137
      %s140 = sphi 0, %s139
      %s154 = sphi 0, %s140
      %s158 = sphi 0, %s158
      %s160 = sphi 0, %s158
      %s161 = sphi 0, %s160
      %s175 = sphi 0, %s161
      %s179 = sphi 0, %s179
      %s181 = sphi 0, %s179
      %s182 = sphi 0, %s181
      %s196 = sphi 0, %s182
      %s200 = sphi 0, %s200
      %s202 = sphi 0, %s200
      %s203 = sphi 0, %s202
      %s217 = sphi 0, %s203
      %s221 = sphi 0, %s221
      %s223 = sphi 0, %s221
      %s224 = sphi 0, %s223
      %s238 = sphi 0, %s224
      %s242 = sphi 0, %s242
      %s244 = sphi 0, %s242
      %s245 = sphi 0, %s244
      %s259 = sphi 0, %s245
      %s263 = sphi 0, %s263
      %s265 = sphi 0, %s263
      %s266 = sphi 0, %s265
      %s280 = sphi 0, %s266
      %s284 = sphi 0, %s284
      %s286 = sphi 0, %s284
      %s287 = sphi 0, %s286
      %s301 = sphi 0, %s287
      %s305 = sphi 0, %s305
      %s307 = sphi 0, %s305
      %s308 = sphi 0, %s307
      %s322 = sphi 0, %s308
      %s326 = sphi 0, %s326
      %s328 = sphi 0, %s326
      %s329 = sphi 0, %s328
      %s343 = sphi 0, %s329
      %s347 = sphi 0, %s347
      %s349 = sphi 0, %s347
      %s350 = sphi 0, %s349
      %s364 = sphi 0, %s350
      %s368 = sphi 0, %s368
      %s370 = sphi 0, %s368
      %s371 = sphi 0, %s370
      %s385 = sphi 0, %s371
      %s389 = sphi 0, %s389
      %s391 = sphi 0, %s389
      %s392 = sphi 0, %s391
      %s406 = sphi 0, %s392
      %s410 = sphi 0, %s410
      %s412 = sphi 0, %s410
      %s413 = sphi 0, %s412
      %s427 = sphi 0, %s413
      %s431 = sphi 0, %s431
      %s433 = sphi 0, %s431
      %s434 = sphi 0, %s433
      %s448 = sphi 0, %s434
      %s452 = sphi 0, %s452
      %s454 = sphi 0, %s452
      %s455 = sphi 0, %s454
      %s469 = sphi 0, %s455
      %s473 = sphi 0, %s473
      %s475 = sphi 0, %s473
      %s476 = sphi 0, %s475
      %s490 = sphi 0, %s476
      %s496 = sphi 0, %s498
      %s499 = sphi 0, %s496
      %s500 = sphi 0, %s499
      %s516 = sphi 0, %s500
    $region4: #{temporal_net_forward.1} parent=1 // loop_header_branch
      %33 = sbr.rel (%p31) target = $region8
    $region5: #{temporal_net_forward.1} parent=1 // loop_body
      %s35 = ssub.s32 %s30, 1
      %s36 = ssub.s32 %s30, 2
      %s37 = sadd.s32 %s30, 1
      %s38 = ssub.s32 %s30, %s37
      %p39 = scmp.eq.s32.totalorder %s38, 0
      %s41 = sadd.s32 %s40, 1
      %s42 = scalar_select %p39, %s40, %s41
      %p45 = pneg %p39
      %p46 = scmp.eq.s32.totalorder %s30, 1
      %p47 = por %p45, %p46
      %p48 = scmp.ne.s32.totalorder %s40, %s43
      %p49 = scmp.eq.s32.totalorder %s30, 0
      %p50 = por %p48, %p49
      %p51 = scmp.ne.s32.totalorder %s40, %s43
      %p52 = scmp.eq.s32.totalorder %s35, 1
      %p53 = por %p51, %p52
      %p54 = scmp.ne.s32.totalorder %s43, %s44
      %p55 = scmp.eq.s32.totalorder %s35, 0
      %p56 = por %p54, %p55
      %p57 = scmp.ne.s32.totalorder %s43, %s44
      %p58 = scmp.eq.s32.totalorder %s36, 1
      %p59 = por %p57, %p58
      %p61 = scmp.ne.s32.totalorder %s44, %s60
      %p62 = scmp.eq.s32.totalorder %s36, 0
      %p63 = por %p61, %p62
      %s64 = ssub.s32 %s30, %s37
      %p65 = scmp.eq.s32.totalorder %s64, 0
      %s67 = sadd.s32 %s66, 1
      %s68 = scalar_select %p65, %s66, %s67
      %p71 = pneg %p65
      %p72 = scmp.eq.s32.totalorder %s30, 1
      %p73 = por %p71, %p72
      %p74 = scmp.ne.s32.totalorder %s66, %s69
      %p75 = scmp.eq.s32.totalorder %s30, 0
      %p76 = por %p74, %p75
      %p77 = scmp.ne.s32.totalorder %s66, %s69
      %p78 = scmp.eq.s32.totalorder %s35, 1
      %p79 = por %p77, %p78
      %p80 = scmp.ne.s32.totalorder %s69, %s70
      %p81 = scmp.eq.s32.totalorder %s35, 0
      %p82 = por %p80, %p81
      %p83 = scmp.ne.s32.totalorder %s69, %s70
      %p84 = scmp.eq.s32.totalorder %s36, 1
      %p85 = por %p83, %p84
      %p87 = scmp.ne.s32.totalorder %s70, %s86
      %p88 = scmp.eq.s32.totalorder %s36, 0
      %p89 = por %p87, %p88
      %s90 = ssub.s32 %s30, %s37
      %p91 = scmp.eq.s32.totalorder %s90, 0
      %s93 = sadd.s32 %s92, 1
      %s94 = scalar_select %p91, %s92, %s93
      %p97 = pneg %p91
      %p98 = scmp.eq.s32.totalorder %s30, 1
      %p99 = por %p97, %p98
      %p100 = scmp.ne.s32.totalorder %s92, %s95
      %p101 = scmp.eq.s32.totalorder %s30, 0
      %p102 = por %p100, %p101
      %p103 = scmp.ne.s32.totalorder %s92, %s95
      %p104 = scmp.eq.s32.totalorder %s35, 1
      %p105 = por %p103, %p104
      %p106 = scmp.ne.s32.totalorder %s95, %s96
      %p107 = scmp.eq.s32.totalorder %s35, 0
      %p108 = por %p106, %p107
      %p109 = scmp.ne.s32.totalorder %s95, %s96
      %p110 = scmp.eq.s32.totalorder %s36, 1
      %p111 = por %p109, %p110
      %p113 = scmp.ne.s32.totalorder %s96, %s112
      %p114 = scmp.eq.s32.totalorder %s36, 0
      %p115 = por %p113, %p114
      %s117 = sadd.s32 %s116, 1
      %p120 = scmp.eq.s32.totalorder %s30, 1
      %p121 = scmp.ne.s32.totalorder %s116, %s118
      %p122 = scmp.eq.s32.totalorder %s30, 0
      %p123 = por %p121, %p122
      %p124 = scmp.ne.s32.totalorder %s116, %s118
      %p125 = scmp.eq.s32.totalorder %s35, 1
      %p126 = por %p124, %p125
      %p127 = scmp.ne.s32.totalorder %s118, %s119
      %p128 = scmp.eq.s32.totalorder %s35, 0
      %p129 = por %p127, %p128
      %p130 = scmp.ne.s32.totalorder %s118, %s119
      %p131 = scmp.eq.s32.totalorder %s36, 1
      %p132 = por %p130, %p131
      %p134 = scmp.ne.s32.totalorder %s119, %s133
      %p135 = scmp.eq.s32.totalorder %s36, 0
      %p136 = por %p134, %p135
      %s138 = sadd.s32 %s137, 1
      %p141 = scmp.eq.s32.totalorder %s30, 1
      %p142 = scmp.ne.s32.totalorder %s137, %s139
      %p143 = scmp.eq.s32.totalorder %s30, 0
      %p144 = por %p142, %p143
      %p145 = scmp.ne.s32.totalorder %s137, %s139
      %p146 = scmp.eq.s32.totalorder %s35, 1
      %p147 = por %p145, %p146
      %p148 = scmp.ne.s32.totalorder %s139, %s140
      %p149 = scmp.eq.s32.totalorder %s35, 0
      %p150 = por %p148, %p149
      %p151 = scmp.ne.s32.totalorder %s139, %s140
      %p152 = scmp.eq.s32.totalorder %s36, 1
      %p153 = por %p151, %p152
      %p155 = scmp.ne.s32.totalorder %s140, %s154
      %p156 = scmp.eq.s32.totalorder %s36, 0
      %p157 = por %p155, %p156
      %s159 = sadd.s32 %s158, 1
      %p162 = scmp.eq.s32.totalorder %s30, 1
      %p163 = scmp.ne.s32.totalorder %s158, %s160
      %p164 = scmp.eq.s32.totalorder %s30, 0
      %p165 = por %p163, %p164
      %p166 = scmp.ne.s32.totalorder %s158, %s160
      %p167 = scmp.eq.s32.totalorder %s35, 1
      %p168 = por %p166, %p167
      %p169 = scmp.ne.s32.totalorder %s160, %s161
      %p170 = scmp.eq.s32.totalorder %s35, 0
      %p171 = por %p169, %p170
      %p172 = scmp.ne.s32.totalorder %s160, %s161
      %p173 = scmp.eq.s32.totalorder %s36, 1
      %p174 = por %p172, %p173
      %p176 = scmp.ne.s32.totalorder %s161, %s175
      %p177 = scmp.eq.s32.totalorder %s36, 0
      %p178 = por %p176, %p177
      %s180 = sadd.s32 %s179, 1
      %p183 = scmp.eq.s32.totalorder %s30, 1
      %p184 = scmp.ne.s32.totalorder %s179, %s181
      %p185 = scmp.eq.s32.totalorder %s30, 0
      %p186 = por %p184, %p185
      %p187 = scmp.ne.s32.totalorder %s179, %s181
      %p188 = scmp.eq.s32.totalorder %s35, 1
      %p189 = por %p187, %p188
      %p190 = scmp.ne.s32.totalorder %s181, %s182
      %p191 = scmp.eq.s32.totalorder %s35, 0
      %p192 = por %p190, %p191
      %p193 = scmp.ne.s32.totalorder %s181, %s182
      %p194 = scmp.eq.s32.totalorder %s36, 1
      %p195 = por %p193, %p194
      %p197 = scmp.ne.s32.totalorder %s182, %s196
      %p198 = scmp.eq.s32.totalorder %s36, 0
      %p199 = por %p197, %p198
      %s201 = sadd.s32 %s200, 1
      %p204 = scmp.eq.s32.totalorder %s30, 1
      %p205 = scmp.ne.s32.totalorder %s200, %s202
      %p206 = scmp.eq.s32.totalorder %s30, 0
      %p207 = por %p205, %p206
      %p208 = scmp.ne.s32.totalorder %s200, %s202
      %p209 = scmp.eq.s32.totalorder %s35, 1
      %p210 = por %p208, %p209
      %p211 = scmp.ne.s32.totalorder %s202, %s203
      %p212 = scmp.eq.s32.totalorder %s35, 0
      %p213 = por %p211, %p212
      %p214 = scmp.ne.s32.totalorder %s202, %s203
      %p215 = scmp.eq.s32.totalorder %s36, 1
      %p216 = por %p214, %p215
      %p218 = scmp.ne.s32.totalorder %s203, %s217
      %p219 = scmp.eq.s32.totalorder %s36, 0
      %p220 = por %p218, %p219
      %s222 = sadd.s32 %s221, 1
      %p225 = scmp.eq.s32.totalorder %s30, 1
      %p226 = scmp.ne.s32.totalorder %s221, %s223
      %p227 = scmp.eq.s32.totalorder %s30, 0
      %p228 = por %p226, %p227
      %p229 = scmp.ne.s32.totalorder %s221, %s223
      %p230 = scmp.eq.s32.totalorder %s35, 1
      %p231 = por %p229, %p230
      %p232 = scmp.ne.s32.totalorder %s223, %s224
      %p233 = scmp.eq.s32.totalorder %s35, 0
      %p234 = por %p232, %p233
      %p235 = scmp.ne.s32.totalorder %s223, %s224
      %p236 = scmp.eq.s32.totalorder %s36, 1
      %p237 = por %p235, %p236
      %p239 = scmp.ne.s32.totalorder %s224, %s238
      %p240 = scmp.eq.s32.totalorder %s36, 0
      %p241 = por %p239, %p240
      %s243 = sadd.s32 %s242, 1
      %p246 = scmp.eq.s32.totalorder %s30, 1
      %p247 = scmp.ne.s32.totalorder %s242, %s244
      %p248 = scmp.eq.s32.totalorder %s30, 0
      %p249 = por %p247, %p248
      %p250 = scmp.ne.s32.totalorder %s242, %s244
      %p251 = scmp.eq.s32.totalorder %s35, 1
      %p252 = por %p250, %p251
      %p253 = scmp.ne.s32.totalorder %s244, %s245
      %p254 = scmp.eq.s32.totalorder %s35, 0
      %p255 = por %p253, %p254
      %p256 = scmp.ne.s32.totalorder %s244, %s245
      %p257 = scmp.eq.s32.totalorder %s36, 1
      %p258 = por %p256, %p257
      %p260 = scmp.ne.s32.totalorder %s245, %s259
      %p261 = scmp.eq.s32.totalorder %s36, 0
      %p262 = por %p260, %p261
      %s264 = sadd.s32 %s263, 1
      %p267 = scmp.eq.s32.totalorder %s30, 1
      %p268 = scmp.ne.s32.totalorder %s263, %s265
      %p269 = scmp.eq.s32.totalorder %s30, 0
      %p270 = por %p268, %p269
      %p271 = scmp.ne.s32.totalorder %s263, %s265
      %p272 = scmp.eq.s32.totalorder %s35, 1
      %p273 = por %p271, %p272
      %p274 = scmp.ne.s32.totalorder %s265, %s266
      %p275 = scmp.eq.s32.totalorder %s35, 0
      %p276 = por %p274, %p275
      %p277 = scmp.ne.s32.totalorder %s265, %s266
      %p278 = scmp.eq.s32.totalorder %s36, 1
      %p279 = por %p277, %p278
      %p281 = scmp.ne.s32.totalorder %s266, %s280
      %p282 = scmp.eq.s32.totalorder %s36, 0
      %p283 = por %p281, %p282
      %s285 = sadd.s32 %s284, 1
      %p288 = scmp.eq.s32.totalorder %s30, 1
      %p289 = scmp.ne.s32.totalorder %s284, %s286
      %p290 = scmp.eq.s32.totalorder %s30, 0
      %p291 = por %p289, %p290
      %p292 = scmp.ne.s32.totalorder %s284, %s286
      %p293 = scmp.eq.s32.totalorder %s35, 1
      %p294 = por %p292, %p293
      %p295 = scmp.ne.s32.totalorder %s286, %s287
      %p296 = scmp.eq.s32.totalorder %s35, 0
      %p297 = por %p295, %p296
      %p298 = scmp.ne.s32.totalorder %s286, %s287
      %p299 = scmp.eq.s32.totalorder %s36, 1
      %p300 = por %p298, %p299
      %p302 = scmp.ne.s32.totalorder %s287, %s301
      %p303 = scmp.eq.s32.totalorder %s36, 0
      %p304 = por %p302, %p303
      %s306 = sadd.s32 %s305, 1
      %p309 = scmp.eq.s32.totalorder %s30, 1
      %p310 = scmp.ne.s32.totalorder %s305, %s307
      %p311 = scmp.eq.s32.totalorder %s30, 0
      %p312 = por %p310, %p311
      %p313 = scmp.ne.s32.totalorder %s305, %s307
      %p314 = scmp.eq.s32.totalorder %s35, 1
      %p315 = por %p313, %p314
      %p316 = scmp.ne.s32.totalorder %s307, %s308
      %p317 = scmp.eq.s32.totalorder %s35, 0
      %p318 = por %p316, %p317
      %p319 = scmp.ne.s32.totalorder %s307, %s308
      %p320 = scmp.eq.s32.totalorder %s36, 1
      %p321 = por %p319, %p320
      %p323 = scmp.ne.s32.totalorder %s308, %s322
      %p324 = scmp.eq.s32.totalorder %s36, 0
      %p325 = por %p323, %p324
      %s327 = sadd.s32 %s326, 1
      %p330 = scmp.eq.s32.totalorder %s30, 1
      %p331 = scmp.ne.s32.totalorder %s326, %s328
      %p332 = scmp.eq.s32.totalorder %s30, 0
      %p333 = por %p331, %p332
      %p334 = scmp.ne.s32.totalorder %s326, %s328
      %p335 = scmp.eq.s32.totalorder %s35, 1
      %p336 = por %p334, %p335
      %p337 = scmp.ne.s32.totalorder %s328, %s329
      %p338 = scmp.eq.s32.totalorder %s35, 0
      %p339 = por %p337, %p338
      %p340 = scmp.ne.s32.totalorder %s328, %s329
      %p341 = scmp.eq.s32.totalorder %s36, 1
      %p342 = por %p340, %p341
      %p344 = scmp.ne.s32.totalorder %s329, %s343
      %p345 = scmp.eq.s32.totalorder %s36, 0
      %p346 = por %p344, %p345
      %s348 = sadd.s32 %s347, 1
      %p351 = scmp.eq.s32.totalorder %s30, 1
      %p352 = scmp.ne.s32.totalorder %s347, %s349
      %p353 = scmp.eq.s32.totalorder %s30, 0
      %p354 = por %p352, %p353
      %p355 = scmp.ne.s32.totalorder %s347, %s349
      %p356 = scmp.eq.s32.totalorder %s35, 1
      %p357 = por %p355, %p356
      %p358 = scmp.ne.s32.totalorder %s349, %s350
      %p359 = scmp.eq.s32.totalorder %s35, 0
      %p360 = por %p358, %p359
      %p361 = scmp.ne.s32.totalorder %s349, %s350
      %p362 = scmp.eq.s32.totalorder %s36, 1
      %p363 = por %p361, %p362
      %p365 = scmp.ne.s32.totalorder %s350, %s364
      %p366 = scmp.eq.s32.totalorder %s36, 0
      %p367 = por %p365, %p366
      %s369 = sadd.s32 %s368, 1
      %p372 = scmp.eq.s32.totalorder %s30, 1
      %p373 = scmp.ne.s32.totalorder %s368, %s370
      %p374 = scmp.eq.s32.totalorder %s30, 0
      %p375 = por %p373, %p374
      %p376 = scmp.ne.s32.totalorder %s368, %s370
      %p377 = scmp.eq.s32.totalorder %s35, 1
      %p378 = por %p376, %p377
      %p379 = scmp.ne.s32.totalorder %s370, %s371
      %p380 = scmp.eq.s32.totalorder %s35, 0
      %p381 = por %p379, %p380
      %p382 = scmp.ne.s32.totalorder %s370, %s371
      %p383 = scmp.eq.s32.totalorder %s36, 1
      %p384 = por %p382, %p383
      %p386 = scmp.ne.s32.totalorder %s371, %s385
      %p387 = scmp.eq.s32.totalorder %s36, 0
      %p388 = por %p386, %p387
      %s390 = sadd.s32 %s389, 1
      %p393 = scmp.eq.s32.totalorder %s30, 1
      %p394 = scmp.ne.s32.totalorder %s389, %s391
      %p395 = scmp.eq.s32.totalorder %s30, 0
      %p396 = por %p394, %p395
      %p397 = scmp.ne.s32.totalorder %s389, %s391
      %p398 = scmp.eq.s32.totalorder %s35, 1
      %p399 = por %p397, %p398
      %p400 = scmp.ne.s32.totalorder %s391, %s392
      %p401 = scmp.eq.s32.totalorder %s35, 0
      %p402 = por %p400, %p401
      %p403 = scmp.ne.s32.totalorder %s391, %s392
      %p404 = scmp.eq.s32.totalorder %s36, 1
      %p405 = por %p403, %p404
      %p407 = scmp.ne.s32.totalorder %s392, %s406
      %p408 = scmp.eq.s32.totalorder %s36, 0
      %p409 = por %p407, %p408
      %s411 = sadd.s32 %s410, 1
      %p414 = scmp.eq.s32.totalorder %s30, 1
      %p415 = scmp.ne.s32.totalorder %s410, %s412
      %p416 = scmp.eq.s32.totalorder %s30, 0
      %p417 = por %p415, %p416
      %p418 = scmp.ne.s32.totalorder %s410, %s412
      %p419 = scmp.eq.s32.totalorder %s35, 1
      %p420 = por %p418, %p419
      %p421 = scmp.ne.s32.totalorder %s412, %s413
      %p422 = scmp.eq.s32.totalorder %s35, 0
      %p423 = por %p421, %p422
      %p424 = scmp.ne.s32.totalorder %s412, %s413
      %p425 = scmp.eq.s32.totalorder %s36, 1
      %p426 = por %p424, %p425
      %p428 = scmp.ne.s32.totalorder %s413, %s427
      %p429 = scmp.eq.s32.totalorder %s36, 0
      %p430 = por %p428, %p429
      %s432 = sadd.s32 %s431, 1
      %p435 = scmp.eq.s32.totalorder %s30, 1
      %p436 = scmp.ne.s32.totalorder %s431, %s433
      %p437 = scmp.eq.s32.totalorder %s30, 0
      %p438 = por %p436, %p437
      %p439 = scmp.ne.s32.totalorder %s431, %s433
      %p440 = scmp.eq.s32.totalorder %s35, 1
      %p441 = por %p439, %p440
      %p442 = scmp.ne.s32.totalorder %s433, %s434
      %p443 = scmp.eq.s32.totalorder %s35, 0
      %p444 = por %p442, %p443
      %p445 = scmp.ne.s32.totalorder %s433, %s434
      %p446 = scmp.eq.s32.totalorder %s36, 1
      %p447 = por %p445, %p446
      %p449 = scmp.ne.s32.totalorder %s434, %s448
      %p450 = scmp.eq.s32.totalorder %s36, 0
      %p451 = por %p449, %p450
      %s453 = sadd.s32 %s452, 1
      %p456 = scmp.eq.s32.totalorder %s30, 1
      %p457 = scmp.ne.s32.totalorder %s452, %s454
      %p458 = scmp.eq.s32.totalorder %s30, 0
      %p459 = por %p457, %p458
      %p460 = scmp.ne.s32.totalorder %s452, %s454
      %p461 = scmp.eq.s32.totalorder %s35, 1
      %p462 = por %p460, %p461
      %p463 = scmp.ne.s32.totalorder %s454, %s455
      %p464 = scmp.eq.s32.totalorder %s35, 0
      %p465 = por %p463, %p464
      %p466 = scmp.ne.s32.totalorder %s454, %s455
      %p467 = scmp.eq.s32.totalorder %s36, 1
      %p468 = por %p466, %p467
      %p470 = scmp.ne.s32.totalorder %s455, %s469
      %p471 = scmp.eq.s32.totalorder %s36, 0
      %p472 = por %p470, %p471
      %s474 = sadd.s32 %s473, 1
      %p477 = scmp.eq.s32.totalorder %s30, 1
      %p478 = scmp.ne.s32.totalorder %s473, %s475
      %p479 = scmp.eq.s32.totalorder %s30, 0
      %p480 = por %p478, %p479
      %p481 = scmp.ne.s32.totalorder %s473, %s475
      %p482 = scmp.eq.s32.totalorder %s35, 1
      %p483 = por %p481, %p482
      %p484 = scmp.ne.s32.totalorder %s475, %s476
      %p485 = scmp.eq.s32.totalorder %s35, 0
      %p486 = por %p484, %p485
      %p487 = scmp.ne.s32.totalorder %s475, %s476
      %p488 = scmp.eq.s32.totalorder %s36, 1
      %p489 = por %p487, %p488
      %p491 = scmp.ne.s32.totalorder %s476, %s490
      %p492 = scmp.eq.s32.totalorder %s36, 0
      %p493 = por %p491, %p492
      %s494 = ssub.s32 %s30, %s37
      %p495 = scmp.eq.s32.totalorder %s494, 0
      %s497 = sadd.s32 %s496, 1
      %s498 = scalar_select %p495, %s496, %s497
      %p501 = pneg %p495
      %p502 = scmp.eq.s32.totalorder %s30, 1
      %p503 = por %p501, %p502
      %p504 = scmp.ne.s32.totalorder %s496, %s499
      %p505 = scmp.eq.s32.totalorder %s30, 0
      %p506 = por %p504, %p505
      %p507 = scmp.ne.s32.totalorder %s496, %s499
      %p508 = scmp.eq.s32.totalorder %s35, 1
      %p509 = por %p507, %p508
      %p510 = scmp.ne.s32.totalorder %s499, %s500
      %p511 = scmp.eq.s32.totalorder %s35, 0
      %p512 = por %p510, %p511
      %p513 = scmp.ne.s32.totalorder %s499, %s500
      %p514 = scmp.eq.s32.totalorder %s36, 1
      %p515 = por %p513, %p514
      %p517 = scmp.ne.s32.totalorder %s500, %s516
      %p518 = scmp.eq.s32.totalorder %s36, 0
      %p519 = por %p517, %p518
      %p520 = scmp.le.s32.totalorder 1, %s30
      %p521 = scmp.lt.s32.totalorder %s30, 3
      %p522 = pnand %p520, %p521
      %p523 = pneg %p522
      // Predicated region
      $region9: #{temporal_net_forward.1} parent=5 // pred_check
        _
      $region10: #{temporal_net_forward.1} parent=5 // pred_check_branch
        %525 = sbr.rel (%p522) target = $region12
      $region11: #{temporal_net_forward.1} parent=5 // pred_region
        %s526 = ssub.s32 %s30, 1
        // Predicated region
        $region13: #{temporal_net_forward.1} parent=11 // pred_check
          %p527 = pneg %p129
        $region14: #{temporal_net_forward.1} parent=11 // pred_check_branch
          %529 = sbr.rel (%p527) target = $region16
        $region15: #{temporal_net_forward.1} parent=11 // pred_region
          _
        $region16: #{temporal_net_forward.1} parent=11 // pred_fallthru
          _
        // Predicated region
        $region17: #{temporal_net_forward.1} parent=11 // pred_check
          %p530 = pneg %p150
        $region18: #{temporal_net_forward.1} parent=11 // pred_check_branch
          %532 = sbr.rel (%p530) target = $region20
        $region19: #{temporal_net_forward.1} parent=11 // pred_region
          _
        $region20: #{temporal_net_forward.1} parent=11 // pred_fallthru
          _
        // Predicated region
        $region21: #{temporal_net_forward.1} parent=11 // pred_check
          %p533 = pneg %p171
        $region22: #{temporal_net_forward.1} parent=11 // pred_check_branch
          %535 = sbr.rel (%p533) target = $region24
        $region23: #{temporal_net_forward.1} parent=11 // pred_region
          _
        $region24: #{temporal_net_forward.1} parent=11 // pred_fallthru
          _
        // Predicated region
        $region25: #{temporal_net_forward.1} parent=11 // pred_check
          %p536 = pneg %p192
        $region26: #{temporal_net_forward.1} parent=11 // pred_check_branch
          %538 = sbr.rel (%p536) target = $region28
        $region27: #{temporal_net_forward.1} parent=11 // pred_region
          _
        $region28: #{temporal_net_forward.1} parent=11 // pred_fallthru
          _
        // Predicated region
        $region29: #{temporal_net_forward.1} parent=11 // pred_check
          %p539 = pneg %p213
        $region30: #{temporal_net_forward.1} parent=11 // pred_check_branch
          %541 = sbr.rel (%p539) target = $region32
        $region31: #{temporal_net_forward.1} parent=11 // pred_region
          _
        $region32: #{temporal_net_forward.1} parent=11 // pred_fallthru
          _
        // Predicated region
        $region33: #{temporal_net_forward.1} parent=11 // pred_check
          %p542 = pneg %p234
        $region34: #{temporal_net_forward.1} parent=11 // pred_check_branch
          %544 = sbr.rel (%p542) target = $region36
        $region35: #{temporal_net_forward.1} parent=11 // pred_region
          _
        $region36: #{temporal_net_forward.1} parent=11 // pred_fallthru
          _
        // Predicated region
        $region37: #{temporal_net_forward.1} parent=11 // pred_check
          %p545 = pneg %p255
        $region38: #{temporal_net_forward.1} parent=11 // pred_check_branch
          %547 = sbr.rel (%p545) target = $region40
        $region39: #{temporal_net_forward.1} parent=11 // pred_region
          _
        $region40: #{temporal_net_forward.1} parent=11 // pred_fallthru
          _
        // Predicated region
        $region41: #{temporal_net_forward.1} parent=11 // pred_check
          %p548 = pneg %p276
        $region42: #{temporal_net_forward.1} parent=11 // pred_check_branch
          %550 = sbr.rel (%p548) target = $region44
        $region43: #{temporal_net_forward.1} parent=11 // pred_region
          _
        $region44: #{temporal_net_forward.1} parent=11 // pred_fallthru
          _
        // Predicated region
        $region45: #{temporal_net_forward.1} parent=11 // pred_check
          %p551 = pneg %p297
        $region46: #{temporal_net_forward.1} parent=11 // pred_check_branch
          %553 = sbr.rel (%p551) target = $region48
        $region47: #{temporal_net_forward.1} parent=11 // pred_region
          _
        $region48: #{temporal_net_forward.1} parent=11 // pred_fallthru
          _
        // Predicated region
        $region49: #{temporal_net_forward.1} parent=11 // pred_check
          %p554 = pneg %p318
        $region50: #{temporal_net_forward.1} parent=11 // pred_check_branch
          %556 = sbr.rel (%p554) target = $region52
        $region51: #{temporal_net_forward.1} parent=11 // pred_region
          _
        $region52: #{temporal_net_forward.1} parent=11 // pred_fallthru
          _
        // Predicated region
        $region53: #{temporal_net_forward.1} parent=11 // pred_check
          %p557 = pneg %p339
        $region54: #{temporal_net_forward.1} parent=11 // pred_check_branch
          %559 = sbr.rel (%p557) target = $region56
        $region55: #{temporal_net_forward.1} parent=11 // pred_region
          _
        $region56: #{temporal_net_forward.1} parent=11 // pred_fallthru
          _
        // Predicated region
        $region57: #{temporal_net_forward.1} parent=11 // pred_check
          %p560 = pneg %p360
        $region58: #{temporal_net_forward.1} parent=11 // pred_check_branch
          %562 = sbr.rel (%p560) target = $region60
        $region59: #{temporal_net_forward.1} parent=11 // pred_region
          _
        $region60: #{temporal_net_forward.1} parent=11 // pred_fallthru
          _
        // Predicated region
        $region61: #{temporal_net_forward.1} parent=11 // pred_check
          %p563 = pneg %p381
        $region62: #{temporal_net_forward.1} parent=11 // pred_check_branch
          %565 = sbr.rel (%p563) target = $region64
        $region63: #{temporal_net_forward.1} parent=11 // pred_region
          _
        $region64: #{temporal_net_forward.1} parent=11 // pred_fallthru
          _
        // Predicated region
        $region65: #{temporal_net_forward.1} parent=11 // pred_check
          %p566 = pneg %p402
        $region66: #{temporal_net_forward.1} parent=11 // pred_check_branch
          %568 = sbr.rel (%p566) target = $region68
        $region67: #{temporal_net_forward.1} parent=11 // pred_region
          _
        $region68: #{temporal_net_forward.1} parent=11 // pred_fallthru
          _
        // Predicated region
        $region69: #{temporal_net_forward.1} parent=11 // pred_check
          %p569 = pneg %p423
        $region70: #{temporal_net_forward.1} parent=11 // pred_check_branch
          %571 = sbr.rel (%p569) target = $region72
        $region71: #{temporal_net_forward.1} parent=11 // pred_region
          _
        $region72: #{temporal_net_forward.1} parent=11 // pred_fallthru
          _
        // Predicated region
        $region73: #{temporal_net_forward.1} parent=11 // pred_check
          %p572 = pneg %p444
        $region74: #{temporal_net_forward.1} parent=11 // pred_check_branch
          %574 = sbr.rel (%p572) target = $region76
        $region75: #{temporal_net_forward.1} parent=11 // pred_region
          _
        $region76: #{temporal_net_forward.1} parent=11 // pred_fallthru
          _
        // Predicated region
        $region77: #{temporal_net_forward.1} parent=11 // pred_check
          %p575 = pneg %p465
        $region78: #{temporal_net_forward.1} parent=11 // pred_check_branch
          %577 = sbr.rel (%p575) target = $region80
        $region79: #{temporal_net_forward.1} parent=11 // pred_region
          _
        $region80: #{temporal_net_forward.1} parent=11 // pred_fallthru
          _
        // Predicated region
        $region81: #{temporal_net_forward.1} parent=11 // pred_check
          %p578 = pneg %p486
        $region82: #{temporal_net_forward.1} parent=11 // pred_check_branch
          %580 = sbr.rel (%p578) target = $region84
        $region83: #{temporal_net_forward.1} parent=11 // pred_region
          _
        $region84: #{temporal_net_forward.1} parent=11 // pred_fallthru
          _
      $region12: #{temporal_net_forward.1} parent=5 // pred_fallthru
        _
      %p581 = scmp.lt.s32.totalorder %s30, 2
      // Predicated region
      $region85: #{temporal_net_forward.1} parent=5 // pred_check
        %p582 = pneg %p581
      $region86: #{temporal_net_forward.1} parent=5 // pred_check_branch
        %584 = sbr.rel (%p582) target = $region88
      $region87: #{temporal_net_forward.1} parent=5 // pred_region
        // Predicated region
        $region89: #{temporal_net_forward.1} parent=87 // pred_check
          %p585 = pneg %p50
        $region90: #{temporal_net_forward.1} parent=87 // pred_check_branch
          %587 = sbr.rel (%p585) target = $region92
        $region91: #{temporal_net_forward.1} parent=87 // pred_region
          %p588 = scmp.lt.s32.totalorder %s30, 1
          %s589 = scalar_select %p588, %s30, 1
          %s590 = smul.addr %s589, 2
          %s591 = smul.addr %s590, 8
          %s592 = scalar_lea.vmem %s0, %s591
        $region92: #{temporal_net_forward.1} parent=87 // pred_fallthru
          _
        // Predicated region
        $region93: #{temporal_net_forward.1} parent=87 // pred_check
          %p593 = pneg %p76
        $region94: #{temporal_net_forward.1} parent=87 // pred_check_branch
          %595 = sbr.rel (%p593) target = $region96
        $region95: #{temporal_net_forward.1} parent=87 // pred_region
          %p596 = scmp.lt.s32.totalorder %s30, 1
          %s597 = scalar_select %p596, %s30, 1
          %s598 = smul.addr %s597, 2
          %s599 = smul.addr %s598, 8
          %s600 = scalar_lea.vmem %s1, %s599
        $region96: #{temporal_net_forward.1} parent=87 // pred_fallthru
          _
        // Predicated region
        $region97: #{temporal_net_forward.1} parent=87 // pred_check
          %p601 = pneg %p102
        $region98: #{temporal_net_forward.1} parent=87 // pred_check_branch
          %603 = sbr.rel (%p601) target = $region100
        $region99: #{temporal_net_forward.1} parent=87 // pred_region
          %p604 = scmp.lt.s32.totalorder %s30, 1
          %s605 = scalar_select %p604, %s30, 1
          %s606 = smul.addr %s605, 2
          %s607 = smul.addr %s606, 8
          %s608 = scalar_lea.vmem %s2, %s607
        $region100: #{temporal_net_forward.1} parent=87 // pred_fallthru
          _
      $region88: #{temporal_net_forward.1} parent=5 // pred_fallthru
        _
      %p609 = scmp.le.s32.totalorder 1, %s30
      %p610 = scmp.lt.s32.totalorder %s30, 3
      %p611 = pnand %p609, %p610
      %p612 = pneg %p611
      // Predicated region
      $region101: #{temporal_net_forward.1} parent=5 // pred_check
        _
      $region102: #{temporal_net_forward.1} parent=5 // pred_check_branch
        %614 = sbr.rel (%p611) target = $region104
      $region103: #{temporal_net_forward.1} parent=5 // pred_region
        %s615 = ssub.s32 %s30, 1
        %p616 = scmp.lt.s32.totalorder %s35, 1
        %s617 = scalar_select %p616, %s35, 1
        %s618 = smul.addr %s617, 2
        %s619 = smul.addr %s618, 8
        %s620 = scalar_lea.vmem %s0, %s619
        %p621 = pneg %p56
        %p622 = pneg %p53
        %p623 = scmp.lt.s32.totalorder %s35, 1
        %s624 = scalar_select %p623, %s35, 1
        %s625 = smul.addr %s624, 2
        %s626 = smul.addr %s625, 8
        %s627 = scalar_lea.vmem %s1, %s626
        %p628 = pneg %p82
        %p629 = pneg %p79
        %p630 = scmp.lt.s32.totalorder %s35, 1
        %s631 = scalar_select %p630, %s35, 1
        %s632 = smul.addr %s631, 2
        %s633 = smul.addr %s632, 8
        %s634 = scalar_lea.vmem %s2, %s633
        %p635 = pneg %p108
        %p636 = pneg %p105
        %p637 = pneg %p129
        %p638 = pneg %p126
        %p639 = pneg %p150
        %p640 = pneg %p147
        %p641 = pneg %p171
        %p642 = pneg %p168
        %p643 = pneg %p192
        %p644 = pneg %p189
        %p645 = pneg %p213
        %p646 = pneg %p210
        %p647 = pneg %p234
        %p648 = pneg %p231
        %p649 = pneg %p255
        %p650 = pneg %p252
        %p651 = pneg %p276
        %p652 = pneg %p273
        %p653 = pneg %p297
        %p654 = pneg %p294
        %p655 = pneg %p318
        %p656 = pneg %p315
        %p657 = pneg %p339
        %p658 = pneg %p336
        %p659 = pneg %p360
        %p660 = pneg %p357
        %p661 = pneg %p381
        %p662 = pneg %p378
        %p663 = pneg %p402
        %p664 = pneg %p399
        %p665 = pneg %p423
        %p666 = pneg %p420
        %p667 = pneg %p444
        %p668 = pneg %p441
        %p669 = pneg %p465
        %p670 = pneg %p462
        %p671 = pneg %p486
        %p672 = pneg %p483
        %p673 = pneg %p512
        %p674 = pneg %p509
        %s675 = sand.u32 %s499, 1
        %s676 = scalar_lea.sflag [#allocation3], %s675
        %s677 = sand.u32 %s499, 1
        %s678 = scalar_lea.vmem [#allocation2], %s677
        %p679 = scmp.lt.s32.totalorder %s35, 1
        %s680 = scalar_select %p679, %s35, 1
        %s681 = smul.addr %s680, 2
        %s682 = smul.addr %s681, 8
        %s683 = scalar_lea.vmem %s0, %s682
        %p684 = scmp.lt.s32.totalorder %s35, 1
        %s685 = scalar_select %p684, %s35, 1
        %s686 = smul.addr %s685, 2
        %s687 = smul.addr %s686, 8
        %s688 = scalar_lea.vmem %s1, %s687
        %p689 = scmp.lt.s32.totalorder %s35, 1
        %s690 = scalar_select %p689, %s35, 1
        %s691 = smul.addr %s690, 2
        %s692 = smul.addr %s691, 8
        %s693 = scalar_lea.vmem %s2, %s692
        %v695 = vlaneseq
        %v696 = vshrl.u32 %v695, 7
        %v697 = vadd.s32 %v696, 8
        %v698 = vlaneseq
        %v699 = vand.u32 %v698, 127
        %v700 = vsub.s32 %v696, %v699
        %v701 = vsub.s32 %v697, %v699
        %vm702 = vcmp.eq.s32.totalorder %v700, 1
        %vm703 = vcmp.eq.s32.totalorder %v701, 1
        %v704 = vsel %vm702, 1, 0
        %v705 = vsel %vm703, 1, 0
        %v706 = vcvt.s32.f32 %v704
        %v707 = vcvt.s32.f32 %v705
        %v708 = vpack.c.bf16 %v707, %v706
        %vm709 = vcmp.eq.s32.totalorder %v700, 2
        %vm710 = vcmp.eq.s32.totalorder %v701, 2
        %v711 = vsel %vm709, 1, 0
        %v712 = vsel %vm710, 1, 0
        %v713 = vcvt.s32.f32 %v711
        %v714 = vcvt.s32.f32 %v712
        %v715 = vpack.c.bf16 %v714, %v713
        %v716 = vld [vmem:[%s683] sm:$0xff]
        %v717 = vld [vmem:[%s683 + $0x8] sm:$0x1]
        %v718 = vld [vmem:[%s3] sm:$0xff]
        %v719 = vld [vmem:[%s3 + $0x8] sm:$0xff]
        %v720 = vld [vmem:[%s3 + $0x10] sm:$0xff]
        %v721 = vld [vmem:[%s3 + $0x18] sm:$0x3f]
        %v722 = vld [vmem:[%s3 + $0x20] sm:$0xff]
        %v723 = vld [vmem:[%s3 + $0x28] sm:$0xff]
        %v724 = vld [vmem:[%s3 + $0x30] sm:$0xff]
        %v725 = vld [vmem:[%s3 + $0x38] sm:$0x3f]
        %v726 = vld [vmem:[%s4] sm:$0x1]
        %v727 = vpack.c.bf16 %v717, %v716
        %v728 = vpack.c.bf16 %v723, %v722
        %v729 = vpack.c.bf16 %v725, %v724
        %vm730 = vcmask 72704
        %v732 = vsel %vm730, %v708, 0
        %vm734 = vcmask 1043456
        %vm735 = vcmask 1044480
        %v736 = vsel %vm734, 4294967295, 65535
        %v737 = vsel %vm735, %v736, 0
        %v739 = vand.u32 %v727, %v737
        %741 = vmatpush.bf16.msra.mxu0 0
        %742 = vmatpush.bf16.msra.mxu0 0
        %743 = vmatpush.bf16.msra.mxu0 0
        %744 = vmatpush.bf16.msra.mxu0 0
        %745 = vmatpush.bf16.msra.mxu0 0
        %746 = vmatpush.bf16.msra.mxu0 0
        %747 = vmatpush.bf16.msra.mxu0 0
        %748 = vmatpush.bf16.msra.mxu0 %v739
        %749 = vmatmul.bf16.gmra.mxu0 %v732
        %v750 = vpop.f32.mrf.mxu0
        %v751 = vadd.f32 0.0, %v750
        %v752 = vpop.f32.mrf.mxu0
        %v753 = vadd.f32 0.0, %v752
        %754 = vdwg.mxu0
        %v755 = vpack.c.bf16 %v753, %v751
        %v756 = vpack.c.bf16 %v719, %v718
        %v757 = vpack.c.bf16 %v721, %v720
        %vm758 = vcmask 244736
        %v760 = vsel %vm758, %v755, 0
        %vm762 = vcmask 1046528
        %v764 = vsel %vm762, %v757, 0
        %766 = vmatpush.bf16.msra.mxu0 0
        %767 = vmatpush.bf16.msra.mxu0 0
        %768 = vmatpush.bf16.msra.mxu0 0
        %769 = vmatpush.bf16.msra.mxu0 0
        %770 = vmatpush.bf16.msra.mxu0 0
        %771 = vmatpush.bf16.msra.mxu0 0
        %772 = vmatpush.bf16.msra.mxu0 %v764
        %773 = vmatpush.bf16.msra.mxu0 %v756
        %774 = vmatmul.bf16.gmra.mxu0 %v760
        %v775 = vpop.f32.mrf.mxu0
        %v776 = vadd.f32 0.0, %v775
        %v777 = vpop.f32.mrf.mxu0
        %v778 = vadd.f32 0.0, %v777
        %779 = vdwg.mxu0
        %v780 = vsel %vm758, %v727, 0
        %v783 = vsel %vm762, %v729, 0
        %785 = vmatpush.bf16.msra.mxu0 0
        %786 = vmatpush.bf16.msra.mxu0 0
        %787 = vmatpush.bf16.msra.mxu0 0
        %788 = vmatpush.bf16.msra.mxu0 0
        %789 = vmatpush.bf16.msra.mxu0 0
        %790 = vmatpush.bf16.msra.mxu0 0
        %791 = vmatpush.bf16.msra.mxu0 %v783
        %792 = vmatpush.bf16.msra.mxu0 %v728
        %793 = vmatmul.bf16.gmra.mxu0 %v780
        %v794 = vpop.f32.mrf.mxu0
        %v795 = vadd.f32 %v776, %v794
        %v796 = vpop.f32.mrf.mxu0
        %v797 = vadd.f32 %v778, %v796
        %798 = vdwg.mxu0
        %v800 = vperm.slane %v726, 0
        %v802 = vadd.f32 %v795, %v800
        %v803 = vadd.f32 %v797, %v800
        %v804 = vmax.f32 %v802, 0.0
        %v805 = vmax.f32 %v803, 0.0
        %v806 = vld [vmem:[%s5] sm:$0xff]
        %v807 = vld [vmem:[%s5 + $0x8] sm:$0xff]
        %v808 = vld [vmem:[%s5 + $0x10] sm:$0xff]
        %v809 = vld [vmem:[%s5 + $0x18] sm:$0xff]
        %v810 = vld [vmem:[%s6] sm:$0x1]
        %v811 = vpack.c.bf16 %v805, %v804
        %v812 = vpack.c.bf16 %v809, %v808
        %v814 = vand.u32 %v811, %v737
        %816 = vmatpush.bf16.msra.mxu0 0
        %817 = vmatpush.bf16.msra.mxu0 0
        %818 = vmatpush.bf16.msra.mxu0 0
        %819 = vmatpush.bf16.msra.mxu0 0
        %820 = vmatpush.bf16.msra.mxu0 0
        %821 = vmatpush.bf16.msra.mxu0 0
        %822 = vmatpush.bf16.msra.mxu0 0
        %823 = vmatpush.bf16.msra.mxu0 %v814
        %824 = vmatmul.bf16.gmra.mxu0 %v732
        %v825 = vpop.f32.mrf.mxu0
        %v826 = vadd.f32 0.0, %v825
        %v827 = vpop.f32.mrf.mxu0
        %v828 = vadd.f32 0.0, %v827
        %829 = vdwg.mxu0
        %v830 = vpack.c.bf16 %v828, %v826
        %v831 = vpack.c.bf16 %v807, %v806
        %vm832 = vcmask 130048
        %v834 = vsel %vm832, %v830, 0
        %836 = vmatpush.bf16.msra.mxu0 0
        %837 = vmatpush.bf16.msra.mxu0 0
        %838 = vmatpush.bf16.msra.mxu0 0
        %839 = vmatpush.bf16.msra.mxu0 0
        %840 = vmatpush.bf16.msra.mxu0 0
        %841 = vmatpush.bf16.msra.mxu0 0
        %842 = vmatpush.bf16.msra.mxu0 0
        %843 = vmatpush.bf16.msra.mxu0 %v831
        %844 = vmatmul.bf16.gmra.mxu0 %v834
        %v845 = vpop.f32.mrf.mxu0
        %v846 = vadd.f32 0.0, %v845
        %v847 = vpop.f32.mrf.mxu0
        %v848 = vadd.f32 0.0, %v847
        %849 = vdwg.mxu0
        %v850 = vsel %vm832, %v811, 0
        %852 = vmatpush.bf16.msra.mxu0 0
        %853 = vmatpush.bf16.msra.mxu0 0
        %854 = vmatpush.bf16.msra.mxu0 0
        %855 = vmatpush.bf16.msra.mxu0 0
        %856 = vmatpush.bf16.msra.mxu0 0
        %857 = vmatpush.bf16.msra.mxu0 0
        %858 = vmatpush.bf16.msra.mxu0 0
        %859 = vmatpush.bf16.msra.mxu0 %v812
        %860 = vmatmul.bf16.gmra.mxu0 %v850
        %v861 = vpop.f32.mrf.mxu0
        %v862 = vadd.f32 %v846, %v861
        %v863 = vpop.f32.mrf.mxu0
        %v864 = vadd.f32 %v848, %v863
        %865 = vdwg.mxu0
        %v867 = vperm.slane %v810, 0
        %v869 = vadd.f32 %v862, %v867
        %v870 = vadd.f32 %v864, %v867
        %v871 = vmax.f32 %v869, 0.0
        %v872 = vmax.f32 %v870, 0.0
        %v873 = vld [vmem:[%s7] sm:$0xff]
        %v874 = vld [vmem:[%s7 + $0x8] sm:$0xff]
        %v875 = vld [vmem:[%s7 + $0x10] sm:$0xff]
        %v876 = vld [vmem:[%s7 + $0x18] sm:$0x3f]
        %v877 = vpack.c.bf16 %v874, %v873
        %v878 = vpack.c.bf16 %v876, %v875
        %v879 = vld [vmem:[%s8] sm:$0x1]
        %v881 = vperm.slane %v879, 0
        %v884 = vsel %vm762, %v878, 0
        %886 = vmatpush.bf16.msra.mxu0 0
        %887 = vmatpush.bf16.msra.mxu0 0
        %888 = vmatpush.bf16.msra.mxu0 0
        %889 = vmatpush.bf16.msra.mxu0 0
        %890 = vmatpush.bf16.msra.mxu0 0
        %891 = vmatpush.bf16.msra.mxu0 0
        %892 = vmatpush.bf16.msra.mxu0 %v884
        %893 = vmatpush.bf16.msra.mxu0 %v877
        %894 = vmatmul.bf16.gmra.mxu0 %v780
        %v895 = vpop.f32.mrf.mxu0
        %v896 = vadd.f32 %v881, %v895
        %v897 = vpop.f32.mrf.mxu0
        %v898 = vadd.f32 %v881, %v897
        %899 = vdwg.mxu0
        %v900 = vadd.f32 %v871, %v896
        %v901 = vadd.f32 %v872, %v898
        %v902 = vmax.f32 %v900, 0.0
        %v903 = vmax.f32 %v901, 0.0
        %v904 = vld [vmem:[%s9] sm:$0xff]
        %v905 = vld [vmem:[%s9 + $0x8] sm:$0xff]
        %v906 = vld [vmem:[%s9 + $0x10] sm:$0xff]
        %v907 = vld [vmem:[%s9 + $0x18] sm:$0xff]
        %v908 = vld [vmem:[%s10] sm:$0x1]
        %v909 = vpack.c.bf16 %v903, %v902
        %v910 = vpack.c.bf16 %v907, %v906
        %v912 = vsel %vm730, %v715, 0
        %v915 = vand.u32 %v909, %v737
        %917 = vmatpush.bf16.msra.mxu0 0
        %918 = vmatpush.bf16.msra.mxu0 0
        %919 = vmatpush.bf16.msra.mxu0 0
        %920 = vmatpush.bf16.msra.mxu0 0
        %921 = vmatpush.bf16.msra.mxu0 0
        %922 = vmatpush.bf16.msra.mxu0 0
        %923 = vmatpush.bf16.msra.mxu0 0
        %924 = vmatpush.bf16.msra.mxu0 %v915
        %925 = vmatmul.bf16.gmra.mxu0 %v912
        %v926 = vpop.f32.mrf.mxu0
        %v927 = vadd.f32 0.0, %v926
        %v928 = vpop.f32.mrf.mxu0
        %v929 = vadd.f32 0.0, %v928
        %930 = vdwg.mxu0
        %v931 = vpack.c.bf16 %v929, %v927
        %v932 = vpack.c.bf16 %v905, %v904
        %v934 = vsel %vm832, %v931, 0
        %936 = vmatpush.bf16.msra.mxu0 0
        %937 = vmatpush.bf16.msra.mxu0 0
        %938 = vmatpush.bf16.msra.mxu0 0
        %939 = vmatpush.bf16.msra.mxu0 0
        %940 = vmatpush.bf16.msra.mxu0 0
        %941 = vmatpush.bf16.msra.mxu0 0
        %942 = vmatpush.bf16.msra.mxu0 0
        %943 = vmatpush.bf16.msra.mxu0 %v932
        %944 = vmatmul.bf16.gmra.mxu0 %v934
        %v945 = vpop.f32.mrf.mxu0
        %v946 = vadd.f32 0.0, %v945
        %v947 = vpop.f32.mrf.mxu0
        %v948 = vadd.f32 0.0, %v947
        %949 = vdwg.mxu0
        %v950 = vsel %vm832, %v909, 0
        %952 = vmatpush.bf16.msra.mxu0 0
        %953 = vmatpush.bf16.msra.mxu0 0
        %954 = vmatpush.bf16.msra.mxu0 0
        %955 = vmatpush.bf16.msra.mxu0 0
        %956 = vmatpush.bf16.msra.mxu0 0
        %957 = vmatpush.bf16.msra.mxu0 0
        %958 = vmatpush.bf16.msra.mxu0 0
        %959 = vmatpush.bf16.msra.mxu0 %v910
        %960 = vmatmul.bf16.gmra.mxu0 %v950
        %v961 = vpop.f32.mrf.mxu0
        %v962 = vadd.f32 %v946, %v961
        %v963 = vpop.f32.mrf.mxu0
        %v964 = vadd.f32 %v948, %v963
        %965 = vdwg.mxu0
        %v967 = vperm.slane %v908, 0
        %v969 = vadd.f32 %v962, %v967
        %v970 = vadd.f32 %v964, %v967
        %v971 = vmax.f32 %v969, 0.0
        %v972 = vmax.f32 %v970, 0.0
        %v973 = vld [vmem:[%s11] sm:$0xff]
        %v974 = vld [vmem:[%s11 + $0x8] sm:$0xff]
        %v975 = vld [vmem:[%s11 + $0x10] sm:$0xff]
        %v976 = vld [vmem:[%s11 + $0x18] sm:$0xff]
        %v977 = vld [vmem:[%s11 + $0x20] sm:$0xff]
        %v978 = vld [vmem:[%s11 + $0x28] sm:$0xff]
        %v979 = vld [vmem:[%s11 + $0x30] sm:$0xff]
        %v980 = vld [vmem:[%s11 + $0x38] sm:$0xff]
        %v981 = vld [vmem:[%s12] sm:$0x1]
        %v982 = vpack.c.bf16 %v972, %v971
        %v983 = vpack.c.bf16 %v978, %v977
        %v984 = vpack.c.bf16 %v980, %v979
        %v986 = vand.u32 %v982, %v737
        %988 = vmatpush.bf16.msra.mxu0 0
        %989 = vmatpush.bf16.msra.mxu0 0
        %990 = vmatpush.bf16.msra.mxu0 0
        %991 = vmatpush.bf16.msra.mxu0 0
        %992 = vmatpush.bf16.msra.mxu0 0
        %993 = vmatpush.bf16.msra.mxu0 0
        %994 = vmatpush.bf16.msra.mxu0 0
        %995 = vmatpush.bf16.msra.mxu0 %v986
        %996 = vmatmul.bf16.gmra.mxu0 %v912
        %v997 = vpop.f32.mrf.mxu0
        %v998 = vadd.f32 0.0, %v997
        %v999 = vpop.f32.mrf.mxu0
        %v1000 = vadd.f32 0.0, %v999
        %1001 = vdwg.mxu0
        %v1002 = vpack.c.bf16 %v1000, %v998
        %v1003 = vpack.c.bf16 %v974, %v973
        %v1004 = vpack.c.bf16 %v976, %v975
        %vm1005 = vcmask 261120
        %v1007 = vsel %vm1005, %v1002, 0
        %1009 = vmatpush.bf16.msra.mxu0 0
        %1010 = vmatpush.bf16.msra.mxu0 0
        %1011 = vmatpush.bf16.msra.mxu0 0
        %1012 = vmatpush.bf16.msra.mxu0 0
        %1013 = vmatpush.bf16.msra.mxu0 0
        %1014 = vmatpush.bf16.msra.mxu0 0
        %1015 = vmatpush.bf16.msra.mxu0 %v1004
        %1016 = vmatpush.bf16.msra.mxu0 %v1003
        %1017 = vmatmul.bf16.gmra.mxu0 %v1007
        %v1018 = vpop.f32.mrf.mxu0
        %v1019 = vadd.f32 0.0, %v1018
        %v1020 = vpop.f32.mrf.mxu0
        %v1021 = vadd.f32 0.0, %v1020
        %1022 = vdwg.mxu0
        %v1023 = vsel %vm1005, %v982, 0
        %1025 = vmatpush.bf16.msra.mxu0 0
        %1026 = vmatpush.bf16.msra.mxu0 0
        %1027 = vmatpush.bf16.msra.mxu0 0
        %1028 = vmatpush.bf16.msra.mxu0 0
        %1029 = vmatpush.bf16.msra.mxu0 0
        %1030 = vmatpush.bf16.msra.mxu0 0
        %1031 = vmatpush.bf16.msra.mxu0 %v984
        %1032 = vmatpush.bf16.msra.mxu0 %v983
        %1033 = vmatmul.bf16.gmra.mxu0 %v1023
        %v1034 = vpop.f32.mrf.mxu0
        %v1035 = vadd.f32 %v1019, %v1034
        %v1036 = vpop.f32.mrf.mxu0
        %v1037 = vadd.f32 %v1021, %v1036
        %1038 = vdwg.mxu0
        %v1040 = vperm.slane %v981, 0
        %v1042 = vadd.f32 %v1035, %v1040
        %v1043 = vadd.f32 %v1037, %v1040
        %v1044 = vmax.f32 %v1042, 0.0
        %v1045 = vmax.f32 %v1043, 0.0
        %v1046 = vld [vmem:[%s13] sm:$0xff]
        %v1047 = vld [vmem:[%s13 + $0x8] sm:$0xff]
        %v1048 = vpack.c.bf16 %v1047, %v1046
        %v1049 = vld [vmem:[%s14] sm:$0x1]
        %v1051 = vperm.slane %v1049, 0
        %1053 = vmatpush.bf16.msra.mxu0 0
        %1054 = vmatpush.bf16.msra.mxu0 0
        %1055 = vmatpush.bf16.msra.mxu0 0
        %1056 = vmatpush.bf16.msra.mxu0 0
        %1057 = vmatpush.bf16.msra.mxu0 0
        %1058 = vmatpush.bf16.msra.mxu0 0
        %1059 = vmatpush.bf16.msra.mxu0 0
        %1060 = vmatpush.bf16.msra.mxu0 %v1048
        %1061 = vmatmul.bf16.gmra.mxu0 %v950
        %v1062 = vpop.f32.mrf.mxu0
        %v1063 = vadd.f32 %v1051, %v1062
        %v1064 = vpop.f32.mrf.mxu0
        %v1065 = vadd.f32 %v1051, %v1064
        %1066 = vdwg.mxu0
        %v1067 = vadd.f32 %v1044, %v1063
        %v1068 = vadd.f32 %v1045, %v1065
        %v1069 = vmax.f32 %v1067, 0.0
        %v1070 = vmax.f32 %v1068, 0.0
        %v1071 = vld [vmem:[%s688] sm:$0xff]
        %v1072 = vld [vmem:[%s688 + $0x8] sm:$0x1]
        %v1073 = vpack.c.bf16 %v1072, %v1071
        %v1075 = vand.u32 %v1073, %v737
        %1077 = vmatpush.bf16.msra.mxu0 0
        %1078 = vmatpush.bf16.msra.mxu0 0
        %1079 = vmatpush.bf16.msra.mxu0 0
        %1080 = vmatpush.bf16.msra.mxu0 0
        %1081 = vmatpush.bf16.msra.mxu0 0
        %1082 = vmatpush.bf16.msra.mxu0 0
        %1083 = vmatpush.bf16.msra.mxu0 0
        %1084 = vmatpush.bf16.msra.mxu0 %v1075
        %1085 = vmatmul.bf16.gmra.mxu0 %v732
        %v1086 = vpop.f32.mrf.mxu0
        %v1087 = vadd.f32 0.0, %v1086
        %v1088 = vpop.f32.mrf.mxu0
        %v1089 = vadd.f32 0.0, %v1088
        %1090 = vdwg.mxu0
        %v1091 = vpack.c.bf16 %v1089, %v1087
        %v1093 = vsel %vm758, %v1091, 0
        %1095 = vmatpush.bf16.msra.mxu0 0
        %1096 = vmatpush.bf16.msra.mxu0 0
        %1097 = vmatpush.bf16.msra.mxu0 0
        %1098 = vmatpush.bf16.msra.mxu0 0
        %1099 = vmatpush.bf16.msra.mxu0 0
        %1100 = vmatpush.bf16.msra.mxu0 0
        %1101 = vmatpush.bf16.msra.mxu0 %v764
        %1102 = vmatpush.bf16.msra.mxu0 %v756
        %1103 = vmatmul.bf16.gmra.mxu0 %v1093
        %v1104 = vpop.f32.mrf.mxu0
        %v1105 = vadd.f32 0.0, %v1104
        %v1106 = vpop.f32.mrf.mxu0
        %v1107 = vadd.f32 0.0, %v1106
        %1108 = vdwg.mxu0
        %v1109 = vsel %vm758, %v1073, 0
        %1111 = vmatpush.bf16.msra.mxu0 0
        %1112 = vmatpush.bf16.msra.mxu0 0
        %1113 = vmatpush.bf16.msra.mxu0 0
        %1114 = vmatpush.bf16.msra.mxu0 0
        %1115 = vmatpush.bf16.msra.mxu0 0
        %1116 = vmatpush.bf16.msra.mxu0 0
        %1117 = vmatpush.bf16.msra.mxu0 %v783
        %1118 = vmatpush.bf16.msra.mxu0 %v728
        %1119 = vmatmul.bf16.gmra.mxu0 %v1109
        %v1120 = vpop.f32.mrf.mxu0
        %v1121 = vadd.f32 %v1105, %v1120
        %v1122 = vpop.f32.mrf.mxu0
        %v1123 = vadd.f32 %v1107, %v1122
        %1124 = vdwg.mxu0
        %v1125 = vadd.f32 %v1121, %v800
        %v1126 = vadd.f32 %v1123, %v800
        %v1127 = vmax.f32 %v1125, 0.0
        %v1128 = vmax.f32 %v1126, 0.0
        %v1129 = vpack.c.bf16 %v1128, %v1127
        %v1131 = vand.u32 %v1129, %v737
        %1133 = vmatpush.bf16.msra.mxu0 0
        %1134 = vmatpush.bf16.msra.mxu0 0
        %1135 = vmatpush.bf16.msra.mxu0 0
        %1136 = vmatpush.bf16.msra.mxu0 0
        %1137 = vmatpush.bf16.msra.mxu0 0
        %1138 = vmatpush.bf16.msra.mxu0 0
        %1139 = vmatpush.bf16.msra.mxu0 0
        %1140 = vmatpush.bf16.msra.mxu0 %v1131
        %1141 = vmatmul.bf16.gmra.mxu0 %v732
        %v1142 = vpop.f32.mrf.mxu0
        %v1143 = vadd.f32 0.0, %v1142
        %v1144 = vpop.f32.mrf.mxu0
        %v1145 = vadd.f32 0.0, %v1144
        %1146 = vdwg.mxu0
        %v1147 = vpack.c.bf16 %v1145, %v1143
        %v1149 = vsel %vm832, %v1147, 0
        %1151 = vmatpush.bf16.msra.mxu0 0
        %1152 = vmatpush.bf16.msra.mxu0 0
        %1153 = vmatpush.bf16.msra.mxu0 0
        %1154 = vmatpush.bf16.msra.mxu0 0
        %1155 = vmatpush.bf16.msra.mxu0 0
        %1156 = vmatpush.bf16.msra.mxu0 0
        %1157 = vmatpush.bf16.msra.mxu0 0
        %1158 = vmatpush.bf16.msra.mxu0 %v831
        %1159 = vmatmul.bf16.gmra.mxu0 %v1149
        %v1160 = vpop.f32.mrf.mxu0
        %v1161 = vadd.f32 0.0, %v1160
        %v1162 = vpop.f32.mrf.mxu0
        %v1163 = vadd.f32 0.0, %v1162
        %1164 = vdwg.mxu0
        %v1165 = vsel %vm832, %v1129, 0
        %1167 = vmatpush.bf16.msra.mxu0 0
        %1168 = vmatpush.bf16.msra.mxu0 0
        %1169 = vmatpush.bf16.msra.mxu0 0
        %1170 = vmatpush.bf16.msra.mxu0 0
        %1171 = vmatpush.bf16.msra.mxu0 0
        %1172 = vmatpush.bf16.msra.mxu0 0
        %1173 = vmatpush.bf16.msra.mxu0 0
        %1174 = vmatpush.bf16.msra.mxu0 %v812
        %1175 = vmatmul.bf16.gmra.mxu0 %v1165
        %v1176 = vpop.f32.mrf.mxu0
        %v1177 = vadd.f32 %v1161, %v1176
        %v1178 = vpop.f32.mrf.mxu0
        %v1179 = vadd.f32 %v1163, %v1178
        %1180 = vdwg.mxu0
        %v1181 = vadd.f32 %v1177, %v867
        %v1182 = vadd.f32 %v1179, %v867
        %v1183 = vmax.f32 %v1181, 0.0
        %v1184 = vmax.f32 %v1182, 0.0
        %1185 = vmatpush.bf16.msra.mxu0 0
        %1186 = vmatpush.bf16.msra.mxu0 0
        %1187 = vmatpush.bf16.msra.mxu0 0
        %1188 = vmatpush.bf16.msra.mxu0 0
        %1189 = vmatpush.bf16.msra.mxu0 0
        %1190 = vmatpush.bf16.msra.mxu0 0
        %1191 = vmatpush.bf16.msra.mxu0 %v884
        %1192 = vmatpush.bf16.msra.mxu0 %v877
        %1193 = vmatmul.bf16.gmra.mxu0 %v1109
        %v1194 = vpop.f32.mrf.mxu0
        %v1195 = vadd.f32 %v881, %v1194
        %v1196 = vpop.f32.mrf.mxu0
        %v1197 = vadd.f32 %v881, %v1196
        %1198 = vdwg.mxu0
        %v1199 = vadd.f32 %v1183, %v1195
        %v1200 = vadd.f32 %v1184, %v1197
        %v1201 = vmax.f32 %v1199, 0.0
        %v1202 = vmax.f32 %v1200, 0.0
        %v1203 = vpack.c.bf16 %v1202, %v1201
        %v1205 = vand.u32 %v1203, %v737
        %1207 = vmatpush.bf16.msra.mxu0 0
        %1208 = vmatpush.bf16.msra.mxu0 0
        %1209 = vmatpush.bf16.msra.mxu0 0
        %1210 = vmatpush.bf16.msra.mxu0 0
        %1211 = vmatpush.bf16.msra.mxu0 0
        %1212 = vmatpush.bf16.msra.mxu0 0
        %1213 = vmatpush.bf16.msra.mxu0 0
        %1214 = vmatpush.bf16.msra.mxu0 %v1205
        %1215 = vmatmul.bf16.gmra.mxu0 %v912
        %v1216 = vpop.f32.mrf.mxu0
        %v1217 = vadd.f32 0.0, %v1216
        %v1218 = vpop.f32.mrf.mxu0
        %v1219 = vadd.f32 0.0, %v1218
        %1220 = vdwg.mxu0
        %v1221 = vpack.c.bf16 %v1219, %v1217
        %v1223 = vsel %vm832, %v1221, 0
        %1225 = vmatpush.bf16.msra.mxu0 0
        %1226 = vmatpush.bf16.msra.mxu0 0
        %1227 = vmatpush.bf16.msra.mxu0 0
        %1228 = vmatpush.bf16.msra.mxu0 0
        %1229 = vmatpush.bf16.msra.mxu0 0
        %1230 = vmatpush.bf16.msra.mxu0 0
        %1231 = vmatpush.bf16.msra.mxu0 0
        %1232 = vmatpush.bf16.msra.mxu0 %v932
        %1233 = vmatmul.bf16.gmra.mxu0 %v1223
        %v1234 = vpop.f32.mrf.mxu0
        %v1235 = vadd.f32 0.0, %v1234
        %v1236 = vpop.f32.mrf.mxu0
        %v1237 = vadd.f32 0.0, %v1236
        %1238 = vdwg.mxu0
        %v1239 = vsel %vm832, %v1203, 0
        %1241 = vmatpush.bf16.msra.mxu0 0
        %1242 = vmatpush.bf16.msra.mxu0 0
        %1243 = vmatpush.bf16.msra.mxu0 0
        %1244 = vmatpush.bf16.msra.mxu0 0
        %1245 = vmatpush.bf16.msra.mxu0 0
        %1246 = vmatpush.bf16.msra.mxu0 0
        %1247 = vmatpush.bf16.msra.mxu0 0
        %1248 = vmatpush.bf16.msra.mxu0 %v910
        %1249 = vmatmul.bf16.gmra.mxu0 %v1239
        %v1250 = vpop.f32.mrf.mxu0
        %v1251 = vadd.f32 %v1235, %v1250
        %v1252 = vpop.f32.mrf.mxu0
        %v1253 = vadd.f32 %v1237, %v1252
        %1254 = vdwg.mxu0
        %v1255 = vadd.f32 %v1251, %v967
        %v1256 = vadd.f32 %v1253, %v967
        %v1257 = vmax.f32 %v1255, 0.0
        %v1258 = vmax.f32 %v1256, 0.0
        %v1259 = vpack.c.bf16 %v1258, %v1257
        %v1261 = vand.u32 %v1259, %v737
        %1263 = vmatpush.bf16.msra.mxu0 0
        %1264 = vmatpush.bf16.msra.mxu0 0
        %1265 = vmatpush.bf16.msra.mxu0 0
        %1266 = vmatpush.bf16.msra.mxu0 0
        %1267 = vmatpush.bf16.msra.mxu0 0
        %1268 = vmatpush.bf16.msra.mxu0 0
        %1269 = vmatpush.bf16.msra.mxu0 0
        %1270 = vmatpush.bf16.msra.mxu0 %v1261
        %1271 = vmatmul.bf16.gmra.mxu0 %v912
        %v1272 = vpop.f32.mrf.mxu0
        %v1273 = vadd.f32 0.0, %v1272
        %v1274 = vpop.f32.mrf.mxu0
        %v1275 = vadd.f32 0.0, %v1274
        %1276 = vdwg.mxu0
        %v1277 = vpack.c.bf16 %v1275, %v1273
        %v1279 = vsel %vm1005, %v1277, 0
        %1281 = vmatpush.bf16.msra.mxu0 0
        %1282 = vmatpush.bf16.msra.mxu0 0
        %1283 = vmatpush.bf16.msra.mxu0 0
        %1284 = vmatpush.bf16.msra.mxu0 0
        %1285 = vmatpush.bf16.msra.mxu0 0
        %1286 = vmatpush.bf16.msra.mxu0 0
        %1287 = vmatpush.bf16.msra.mxu0 %v1004
        %1288 = vmatpush.bf16.msra.mxu0 %v1003
        %1289 = vmatmul.bf16.gmra.mxu0 %v1279
        %v1290 = vpop.f32.mrf.mxu0
        %v1291 = vadd.f32 0.0, %v1290
        %v1292 = vpop.f32.mrf.mxu0
        %v1293 = vadd.f32 0.0, %v1292
        %1294 = vdwg.mxu0
        %v1295 = vsel %vm1005, %v1259, 0
        %1297 = vmatpush.bf16.msra.mxu0 0
        %1298 = vmatpush.bf16.msra.mxu0 0
        %1299 = vmatpush.bf16.msra.mxu0 0
        %1300 = vmatpush.bf16.msra.mxu0 0
        %1301 = vmatpush.bf16.msra.mxu0 0
        %1302 = vmatpush.bf16.msra.mxu0 0
        %1303 = vmatpush.bf16.msra.mxu0 %v984
        %1304 = vmatpush.bf16.msra.mxu0 %v983
        %1305 = vmatmul.bf16.gmra.mxu0 %v1295
        %v1306 = vpop.f32.mrf.mxu0
        %v1307 = vadd.f32 %v1291, %v1306
        %v1308 = vpop.f32.mrf.mxu0
        %v1309 = vadd.f32 %v1293, %v1308
        %1310 = vdwg.mxu0
        %v1311 = vadd.f32 %v1307, %v1040
        %v1312 = vadd.f32 %v1309, %v1040
        %v1313 = vmax.f32 %v1311, 0.0
        %v1314 = vmax.f32 %v1312, 0.0
        %1315 = vmatpush.bf16.msra.mxu0 0
        %1316 = vmatpush.bf16.msra.mxu0 0
        %1317 = vmatpush.bf16.msra.mxu0 0
        %1318 = vmatpush.bf16.msra.mxu0 0
        %1319 = vmatpush.bf16.msra.mxu0 0
        %1320 = vmatpush.bf16.msra.mxu0 0
        %1321 = vmatpush.bf16.msra.mxu0 0
        %1322 = vmatpush.bf16.msra.mxu0 %v1048
        %1323 = vmatmul.bf16.gmra.mxu0 %v1239
        %v1324 = vpop.f32.mrf.mxu0
        %v1325 = vadd.f32 %v1051, %v1324
        %v1326 = vpop.f32.mrf.mxu0
        %v1327 = vadd.f32 %v1051, %v1326
        %1328 = vdwg.mxu0
        %v1329 = vadd.f32 %v1313, %v1325
        %v1330 = vadd.f32 %v1314, %v1327
        %v1331 = vmax.f32 %v1329, 0.0
        %v1332 = vmax.f32 %v1330, 0.0
        %v1333 = vld [vmem:[%s693] sm:$0xff]
        %v1334 = vld [vmem:[%s693 + $0x8] sm:$0x1]
        %v1335 = vpack.c.bf16 %v1334, %v1333
        %v1337 = vand.u32 %v1335, %v737
        %1339 = vmatpush.bf16.msra.mxu0 0
        %1340 = vmatpush.bf16.msra.mxu0 0
        %1341 = vmatpush.bf16.msra.mxu0 0
        %1342 = vmatpush.bf16.msra.mxu0 0
        %1343 = vmatpush.bf16.msra.mxu0 0
        %1344 = vmatpush.bf16.msra.mxu0 0
        %1345 = vmatpush.bf16.msra.mxu0 0
        %1346 = vmatpush.bf16.msra.mxu0 %v1337
        %1347 = vmatmul.bf16.gmra.mxu0 %v732
        %v1348 = vpop.f32.mrf.mxu0
        %v1349 = vadd.f32 0.0, %v1348
        %v1350 = vpop.f32.mrf.mxu0
        %v1351 = vadd.f32 0.0, %v1350
        %1352 = vdwg.mxu0
        %v1353 = vpack.c.bf16 %v1351, %v1349
        %v1355 = vsel %vm758, %v1353, 0
        %1357 = vmatpush.bf16.msra.mxu0 0
        %1358 = vmatpush.bf16.msra.mxu0 0
        %1359 = vmatpush.bf16.msra.mxu0 0
        %1360 = vmatpush.bf16.msra.mxu0 0
        %1361 = vmatpush.bf16.msra.mxu0 0
        %1362 = vmatpush.bf16.msra.mxu0 0
        %1363 = vmatpush.bf16.msra.mxu0 %v764
        %1364 = vmatpush.bf16.msra.mxu0 %v756
        %1365 = vmatmul.bf16.gmra.mxu0 %v1355
        %v1366 = vpop.f32.mrf.mxu0
        %v1367 = vadd.f32 0.0, %v1366
        %v1368 = vpop.f32.mrf.mxu0
        %v1369 = vadd.f32 0.0, %v1368
        %1370 = vdwg.mxu0
        %v1371 = vsel %vm758, %v1335, 0
        %1373 = vmatpush.bf16.msra.mxu0 0
        %1374 = vmatpush.bf16.msra.mxu0 0
        %1375 = vmatpush.bf16.msra.mxu0 0
        %1376 = vmatpush.bf16.msra.mxu0 0
        %1377 = vmatpush.bf16.msra.mxu0 0
        %1378 = vmatpush.bf16.msra.mxu0 0
        %1379 = vmatpush.bf16.msra.mxu0 %v783
        %1380 = vmatpush.bf16.msra.mxu0 %v728
        %1381 = vmatmul.bf16.gmra.mxu0 %v1371
        %v1382 = vpop.f32.mrf.mxu0
        %v1383 = vadd.f32 %v1367, %v1382
        %v1384 = vpop.f32.mrf.mxu0
        %v1385 = vadd.f32 %v1369, %v1384
        %1386 = vdwg.mxu0
        %v1387 = vadd.f32 %v1383, %v800
        %v1388 = vadd.f32 %v1385, %v800
        %v1389 = vmax.f32 %v1387, 0.0
        %v1390 = vmax.f32 %v1388, 0.0
        %v1391 = vpack.c.bf16 %v1390, %v1389
        %v1393 = vand.u32 %v1391, %v737
        %1395 = vmatpush.bf16.msra.mxu0 0
        %1396 = vmatpush.bf16.msra.mxu0 0
        %1397 = vmatpush.bf16.msra.mxu0 0
        %1398 = vmatpush.bf16.msra.mxu0 0
        %1399 = vmatpush.bf16.msra.mxu0 0
        %1400 = vmatpush.bf16.msra.mxu0 0
        %1401 = vmatpush.bf16.msra.mxu0 0
        %1402 = vmatpush.bf16.msra.mxu0 %v1393
        %1403 = vmatmul.bf16.gmra.mxu0 %v732
        %v1404 = vpop.f32.mrf.mxu0
        %v1405 = vadd.f32 0.0, %v1404
        %v1406 = vpop.f32.mrf.mxu0
        %v1407 = vadd.f32 0.0, %v1406
        %1408 = vdwg.mxu0
        %v1409 = vpack.c.bf16 %v1407, %v1405
        %v1411 = vsel %vm832, %v1409, 0
        %1413 = vmatpush.bf16.msra.mxu0 0
        %1414 = vmatpush.bf16.msra.mxu0 0
        %1415 = vmatpush.bf16.msra.mxu0 0
        %1416 = vmatpush.bf16.msra.mxu0 0
        %1417 = vmatpush.bf16.msra.mxu0 0
        %1418 = vmatpush.bf16.msra.mxu0 0
        %1419 = vmatpush.bf16.msra.mxu0 0
        %1420 = vmatpush.bf16.msra.mxu0 %v831
        %1421 = vmatmul.bf16.gmra.mxu0 %v1411
        %v1422 = vpop.f32.mrf.mxu0
        %v1423 = vadd.f32 0.0, %v1422
        %v1424 = vpop.f32.mrf.mxu0
        %v1425 = vadd.f32 0.0, %v1424
        %1426 = vdwg.mxu0
        %v1427 = vsel %vm832, %v1391, 0
        %1429 = vmatpush.bf16.msra.mxu0 0
        %1430 = vmatpush.bf16.msra.mxu0 0
        %1431 = vmatpush.bf16.msra.mxu0 0
        %1432 = vmatpush.bf16.msra.mxu0 0
        %1433 = vmatpush.bf16.msra.mxu0 0
        %1434 = vmatpush.bf16.msra.mxu0 0
        %1435 = vmatpush.bf16.msra.mxu0 0
        %1436 = vmatpush.bf16.msra.mxu0 %v812
        %1437 = vmatmul.bf16.gmra.mxu0 %v1427
        %v1438 = vpop.f32.mrf.mxu0
        %v1439 = vadd.f32 %v1423, %v1438
        %v1440 = vpop.f32.mrf.mxu0
        %v1441 = vadd.f32 %v1425, %v1440
        %1442 = vdwg.mxu0
        %v1443 = vadd.f32 %v1439, %v867
        %v1444 = vadd.f32 %v1441, %v867
        %v1445 = vmax.f32 %v1443, 0.0
        %v1446 = vmax.f32 %v1444, 0.0
        %1447 = vmatpush.bf16.msra.mxu0 0
        %1448 = vmatpush.bf16.msra.mxu0 0
        %1449 = vmatpush.bf16.msra.mxu0 0
        %1450 = vmatpush.bf16.msra.mxu0 0
        %1451 = vmatpush.bf16.msra.mxu0 0
        %1452 = vmatpush.bf16.msra.mxu0 0
        %1453 = vmatpush.bf16.msra.mxu0 %v884
        %1454 = vmatpush.bf16.msra.mxu0 %v877
        %1455 = vmatmul.bf16.gmra.mxu0 %v1371
        %v1456 = vpop.f32.mrf.mxu0
        %v1457 = vadd.f32 %v881, %v1456
        %v1458 = vpop.f32.mrf.mxu0
        %v1459 = vadd.f32 %v881, %v1458
        %1460 = vdwg.mxu0
        %v1461 = vadd.f32 %v1445, %v1457
        %v1462 = vadd.f32 %v1446, %v1459
        %v1463 = vmax.f32 %v1461, 0.0
        %v1464 = vmax.f32 %v1462, 0.0
        %v1465 = vpack.c.bf16 %v1464, %v1463
        %v1467 = vand.u32 %v1465, %v737
        %1469 = vmatpush.bf16.msra.mxu0 0
        %1470 = vmatpush.bf16.msra.mxu0 0
        %1471 = vmatpush.bf16.msra.mxu0 0
        %1472 = vmatpush.bf16.msra.mxu0 0
        %1473 = vmatpush.bf16.msra.mxu0 0
        %1474 = vmatpush.bf16.msra.mxu0 0
        %1475 = vmatpush.bf16.msra.mxu0 0
        %1476 = vmatpush.bf16.msra.mxu0 %v1467
        %1477 = vmatmul.bf16.gmra.mxu0 %v912
        %v1478 = vpop.f32.mrf.mxu0
        %v1479 = vadd.f32 0.0, %v1478
        %v1480 = vpop.f32.mrf.mxu0
        %v1481 = vadd.f32 0.0, %v1480
        %1482 = vdwg.mxu0
        %v1483 = vpack.c.bf16 %v1481, %v1479
        %v1485 = vsel %vm832, %v1483, 0
        %1487 = vmatpush.bf16.msra.mxu0 0
        %1488 = vmatpush.bf16.msra.mxu0 0
        %1489 = vmatpush.bf16.msra.mxu0 0
        %1490 = vmatpush.bf16.msra.mxu0 0
        %1491 = vmatpush.bf16.msra.mxu0 0
        %1492 = vmatpush.bf16.msra.mxu0 0
        %1493 = vmatpush.bf16.msra.mxu0 0
        %1494 = vmatpush.bf16.msra.mxu0 %v932
        %1495 = vmatmul.bf16.gmra.mxu0 %v1485
        %v1496 = vpop.f32.mrf.mxu0
        %v1497 = vadd.f32 0.0, %v1496
        %v1498 = vpop.f32.mrf.mxu0
        %v1499 = vadd.f32 0.0, %v1498
        %1500 = vdwg.mxu0
        %v1501 = vsel %vm832, %v1465, 0
        %1503 = vmatpush.bf16.msra.mxu0 0
        %1504 = vmatpush.bf16.msra.mxu0 0
        %1505 = vmatpush.bf16.msra.mxu0 0
        %1506 = vmatpush.bf16.msra.mxu0 0
        %1507 = vmatpush.bf16.msra.mxu0 0
        %1508 = vmatpush.bf16.msra.mxu0 0
        %1509 = vmatpush.bf16.msra.mxu0 0
        %1510 = vmatpush.bf16.msra.mxu0 %v910
        %1511 = vmatmul.bf16.gmra.mxu0 %v1501
        %v1512 = vpop.f32.mrf.mxu0
        %v1513 = vadd.f32 %v1497, %v1512
        %v1514 = vpop.f32.mrf.mxu0
        %v1515 = vadd.f32 %v1499, %v1514
        %1516 = vdwg.mxu0
        %v1517 = vadd.f32 %v1513, %v967
        %v1518 = vadd.f32 %v1515, %v967
        %v1519 = vmax.f32 %v1517, 0.0
        %v1520 = vmax.f32 %v1518, 0.0
        %v1521 = vpack.c.bf16 %v1520, %v1519
        %v1523 = vand.u32 %v1521, %v737
        %1525 = vmatpush.bf16.msra.mxu0 0
        %1526 = vmatpush.bf16.msra.mxu0 0
        %1527 = vmatpush.bf16.msra.mxu0 0
        %1528 = vmatpush.bf16.msra.mxu0 0
        %1529 = vmatpush.bf16.msra.mxu0 0
        %1530 = vmatpush.bf16.msra.mxu0 0
        %1531 = vmatpush.bf16.msra.mxu0 0
        %1532 = vmatpush.bf16.msra.mxu0 %v1523
        %1533 = vmatmul.bf16.gmra.mxu0 %v912
        %v1534 = vpop.f32.mrf.mxu0
        %v1535 = vadd.f32 0.0, %v1534
        %v1536 = vpop.f32.mrf.mxu0
        %v1537 = vadd.f32 0.0, %v1536
        %1538 = vdwg.mxu0
        %v1539 = vpack.c.bf16 %v1537, %v1535
        %v1541 = vsel %vm1005, %v1539, 0
        %1543 = vmatpush.bf16.msra.mxu0 0
        %1544 = vmatpush.bf16.msra.mxu0 0
        %1545 = vmatpush.bf16.msra.mxu0 0
        %1546 = vmatpush.bf16.msra.mxu0 0
        %1547 = vmatpush.bf16.msra.mxu0 0
        %1548 = vmatpush.bf16.msra.mxu0 0
        %1549 = vmatpush.bf16.msra.mxu0 %v1004
        %1550 = vmatpush.bf16.msra.mxu0 %v1003
        %1551 = vmatmul.bf16.gmra.mxu0 %v1541
        %v1552 = vpop.f32.mrf.mxu0
        %v1553 = vadd.f32 0.0, %v1552
        %v1554 = vpop.f32.mrf.mxu0
        %v1555 = vadd.f32 0.0, %v1554
        %1556 = vdwg.mxu0
        %v1557 = vsel %vm1005, %v1521, 0
        %1559 = vmatpush.bf16.msra.mxu0 0
        %1560 = vmatpush.bf16.msra.mxu0 0
        %1561 = vmatpush.bf16.msra.mxu0 0
        %1562 = vmatpush.bf16.msra.mxu0 0
        %1563 = vmatpush.bf16.msra.mxu0 0
        %1564 = vmatpush.bf16.msra.mxu0 0
        %1565 = vmatpush.bf16.msra.mxu0 %v984
        %1566 = vmatpush.bf16.msra.mxu0 %v983
        %1567 = vmatmul.bf16.gmra.mxu0 %v1557
        %v1568 = vpop.f32.mrf.mxu0
        %v1569 = vadd.f32 %v1553, %v1568
        %v1570 = vpop.f32.mrf.mxu0
        %v1571 = vadd.f32 %v1555, %v1570
        %1572 = vdwg.mxu0
        %v1573 = vadd.f32 %v1569, %v1040
        %v1574 = vadd.f32 %v1571, %v1040
        %v1575 = vmax.f32 %v1573, 0.0
        %v1576 = vmax.f32 %v1574, 0.0
        %1577 = vmatpush.bf16.msra.mxu0 0
        %1578 = vmatpush.bf16.msra.mxu0 0
        %1579 = vmatpush.bf16.msra.mxu0 0
        %1580 = vmatpush.bf16.msra.mxu0 0
        %1581 = vmatpush.bf16.msra.mxu0 0
        %1582 = vmatpush.bf16.msra.mxu0 0
        %1583 = vmatpush.bf16.msra.mxu0 0
        %1584 = vmatpush.bf16.msra.mxu0 %v1048
        %1585 = vmatmul.bf16.gmra.mxu0 %v1501
        %v1586 = vpop.f32.mrf.mxu0
        %v1587 = vadd.f32 %v1051, %v1586
        %v1588 = vpop.f32.mrf.mxu0
        %v1589 = vadd.f32 %v1051, %v1588
        %1590 = vdwg.mxu0
        %v1591 = vadd.f32 %v1575, %v1587
        %v1592 = vadd.f32 %v1576, %v1589
        %v1593 = vmax.f32 %v1591, 0.0
        %v1594 = vmax.f32 %v1592, 0.0
        %v1595 = vld [vmem:[%s15] sm:$0xff]
        %v1596 = vld [vmem:[%s15 + $0x8] sm:$0xff]
        %v1597 = vld [vmem:[%s15 + $0x10] sm:$0xff]
        %v1598 = vld [vmem:[%s15 + $0x18] sm:$0xff]
        %v1599 = vpack.c.bf16 %v1070, %v1069
        %v1600 = vpack.c.bf16 %v1596, %v1595
        %v1601 = vpack.c.bf16 %v1598, %v1597
        %v1602 = vld [vmem:[%s16] sm:$0x1]
        %v1604 = vperm.slane %v1602, 0
        %v1607 = vshrl.u32 %v1599, 16
        %v1609 = vrot.slane %v1607, 2
        %v1610 = vshll.u32 %v1599, 16
        %v1612 = vrot.slane %v1610, 3
        %v1613 = vor.u32 %v1609, %v1612
        %v1615 = vsel %vm1005, %v1613, 0
        %1617 = vmatpush.bf16.msra.mxu0 0
        %1618 = vmatpush.bf16.msra.mxu0 0
        %1619 = vmatpush.bf16.msra.mxu0 0
        %1620 = vmatpush.bf16.msra.mxu0 0
        %1621 = vmatpush.bf16.msra.mxu0 0
        %1622 = vmatpush.bf16.msra.mxu0 0
        %1623 = vmatpush.bf16.msra.mxu0 %v1601
        %1624 = vmatpush.bf16.msra.mxu0 %v1600
        %1625 = vmatmul.bf16.gmra.mxu0 %v1615
        %v1626 = vpop.f32.mrf.mxu0
        %v1627 = vadd.f32 %v1604, %v1626
        %v1628 = vpop.f32.mrf.mxu0
        %1629 = vdwg.mxu0
        %s1630 = scalar_lea.vmem %s15, 32
        %v1631 = vld [vmem:[%s1630] sm:$0xff]
        %v1632 = vld [vmem:[%s1630 + $0x8] sm:$0xff]
        %v1633 = vld [vmem:[%s1630 + $0x10] sm:$0xff]
        %v1634 = vld [vmem:[%s1630 + $0x18] sm:$0xff]
        %v1635 = vpack.c.bf16 %v1332, %v1331
        %v1636 = vpack.c.bf16 %v1632, %v1631
        %v1637 = vpack.c.bf16 %v1634, %v1633
        %s1638 = scalar_lea.vmem %s16, 1
        %v1639 = vld [vmem:[%s1638] sm:$0x1]
        %v1641 = vperm.slane %v1639, 0
        %v1644 = vshrl.u32 %v1635, 16
        %v1646 = vrot.slane %v1644, 2
        %v1647 = vshll.u32 %v1635, 16
        %v1649 = vrot.slane %v1647, 3
        %v1650 = vor.u32 %v1646, %v1649
        %v1652 = vsel %vm1005, %v1650, 0
        %1654 = vmatpush.bf16.msra.mxu0 0
        %1655 = vmatpush.bf16.msra.mxu0 0
        %1656 = vmatpush.bf16.msra.mxu0 0
        %1657 = vmatpush.bf16.msra.mxu0 0
        %1658 = vmatpush.bf16.msra.mxu0 0
        %1659 = vmatpush.bf16.msra.mxu0 0
        %1660 = vmatpush.bf16.msra.mxu0 %v1637
        %1661 = vmatpush.bf16.msra.mxu0 %v1636
        %1662 = vmatmul.bf16.gmra.mxu0 %v1652
        %v1663 = vpop.f32.mrf.mxu0
        %v1664 = vadd.f32 %v1641, %v1663
        %v1665 = vpop.f32.mrf.mxu0
        %1666 = vdwg.mxu0
        %s1667 = scalar_lea.vmem %s15, 64
        %v1668 = vld [vmem:[%s1667] sm:$0xff]
        %v1669 = vld [vmem:[%s1667 + $0x8] sm:$0xff]
        %v1670 = vld [vmem:[%s1667 + $0x10] sm:$0xff]
        %v1671 = vld [vmem:[%s1667 + $0x18] sm:$0xff]
        %v1672 = vpack.c.bf16 %v1594, %v1593
        %v1673 = vpack.c.bf16 %v1669, %v1668
        %v1674 = vpack.c.bf16 %v1671, %v1670
        %s1675 = scalar_lea.vmem %s16, 2
        %v1676 = vld [vmem:[%s1675] sm:$0x1]
        %v1678 = vperm.slane %v1676, 0
        %v1681 = vshrl.u32 %v1672, 16
        %v1683 = vrot.slane %v1681, 2
        %v1684 = vshll.u32 %v1672, 16
        %v1686 = vrot.slane %v1684, 3
        %v1687 = vor.u32 %v1683, %v1686
        %v1689 = vsel %vm1005, %v1687, 0
        %1691 = vmatpush.bf16.msra.mxu0 0
        %1692 = vmatpush.bf16.msra.mxu0 0
        %1693 = vmatpush.bf16.msra.mxu0 0
        %1694 = vmatpush.bf16.msra.mxu0 0
        %1695 = vmatpush.bf16.msra.mxu0 0
        %1696 = vmatpush.bf16.msra.mxu0 0
        %1697 = vmatpush.bf16.msra.mxu0 %v1674
        %1698 = vmatpush.bf16.msra.mxu0 %v1673
        %1699 = vmatmul.bf16.gmra.mxu0 %v1689
        %v1700 = vpop.f32.mrf.mxu0
        %v1701 = vadd.f32 %v1678, %v1700
        %v1702 = vpop.f32.mrf.mxu0
        %1703 = vdwg.mxu0
        %v1704 = vpack.c.bf16 %v1627, %v1627
        %v1705 = vpack.c.bf16 %v1664, %v1664
        %v1707 = vsel %vm1005, %v1704, 0
        %v1710 = vsel %vm1005, %v1705, 0
        %1712 = vmatpush.bf16.xpose.msra.mxu0 0
        %1713 = vmatpush.bf16.xpose.msra.mxu0 0
        %1714 = vmatpush.bf16.xpose.msra.mxu0 0
        %1715 = vmatpush.bf16.xpose.msra.mxu0 0
        %1716 = vmatpush.bf16.xpose.msra.mxu0 0
        %1717 = vmatpush.bf16.xpose.msra.mxu0 0
        %1718 = vmatpush.bf16.xpose.msra.mxu0 0
        %1719 = vmatpush.bf16.xpose.msra.mxu0 %v1710
        %1720 = vmatmul.bf16.gmra.mxu0 %v1707
        %v1721 = vpop.f32.mrf.mxu0
        %v1722 = vadd.f32 0.0, %v1721
        %v1723 = vpop.f32.mrf.mxu0
        %1724 = vdwg.mxu0
        %v1725 = vmul.f32 %v1722, 0.17677669
        %vm1726 = vcmask 27648
        %v1727 = vsel %vm1726, %v1725, -inf
        %1728 = vmax.xlane.f32.xlu0 %v1727
        %v1729 = vpop.xlane.xlu0 %1728
        %v1730 = vsub.f32 %v1725, %v1729
        %v1731 = vmul.f32 %v1730, 1.442695
        %v1732 = vpow.pop %v1731
        %v1733 = vsel %vm1726, %v1732, 0.0
        %1734 = vadd.xlane.f32.xlu0 %v1733
        %v1735 = vpop.xlane.xlu0 %1734
        %v1736 = vrcp.pop %v1735
        %v1737 = vmul.f32 %v1735, %v1736
        %v1738 = vsub.f32 1.0, %v1737
        %v1739 = vmul.f32 %v1736, %v1738
        %v1740 = vadd.f32 %v1736, %v1739
        %vm1741 = vweird.f32 %v1735
        %vm1742 = vweird.f32 %v1736
        %vm1743 = vmor %vm1741, %vm1742
        %v1744 = vsel %vm1743, %v1736, %v1740
        %v1745 = vand.u32 2147483647, %v1735
        %vm1746 = vcmp.eq.f32.partialorder %v1745, 8.507059e+37
        %v1747 = vand.u32 %v1735, 2147483648
        %v1748 = vor.u32 1.1754944e-38, %v1747
        %v1749 = vsel %vm1746, %v1748, %v1744
        %v1750 = vmul.f32 %v1732, %v1749
        %v1751 = vpack.c.bf16 %v1750, %v1750
        %v1752 = vpack.c.bf16 %v1701, %v1701
        %vm1753 = vcmask 31744
        %v1755 = vsel %vm1753, %v1751, 0
        %vm1757 = vcmask 1041408
        %v1759 = vsel %vm1757, %v1752, 0
        %1761 = vmatpush.bf16.msra.mxu0 0
        %1762 = vmatpush.bf16.msra.mxu0 0
        %1763 = vmatpush.bf16.msra.mxu0 0
        %1764 = vmatpush.bf16.msra.mxu0 0
        %1765 = vmatpush.bf16.msra.mxu0 0
        %1766 = vmatpush.bf16.msra.mxu0 0
        %1767 = vmatpush.bf16.msra.mxu0 0
        %1768 = vmatpush.bf16.msra.mxu0 %v1759
        %1769 = vmatmul.bf16.gmra.mxu0 %v1755
        %v1770 = vpop.f32.mrf.mxu0
        %v1771 = vadd.f32 0.0, %v1770
        %v1772 = vpop.f32.mrf.mxu0
        %1773 = vdwg.mxu0
        %s1774 = scalar_lea.vmem %s15, 96
        %v1775 = vld [vmem:[%s1774] sm:$0xff]
        %v1776 = vld [vmem:[%s1774 + $0x8] sm:$0xff]
        %v1777 = vld [vmem:[%s1774 + $0x10] sm:$0xff]
        %v1778 = vld [vmem:[%s1774 + $0x18] sm:$0xff]
        %v1779 = vpack.c.bf16 %v1771, %v1771
        %v1780 = vpack.c.bf16 %v1776, %v1775
        %v1781 = vpack.c.bf16 %v1778, %v1777
        %s1782 = scalar_lea.vmem %s16, 3
        %v1783 = vld [vmem:[%s1782] sm:$0x1]
        %v1785 = vperm.slane %v1783, 0
        %v1788 = vsel %vm1005, %v1779, 0
        %1790 = vmatpush.bf16.msra.mxu0 0
        %1791 = vmatpush.bf16.msra.mxu0 0
        %1792 = vmatpush.bf16.msra.mxu0 0
        %1793 = vmatpush.bf16.msra.mxu0 0
        %1794 = vmatpush.bf16.msra.mxu0 0
        %1795 = vmatpush.bf16.msra.mxu0 0
        %1796 = vmatpush.bf16.msra.mxu0 %v1781
        %1797 = vmatpush.bf16.msra.mxu0 %v1780
        %1798 = vmatmul.bf16.gmra.mxu0 %v1788
        %v1799 = vpop.f32.mrf.mxu0
        %v1800 = vadd.f32 %v1785, %v1799
        %v1801 = vpop.f32.mrf.mxu0
        %1802 = vdwg.mxu0
        %s1803 = scalar_lea.vmem %s15, 128
        %v1804 = vld [vmem:[%s1803] sm:$0xff]
        %v1805 = vld [vmem:[%s1803 + $0x8] sm:$0xff]
        %v1806 = vld [vmem:[%s1803 + $0x10] sm:$0xff]
        %v1807 = vld [vmem:[%s1803 + $0x18] sm:$0xff]
        %v1808 = vpack.c.bf16 %v1805, %v1804
        %v1809 = vpack.c.bf16 %v1807, %v1806
        %s1810 = scalar_lea.vmem %s16, 4
        %v1811 = vld [vmem:[%s1810] sm:$0x1]
        %v1813 = vperm.slane %v1811, 0
        %1815 = vmatpush.bf16.msra.mxu0 0
        %1816 = vmatpush.bf16.msra.mxu0 0
        %1817 = vmatpush.bf16.msra.mxu0 0
        %1818 = vmatpush.bf16.msra.mxu0 0
        %1819 = vmatpush.bf16.msra.mxu0 0
        %1820 = vmatpush.bf16.msra.mxu0 0
        %1821 = vmatpush.bf16.msra.mxu0 %v1809
        %1822 = vmatpush.bf16.msra.mxu0 %v1808
        %1823 = vmatmul.bf16.gmra.mxu0 %v1652
        %v1824 = vpop.f32.mrf.mxu0
        %v1825 = vadd.f32 %v1813, %v1824
        %v1826 = vpop.f32.mrf.mxu0
        %1827 = vdwg.mxu0
        %s1828 = scalar_lea.vmem %s15, 160
        %v1829 = vld [vmem:[%s1828] sm:$0xff]
        %v1830 = vld [vmem:[%s1828 + $0x8] sm:$0xff]
        %v1831 = vld [vmem:[%s1828 + $0x10] sm:$0xff]
        %v1832 = vld [vmem:[%s1828 + $0x18] sm:$0xff]
        %v1833 = vpack.c.bf16 %v1830, %v1829
        %v1834 = vpack.c.bf16 %v1832, %v1831
        %s1835 = scalar_lea.vmem %s16, 5
        %v1836 = vld [vmem:[%s1835] sm:$0x1]
        %v1838 = vperm.slane %v1836, 0
        %1840 = vmatpush.bf16.msra.mxu0 0
        %1841 = vmatpush.bf16.msra.mxu0 0
        %1842 = vmatpush.bf16.msra.mxu0 0
        %1843 = vmatpush.bf16.msra.mxu0 0
        %1844 = vmatpush.bf16.msra.mxu0 0
        %1845 = vmatpush.bf16.msra.mxu0 0
        %1846 = vmatpush.bf16.msra.mxu0 %v1834
        %1847 = vmatpush.bf16.msra.mxu0 %v1833
        %1848 = vmatmul.bf16.gmra.mxu0 %v1689
        %v1849 = vpop.f32.mrf.mxu0
        %v1850 = vadd.f32 %v1838, %v1849
        %v1851 = vpop.f32.mrf.mxu0
        %1852 = vdwg.mxu0
        %s1853 = scalar_lea.vmem %s15, 192
        %v1854 = vld [vmem:[%s1853] sm:$0xff]
        %v1855 = vld [vmem:[%s1853 + $0x8] sm:$0xff]
        %v1856 = vld [vmem:[%s1853 + $0x10] sm:$0xff]
        %v1857 = vld [vmem:[%s1853 + $0x18] sm:$0xff]
        %v1858 = vpack.c.bf16 %v1855, %v1854
        %v1859 = vpack.c.bf16 %v1857, %v1856
        %s1860 = scalar_lea.vmem %s16, 6
        %v1861 = vld [vmem:[%s1860] sm:$0x1]
        %v1863 = vperm.slane %v1861, 0
        %1865 = vmatpush.bf16.msra.mxu0 0
        %1866 = vmatpush.bf16.msra.mxu0 0
        %1867 = vmatpush.bf16.msra.mxu0 0
        %1868 = vmatpush.bf16.msra.mxu0 0
        %1869 = vmatpush.bf16.msra.mxu0 0
        %1870 = vmatpush.bf16.msra.mxu0 0
        %1871 = vmatpush.bf16.msra.mxu0 %v1859
        %1872 = vmatpush.bf16.msra.mxu0 %v1858
        %1873 = vmatmul.bf16.gmra.mxu0 %v1615
        %v1874 = vpop.f32.mrf.mxu0
        %v1875 = vadd.f32 %v1863, %v1874
        %v1876 = vpop.f32.mrf.mxu0
        %1877 = vdwg.mxu0
        %v1878 = vpack.c.bf16 %v1825, %v1825
        %v1879 = vpack.c.bf16 %v1850, %v1850
        %v1881 = vsel %vm1005, %v1878, 0
        %v1884 = vsel %vm1005, %v1879, 0
        %1886 = vmatpush.bf16.xpose.msra.mxu0 0
        %1887 = vmatpush.bf16.xpose.msra.mxu0 0
        %1888 = vmatpush.bf16.xpose.msra.mxu0 0
        %1889 = vmatpush.bf16.xpose.msra.mxu0 0
        %1890 = vmatpush.bf16.xpose.msra.mxu0 0
        %1891 = vmatpush.bf16.xpose.msra.mxu0 0
        %1892 = vmatpush.bf16.xpose.msra.mxu0 0
        %1893 = vmatpush.bf16.xpose.msra.mxu0 %v1884
        %1894 = vmatmul.bf16.gmra.mxu0 %v1881
        %v1895 = vpop.f32.mrf.mxu0
        %v1896 = vadd.f32 0.0, %v1895
        %v1897 = vpop.f32.mrf.mxu0
        %1898 = vdwg.mxu0
        %v1899 = vmul.f32 %v1896, 0.17677669
        %v1900 = vsel %vm1726, %v1899, -inf
        %1901 = vmax.xlane.f32.xlu0 %v1900
        %v1902 = vpop.xlane.xlu0 %1901
        %v1903 = vsub.f32 %v1899, %v1902
        %v1904 = vmul.f32 %v1903, 1.442695
        %v1905 = vpow.pop %v1904
        %v1906 = vsel %vm1726, %v1905, 0.0
        %1907 = vadd.xlane.f32.xlu0 %v1906
        %v1908 = vpop.xlane.xlu0 %1907
        %v1909 = vrcp.pop %v1908
        %v1910 = vmul.f32 %v1908, %v1909
        %v1911 = vsub.f32 1.0, %v1910
        %v1912 = vmul.f32 %v1909, %v1911
        %v1913 = vadd.f32 %v1909, %v1912
        %vm1914 = vweird.f32 %v1908
        %vm1915 = vweird.f32 %v1909
        %vm1916 = vmor %vm1914, %vm1915
        %v1917 = vsel %vm1916, %v1909, %v1913
        %v1918 = vand.u32 2147483647, %v1908
        %vm1919 = vcmp.eq.f32.partialorder %v1918, 8.507059e+37
        %v1920 = vand.u32 %v1908, 2147483648
        %v1921 = vor.u32 1.1754944e-38, %v1920
        %v1922 = vsel %vm1919, %v1921, %v1917
        %v1923 = vmul.f32 %v1905, %v1922
        %v1924 = vpack.c.bf16 %v1923, %v1923
        %v1925 = vpack.c.bf16 %v1875, %v1875
        %v1927 = vsel %vm1753, %v1924, 0
        %v1930 = vsel %vm1757, %v1925, 0
        %1932 = vmatpush.bf16.msra.mxu0 0
        %1933 = vmatpush.bf16.msra.mxu0 0
        %1934 = vmatpush.bf16.msra.mxu0 0
        %1935 = vmatpush.bf16.msra.mxu0 0
        %1936 = vmatpush.bf16.msra.mxu0 0
        %1937 = vmatpush.bf16.msra.mxu0 0
        %1938 = vmatpush.bf16.msra.mxu0 0
        %1939 = vmatpush.bf16.msra.mxu0 %v1930
        %1940 = vmatmul.bf16.gmra.mxu0 %v1927
        %v1941 = vpop.f32.mrf.mxu0
        %v1942 = vadd.f32 0.0, %v1941
        %v1943 = vpop.f32.mrf.mxu0
        %1944 = vdwg.mxu0
        %s1945 = scalar_lea.vmem %s15, 224
        %v1946 = vld [vmem:[%s1945] sm:$0xff]
        %v1947 = vld [vmem:[%s1945 + $0x8] sm:$0xff]
        %v1948 = vld [vmem:[%s1945 + $0x10] sm:$0xff]
        %v1949 = vld [vmem:[%s1945 + $0x18] sm:$0xff]
        %v1950 = vpack.c.bf16 %v1942, %v1942
        %v1951 = vpack.c.bf16 %v1947, %v1946
        %v1952 = vpack.c.bf16 %v1949, %v1948
        %v1954 = vsel %vm1005, %v1950, 0
        %1956 = vmatpush.bf16.msra.mxu0 0
        %1957 = vmatpush.bf16.msra.mxu0 0
        %1958 = vmatpush.bf16.msra.mxu0 0
        %1959 = vmatpush.bf16.msra.mxu0 0
        %1960 = vmatpush.bf16.msra.mxu0 0
        %1961 = vmatpush.bf16.msra.mxu0 0
        %1962 = vmatpush.bf16.msra.mxu0 %v1952
        %1963 = vmatpush.bf16.msra.mxu0 %v1951
        %1964 = vmatmul.bf16.gmra.mxu0 %v1954
        %v1965 = vpop.f32.mrf.mxu0
        %v1966 = vadd.f32 0.0, %v1965
        %v1967 = vpop.f32.mrf.mxu0
        %1968 = vdwg.mxu0
        %v1969 = vadd.f32 %v1800, %v1966
        %s1970 = scalar_lea.vmem %s16, 7
        %v1971 = vld [vmem:[%s1970] sm:$0x1]
        %v1973 = vperm.slane %v1971, 0
        %v1975 = vadd.f32 %v1969, %v1973
        %s1976 = scalar_lea.vmem %s15, 256
        %v1977 = vld [vmem:[%s1976] sm:$0xff]
        %v1978 = vld [vmem:[%s1976 + $0x8] sm:$0xff]
        %v1979 = vld [vmem:[%s1976 + $0x10] sm:$0xff]
        %v1980 = vld [vmem:[%s1976 + $0x18] sm:$0xff]
        %v1981 = vpack.c.bf16 %v1978, %v1977
        %v1982 = vpack.c.bf16 %v1980, %v1979
        %s1983 = scalar_lea.vmem %s16, 8
        %v1984 = vld [vmem:[%s1983] sm:$0x1]
        %v1986 = vperm.slane %v1984, 0
        %1988 = vmatpush.bf16.msra.mxu0 0
        %1989 = vmatpush.bf16.msra.mxu0 0
        %1990 = vmatpush.bf16.msra.mxu0 0
        %1991 = vmatpush.bf16.msra.mxu0 0
        %1992 = vmatpush.bf16.msra.mxu0 0
        %1993 = vmatpush.bf16.msra.mxu0 0
        %1994 = vmatpush.bf16.msra.mxu0 %v1982
        %1995 = vmatpush.bf16.msra.mxu0 %v1981
        %1996 = vmatmul.bf16.gmra.mxu0 %v1689
        %v1997 = vpop.f32.mrf.mxu0
        %v1998 = vadd.f32 %v1986, %v1997
        %v1999 = vpop.f32.mrf.mxu0
        %2000 = vdwg.mxu0
        %s2001 = scalar_lea.vmem %s15, 288
        %v2002 = vld [vmem:[%s2001] sm:$0xff]
        %v2003 = vld [vmem:[%s2001 + $0x8] sm:$0xff]
        %v2004 = vld [vmem:[%s2001 + $0x10] sm:$0xff]
        %v2005 = vld [vmem:[%s2001 + $0x18] sm:$0xff]
        %v2006 = vpack.c.bf16 %v2003, %v2002
        %v2007 = vpack.c.bf16 %v2005, %v2004
        %s2008 = scalar_lea.vmem %s16, 9
        %v2009 = vld [vmem:[%s2008] sm:$0x1]
        %v2011 = vperm.slane %v2009, 0
        %2013 = vmatpush.bf16.msra.mxu0 0
        %2014 = vmatpush.bf16.msra.mxu0 0
        %2015 = vmatpush.bf16.msra.mxu0 0
        %2016 = vmatpush.bf16.msra.mxu0 0
        %2017 = vmatpush.bf16.msra.mxu0 0
        %2018 = vmatpush.bf16.msra.mxu0 0
        %2019 = vmatpush.bf16.msra.mxu0 %v2007
        %2020 = vmatpush.bf16.msra.mxu0 %v2006
        %2021 = vmatmul.bf16.gmra.mxu0 %v1615
        %v2022 = vpop.f32.mrf.mxu0
        %v2023 = vadd.f32 %v2011, %v2022
        %v2024 = vpop.f32.mrf.mxu0
        %2025 = vdwg.mxu0
        %s2026 = scalar_lea.vmem %s15, 320
        %v2027 = vld [vmem:[%s2026] sm:$0xff]
        %v2028 = vld [vmem:[%s2026 + $0x8] sm:$0xff]
        %v2029 = vld [vmem:[%s2026 + $0x10] sm:$0xff]
        %v2030 = vld [vmem:[%s2026 + $0x18] sm:$0xff]
        %v2031 = vpack.c.bf16 %v2028, %v2027
        %v2032 = vpack.c.bf16 %v2030, %v2029
        %s2033 = scalar_lea.vmem %s16, 10
        %v2034 = vld [vmem:[%s2033] sm:$0x1]
        %v2036 = vperm.slane %v2034, 0
        %2038 = vmatpush.bf16.msra.mxu0 0
        %2039 = vmatpush.bf16.msra.mxu0 0
        %2040 = vmatpush.bf16.msra.mxu0 0
        %2041 = vmatpush.bf16.msra.mxu0 0
        %2042 = vmatpush.bf16.msra.mxu0 0
        %2043 = vmatpush.bf16.msra.mxu0 0
        %2044 = vmatpush.bf16.msra.mxu0 %v2032
        %2045 = vmatpush.bf16.msra.mxu0 %v2031
        %2046 = vmatmul.bf16.gmra.mxu0 %v1652
        %v2047 = vpop.f32.mrf.mxu0
        %v2048 = vadd.f32 %v2036, %v2047
        %v2049 = vpop.f32.mrf.mxu0
        %2050 = vdwg.mxu0
        %v2051 = vpack.c.bf16 %v1998, %v1998
        %v2052 = vpack.c.bf16 %v2023, %v2023
        %v2054 = vsel %vm1005, %v2051, 0
        %v2057 = vsel %vm1005, %v2052, 0
        %2059 = vmatpush.bf16.xpose.msra.mxu0 0
        %2060 = vmatpush.bf16.xpose.msra.mxu0 0
        %2061 = vmatpush.bf16.xpose.msra.mxu0 0
        %2062 = vmatpush.bf16.xpose.msra.mxu0 0
        %2063 = vmatpush.bf16.xpose.msra.mxu0 0
        %2064 = vmatpush.bf16.xpose.msra.mxu0 0
        %2065 = vmatpush.bf16.xpose.msra.mxu0 0
        %2066 = vmatpush.bf16.xpose.msra.mxu0 %v2057
        %2067 = vmatmul.bf16.gmra.mxu0 %v2054
        %v2068 = vpop.f32.mrf.mxu0
        %v2069 = vadd.f32 0.0, %v2068
        %v2070 = vpop.f32.mrf.mxu0
        %2071 = vdwg.mxu0
        %v2072 = vmul.f32 %v2069, 0.17677669
        %v2073 = vsel %vm1726, %v2072, -inf
        %2074 = vmax.xlane.f32.xlu0 %v2073
        %v2075 = vpop.xlane.xlu0 %2074
        %v2076 = vsub.f32 %v2072, %v2075
        %v2077 = vmul.f32 %v2076, 1.442695
        %v2078 = vpow.pop %v2077
        %v2079 = vsel %vm1726, %v2078, 0.0
        %2080 = vadd.xlane.f32.xlu0 %v2079
        %v2081 = vpop.xlane.xlu0 %2080
        %v2082 = vrcp.pop %v2081
        %v2083 = vmul.f32 %v2081, %v2082
        %v2084 = vsub.f32 1.0, %v2083
        %v2085 = vmul.f32 %v2082, %v2084
        %v2086 = vadd.f32 %v2082, %v2085
        %vm2087 = vweird.f32 %v2081
        %vm2088 = vweird.f32 %v2082
        %vm2089 = vmor %vm2087, %vm2088
        %v2090 = vsel %vm2089, %v2082, %v2086
        %v2091 = vand.u32 2147483647, %v2081
        %vm2092 = vcmp.eq.f32.partialorder %v2091, 8.507059e+37
        %v2093 = vand.u32 %v2081, 2147483648
        %v2094 = vor.u32 1.1754944e-38, %v2093
        %v2095 = vsel %vm2092, %v2094, %v2090
        %v2096 = vmul.f32 %v2078, %v2095
        %v2097 = vpack.c.bf16 %v2096, %v2096
        %v2098 = vpack.c.bf16 %v2048, %v2048
        %v2100 = vsel %vm1753, %v2097, 0
        %v2103 = vsel %vm1757, %v2098, 0
        %2105 = vmatpush.bf16.msra.mxu0 0
        %2106 = vmatpush.bf16.msra.mxu0 0
        %2107 = vmatpush.bf16.msra.mxu0 0
        %2108 = vmatpush.bf16.msra.mxu0 0
        %2109 = vmatpush.bf16.msra.mxu0 0
        %2110 = vmatpush.bf16.msra.mxu0 0
        %2111 = vmatpush.bf16.msra.mxu0 0
        %2112 = vmatpush.bf16.msra.mxu0 %v2103
        %2113 = vmatmul.bf16.gmra.mxu0 %v2100
        %v2114 = vpop.f32.mrf.mxu0
        %v2115 = vadd.f32 0.0, %v2114
        %v2116 = vpop.f32.mrf.mxu0
        %2117 = vdwg.mxu0
        %s2118 = scalar_lea.vmem %s15, 352
        %v2119 = vld [vmem:[%s2118] sm:$0xff]
        %v2120 = vld [vmem:[%s2118 + $0x8] sm:$0xff]
        %v2121 = vld [vmem:[%s2118 + $0x10] sm:$0xff]
        %v2122 = vld [vmem:[%s2118 + $0x18] sm:$0xff]
        %v2123 = vpack.c.bf16 %v2115, %v2115
        %v2124 = vpack.c.bf16 %v2120, %v2119
        %v2125 = vpack.c.bf16 %v2122, %v2121
        %v2127 = vsel %vm1005, %v2123, 0
        %2129 = vmatpush.bf16.msra.mxu0 0
        %2130 = vmatpush.bf16.msra.mxu0 0
        %2131 = vmatpush.bf16.msra.mxu0 0
        %2132 = vmatpush.bf16.msra.mxu0 0
        %2133 = vmatpush.bf16.msra.mxu0 0
        %2134 = vmatpush.bf16.msra.mxu0 0
        %2135 = vmatpush.bf16.msra.mxu0 %v2125
        %2136 = vmatpush.bf16.msra.mxu0 %v2124
        %2137 = vmatmul.bf16.gmra.mxu0 %v2127
        %v2138 = vpop.f32.mrf.mxu0
        %v2139 = vadd.f32 0.0, %v2138
        %v2140 = vpop.f32.mrf.mxu0
        %2141 = vdwg.mxu0
        %v2142 = vadd.f32 %v1975, %v2139
        %s2143 = scalar_lea.vmem %s16, 11
        %v2144 = vld [vmem:[%s2143] sm:$0x1]
        %v2146 = vperm.slane %v2144, 0
        %v2148 = vadd.f32 %v2142, %v2146
        %v2149 = vld [vmem:[%s18] sm:$0x1]
        %v2150 = vld [vmem:[%s17] sm:$0xff]
        %v2151 = vld [vmem:[%s17 + $0x8] sm:$0xff]
        %v2152 = vld [vmem:[%s17 + $0x10] sm:$0xff]
        %v2153 = vld [vmem:[%s17 + $0x18] sm:$0xff]
        %v2154 = vpack.c.bf16 %v2148, %v2148
        %v2155 = vpack.c.bf16 %v2151, %v2150
        %v2156 = vpack.c.bf16 %v2153, %v2152
        %v2158 = vsel %vm1005, %v2154, 0
        %2160 = vmatpush.bf16.msra.mxu0 0
        %2161 = vmatpush.bf16.msra.mxu0 0
        %2162 = vmatpush.bf16.msra.mxu0 0
        %2163 = vmatpush.bf16.msra.mxu0 0
        %2164 = vmatpush.bf16.msra.mxu0 0
        %2165 = vmatpush.bf16.msra.mxu0 0
        %2166 = vmatpush.bf16.msra.mxu0 %v2156
        %2167 = vmatpush.bf16.msra.mxu0 %v2155
        %2168 = vmatmul.bf16.gmra.mxu0 %v2158
        %v2169 = vpop.f32.mrf.mxu0
        %v2170 = vadd.f32 0.0, %v2169
        %v2171 = vpop.f32.mrf.mxu0
        %2172 = vdwg.mxu0
        %v2173 = vadd.f32 %v2149, %v2170
        %s2174 = scalar_lea.vmem %s17, 32
        %v2175 = vld [vmem:[%s2174] sm:$0xff]
        %v2176 = vld [vmem:[%s2174 + $0x8] sm:$0xff]
        %v2177 = vld [vmem:[%s2174 + $0x10] sm:$0xff]
        %v2178 = vld [vmem:[%s2174 + $0x18] sm:$0xff]
        %v2179 = vpack.c.bf16 %v2176, %v2175
        %v2180 = vpack.c.bf16 %v2178, %v2177
        %v2181 = vshrl.u32 %v2154, 16
        %v2184 = vsel %vm1005, %v2181, 0
        %2186 = vmatpush.bf16.msra.mxu0 0
        %2187 = vmatpush.bf16.msra.mxu0 0
        %2188 = vmatpush.bf16.msra.mxu0 0
        %2189 = vmatpush.bf16.msra.mxu0 0
        %2190 = vmatpush.bf16.msra.mxu0 0
        %2191 = vmatpush.bf16.msra.mxu0 0
        %2192 = vmatpush.bf16.msra.mxu0 %v2180
        %2193 = vmatpush.bf16.msra.mxu0 %v2179
        %2194 = vmatmul.bf16.gmra.mxu0 %v2184
        %v2195 = vpop.f32.mrf.mxu0
        %v2196 = vadd.f32 0.0, %v2195
        %v2197 = vpop.f32.mrf.mxu0
        %2198 = vdwg.mxu0
        %v2199 = vadd.f32 %v2173, %v2196
        %s2200 = scalar_lea.vmem %s17, 64
        %v2201 = vld [vmem:[%s2200] sm:$0xff]
        %v2202 = vld [vmem:[%s2200 + $0x8] sm:$0xff]
        %v2203 = vld [vmem:[%s2200 + $0x10] sm:$0xff]
        %v2204 = vld [vmem:[%s2200 + $0x18] sm:$0xff]
        %v2205 = vpack.c.bf16 %v2202, %v2201
        %v2206 = vpack.c.bf16 %v2204, %v2203
        %v2208 = vrot.slane %v2154, 1
        %v2210 = vsel %vm1005, %v2208, 0
        %2212 = vmatpush.bf16.msra.mxu0 0
        %2213 = vmatpush.bf16.msra.mxu0 0
        %2214 = vmatpush.bf16.msra.mxu0 0
        %2215 = vmatpush.bf16.msra.mxu0 0
        %2216 = vmatpush.bf16.msra.mxu0 0
        %2217 = vmatpush.bf16.msra.mxu0 0
        %2218 = vmatpush.bf16.msra.mxu0 %v2206
        %2219 = vmatpush.bf16.msra.mxu0 %v2205
        %2220 = vmatmul.bf16.gmra.mxu0 %v2210
        %v2221 = vpop.f32.mrf.mxu0
        %v2222 = vadd.f32 0.0, %v2221
        %v2223 = vpop.f32.mrf.mxu0
        %2224 = vdwg.mxu0
        %v2225 = vadd.f32 %v2199, %v2222
        %s2226 = scalar_lea.vmem %s17, 96
        %v2227 = vld [vmem:[%s2226] sm:$0xff]
        %v2228 = vld [vmem:[%s2226 + $0x8] sm:$0xff]
        %v2229 = vld [vmem:[%s2226 + $0x10] sm:$0xff]
        %v2230 = vld [vmem:[%s2226 + $0x18] sm:$0xff]
        %v2231 = vpack.c.bf16 %v2228, %v2227
        %v2232 = vpack.c.bf16 %v2230, %v2229
        %v2233 = vrot.slane %v2181, 1
        %v2235 = vsel %vm1005, %v2233, 0
        %2237 = vmatpush.bf16.msra.mxu0 0
        %2238 = vmatpush.bf16.msra.mxu0 0
        %2239 = vmatpush.bf16.msra.mxu0 0
        %2240 = vmatpush.bf16.msra.mxu0 0
        %2241 = vmatpush.bf16.msra.mxu0 0
        %2242 = vmatpush.bf16.msra.mxu0 0
        %2243 = vmatpush.bf16.msra.mxu0 %v2232
        %2244 = vmatpush.bf16.msra.mxu0 %v2231
        %2245 = vmatmul.bf16.gmra.mxu0 %v2235
        %v2246 = vpop.f32.mrf.mxu0
        %v2247 = vadd.f32 0.0, %v2246
        %v2248 = vpop.f32.mrf.mxu0
        %2249 = vdwg.mxu0
        %v2250 = vadd.f32 %v2225, %v2247
        %v2251 = vmax.f32 %v2250, 0.0
        %v2252 = vld [vmem:[%s19] sm:$0xff]
        %v2253 = vld [vmem:[%s19 + $0x8] sm:$0xff]
        %v2254 = vld [vmem:[%s19 + $0x10] sm:$0xff]
        %v2255 = vld [vmem:[%s19 + $0x18] sm:$0xff]
        %v2256 = vld [vmem:[%s19 + $0x20] sm:$0xff]
        %v2257 = vld [vmem:[%s19 + $0x28] sm:$0xff]
        %v2258 = vld [vmem:[%s19 + $0x30] sm:$0xff]
        %v2259 = vld [vmem:[%s19 + $0x38] sm:$0xff]
        %v2260 = vpack.c.bf16 %v2251, %v2251
        %v2261 = vpack.c.bf16 %v2253, %v2252
        %v2262 = vpack.c.bf16 %v2255, %v2254
        %v2263 = vpack.c.bf16 %v2257, %v2256
        %v2264 = vpack.c.bf16 %v2259, %v2258
        %v2265 = vld [vmem:[%s20] sm:$0x1]
        %vm2266 = vcmask 523264
        %v2268 = vsel %vm2266, %v2260, 0
        %2270 = vmatpush.bf16.msra.mxu0 0
        %2271 = vmatpush.bf16.msra.mxu0 0
        %2272 = vmatpush.bf16.msra.mxu0 0
        %2273 = vmatpush.bf16.msra.mxu0 0
        %2274 = vmatpush.bf16.msra.mxu0 %v2264
        %2275 = vmatpush.bf16.msra.mxu0 %v2263
        %2276 = vmatpush.bf16.msra.mxu0 %v2262
        %2277 = vmatpush.bf16.msra.mxu0 %v2261
        %2278 = vmatmul.bf16.gmra.mxu0 %v2268
        %v2279 = vpop.f32.mrf.mxu0
        %v2280 = vadd.f32 %v2265, %v2279
        %v2281 = vpop.f32.mrf.mxu0
        %2282 = vdwg.mxu0
        %vm2283 = vcmask 57344
        %2284 = vst.msk [vmem:[%s678] sm:$0x1] %vm2283, %v2280
        %s2285 = sand.u32 %s499, 1
        %s2286 = scalar_lea.sflag [#allocation3], %s2285
        %s2287 = sand.u32 %s499, 1
        %s2288 = scalar_lea.vmem [#allocation2], %s2287
        // Predicated region
        $region105: #{temporal_net_forward.1} parent=103 // pred_check
          %p2289 = pneg %p509
        $region106: #{temporal_net_forward.1} parent=103 // pred_check_branch
          %2291 = sbr.rel (%p2289) target = $region108
        $region107: #{temporal_net_forward.1} parent=103 // pred_region
          %2293 = vsyncadd %s2286, 0
          %s2294 = scalar_lea.hbm %s21, %s35
          %s2296 = sshll.u32 %s2288, 4
          %s2297 = int_to_ptr.vmem [resolvable:$true] %s2296
          %s2298 = sshll.u32 %s2294, 4
          %s2299 = int_to_ptr.hbm [resolvable:$true] %s2298
          %2301 = dma.vmem_to_hbm [thread:$0]  %s2297, 16, %s2299, %s2286
        $region108: #{temporal_net_forward.1} parent=103 // pred_fallthru
          _
      $region104: #{temporal_net_forward.1} parent=5 // pred_fallthru
        _
      %p2302 = scmp.le.s32.totalorder 2, %s30
      // Predicated region
      $region109: #{temporal_net_forward.1} parent=5 // pred_check
        %p2303 = pneg %p2302
      $region110: #{temporal_net_forward.1} parent=5 // pred_check_branch
        %2305 = sbr.rel (%p2303) target = $region112
      $region111: #{temporal_net_forward.1} parent=5 // pred_region
        %s2306 = ssub.s32 %s30, 2
        // Predicated region
        $region113: #{temporal_net_forward.1} parent=111 // pred_check
          %p2307 = pneg %p515
        $region114: #{temporal_net_forward.1} parent=111 // pred_check_branch
          %2309 = sbr.rel (%p2307) target = $region116
        $region115: #{temporal_net_forward.1} parent=111 // pred_region
          %s2310 = sand.u32 %s500, 1
          %s2311 = scalar_lea.sflag [#allocation3], %s2310
          %s2312 = sand.u32 %s500, 1
          %s2313 = scalar_lea.vmem [#allocation2], %s2312
          %2315 = dma.done %s2311, 16
        $region116: #{temporal_net_forward.1} parent=111 // pred_fallthru
          _
      $region112: #{temporal_net_forward.1} parent=5 // pred_fallthru
        _
    $region6: #{temporal_net_forward.1} parent=1 // loop_footer
      %s34 = sadd.s32 1, %s30
    $region7: #{temporal_net_forward.1} parent=1 // loop_footer_branch
      %29 = sbr.rel target = $region3
    $region8: #{temporal_net_forward.1} parent=1 // loop_exit
      _
    %2316 = vsyncpa [#allocation3], 1
    %s2317 = scalar_lea.sflag [#allocation3], 1
    %2318 = vsyncpa %s2317, 1

</llo_original>
